<compile_context>
chip_gen: v5e
topology: v5e:2x2
jax: 0.10.0
libtpu: 0.0.40
codegen_flags: <defaults>
</compile_context>

<pallas_src>
import jax
import jax.numpy as jnp
from jax import lax
from jax.experimental import pallas as pl
from jax.experimental.pallas import tpu as pltpu


# ---------------------------------------------------------------------------
# Host-side per-tap SAME-padding validity masks, shape (9, H*W), center = ones
# ---------------------------------------------------------------------------
def _make_tap_masks(H, W):
    HW = H * W
    p = jnp.arange(HW, dtype=jnp.int32)
    px = p % W
    py = p // W
    rows = []
    for dy in range(3):
        for dx in range(3):
            m = jnp.ones((HW,), jnp.float32)
            if dy == 0:
                m = m * (py >= 1).astype(jnp.float32)
            if dy == 2:
                m = m * (py <= H - 2).astype(jnp.float32)
            if dx == 0:
                m = m * (px >= 1).astype(jnp.float32)
            if dx == 2:
                m = m * (px <= W - 2).astype(jnp.float32)
            rows.append(m)
    return jnp.stack(rows, axis=0)  # (9, HW)


# ---------------------------------------------------------------------------
# Fused generator kernel (one grid step = one batch element)
# ---------------------------------------------------------------------------
def _make_generator_kernel(H, W, hid, Cout):
    HW = H * W
    # 3x3 taps in row-major order t = dy*3 + dx; off = flattened spatial shift.
    TAPS = [(dy, dx, (dy - 1) * W + (dx - 1)) for dy in range(3) for dx in range(3)]
    CENTER = 4  # dy=1, dx=1 — mask row is all ones, skip the multiply

    def kernel(c_ref, s_ref, m_ref, wc_ref, bc_ref, ws_ref, bs_ref,
               wdc_ref, wds_ref, bd_ref, o_ref):
        f32 = jnp.float32
        masks = m_ref[...]                                  # (9, HW) f32

        def im2col(img):
            # img: (CP, HW) -> (9*CP, HW); zero-padded 3x3 neighborhood rows.
            # Kept as one fused concat+dot for the small CP=8 encoder inputs.
            rows = []
            for t, (_, _, off) in enumerate(TAPS):
                r = img if off == 0 else pltpu.roll(img, (-off) % HW, axis=1)
                if t != CENTER:
                    r = r * masks[t:t + 1, :]
                rows.append(r)
            return jnp.concatenate(rows, axis=0)

        # ---- content encoder: conv3x3 + ReLU --------------------------------
        cf = jnp.dot(wc_ref[...], im2col(c_ref[0]),
                     preferred_element_type=f32) + bc_ref[...]
        cf = jnp.maximum(cf, 0.0)                           # (hid, HW)

        # ---- style encoder: fused (x*2 - 1), conv3x3 + ReLU + global mean ---
        s_img = s_ref[0] * 2.0 - 1.0
        sf_map = jnp.dot(ws_ref[...], im2col(s_img),
                         preferred_element_type=f32) + bs_ref[...]
        sf_map = jnp.maximum(sf_map, 0.0)
        sf = jnp.mean(sf_map, axis=1, keepdims=True)        # (hid, 1)

        # ---- decoder style half: one fused matvec (replaces 9 N=1 pushes) ---
        # Style channels are spatially constant: their conv reduces exactly to
        # per-tap (Cout,) vectors weighted by the tap-validity masks.
        a = jnp.dot(wds_ref[...], sf, preferred_element_type=f32)   # (9*Cout, 1)
        out = bd_ref[...] * jnp.ones((1, HW), f32)          # bias, lane-dense
        for t in range(9):
            v = a[t * Cout:(t + 1) * Cout, :]               # (Cout, 1) static slice
            out = out + (v if t == CENTER else v * masks[t:t + 1, :])

        # ---- decoder content half: per-tap accumulation, mask on OUTPUT -----
        # (never materializes the (9*hid, HW) im2col(cf) concat buffer)
        for t, (_, _, off) in enumerate(TAPS):
            cf_t = cf if off == 0 else pltpu.roll(cf, (-off) % HW, axis=1)
            w_t = wdc_ref[:, t * hid:(t + 1) * hid]         # (Cout, hid)
            contrib = jnp.dot(w_t, cf_t, preferred_element_type=f32)  # (Cout, HW)
            if t != CENTER:
                contrib = contrib * masks[t:t + 1, :]
            out = out + contrib

        o_ref[0] = jnp.tanh(out).astype(o_ref.dtype)

    return kernel


# ---------------------------------------------------------------------------
# Wrapper: NCHW in -> NCHW out, single fused pallas_call
# ---------------------------------------------------------------------------
@jax.jit
def generator_forward(params, content_nchw, style_nchw):
    N, Cin, H, W = content_nchw.shape
    HW = H * W
    hid, ncols = params["wc"].shape
    CP = ncols // 9                      # channel-padded input width
    Cout = params["bd"].shape[0]

    def prep(x):                         # NCHW -> (N, CP, H*W), free reshape
        x = x.reshape(N, Cin, HW).astype(jnp.float32)
        if CP > Cin:
            x = jnp.pad(x, ((0, 0), (0, CP - Cin), (0, 0)))  # tiny (KBs)
        return x

    c = prep(content_nchw)
    s = prep(style_nchw)
    masks = _make_tap_masks(H, W)        # (9, HW) constant, folded by jit

    out = pl.pallas_call(
        _make_generator_kernel(H, W, hid, Cout),
        out_shape=jax.ShapeDtypeStruct((N, Cout, HW), jnp.float32),
        grid=(N,),
        in_specs=[
            pl.BlockSpec((1, CP, HW), lambda n: (n, 0, 0)),       # content
            pl.BlockSpec((1, CP, HW), lambda n: (n, 0, 0)),       # style
            pl.BlockSpec((9, HW), lambda n: (0, 0)),              # tap masks
            pl.BlockSpec((hid, 9 * CP), lambda n: (0, 0)),        # wc
            pl.BlockSpec((hid, 1), lambda n: (0, 0)),             # bc
            pl.BlockSpec((hid, 9 * CP), lambda n: (0, 0)),        # ws
            pl.BlockSpec((hid, 1), lambda n: (0, 0)),             # bs
            pl.BlockSpec((Cout, 9 * hid), lambda n: (0, 0)),      # wd (content)
            pl.BlockSpec((9 * Cout, hid), lambda n: (0, 0)),      # wd (style)
            pl.BlockSpec((Cout, 1), lambda n: (0, 0)),            # bd
        ],
        out_specs=pl.BlockSpec((1, Cout, HW), lambda n: (n, 0, 0)),
        compiler_params=pltpu.CompilerParams(
            dimension_semantics=("parallel",),
            vmem_limit_bytes=32 * 1024 * 1024,
        ),
    )(c, s, masks, params["wc"], params["bc"], params["ws"], params["bs"],
      params["wdc"], params["wds"], params["bd"])

    return out.reshape(N, Cout, H, W)    # free reshape: already channel-major


# ---------------------------------------------------------------------------
# Pure-JAX reference (for correctness check)
# ---------------------------------------------------------------------------
def ref_forward(ref_params, content_nchw, style_nchw):
    def conv(x_nhwc, w_hwio, b):
        y = lax.conv_general_dilated(
            x_nhwc, w_hwio, (1, 1), "SAME",
            dimension_numbers=("NHWC", "HWIO", "NHWC"))
        return y + b.reshape(1, 1, 1, -1)

    c = jnp.transpose(content_nchw, (0, 2, 3, 1)).astype(jnp.float32)
    s = jnp.transpose(style_nchw, (0, 2, 3, 1)).astype(jnp.float32) * 2.0 - 1.0
    cf = jnp.maximum(conv(c, ref_params["wc"], ref_params["bc"]), 0.0)
    sf = jnp.maximum(conv(s, ref_params["ws"], ref_params["bs"]), 0.0).mean(
        axis=(1, 2), keepdims=True)
    N, H, W, hid = cf.shape
    dec_in = jnp.concatenate(
        [cf, jnp.broadcast_to(sf, (N, H, W, hid))], axis=-1)
    out = jnp.tanh(conv(dec_in, ref_params["wd"], ref_params["bd"]))
    return jnp.transpose(out, (0, 3, 1, 2))


# ---------------------------------------------------------------------------
# Deterministic parameter init (shapes follow Generator.__init__)
# ---------------------------------------------------------------------------
def init_params(key, in_ch, hid, out_ch):
    CP = max(8, ((in_ch + 7) // 8) * 8)    # pad input channels to a sublane tile
    ks = jax.random.split(key, 6)

    def conv_w(k, cout, cin):
        fan_in = 9 * cin
        return jax.random.normal(k, (cout, 3, 3, cin), jnp.float32) * (2.0 / fan_in) ** 0.5

    wc4 = conv_w(ks[0], hid, in_ch)            # [co, dy, dx, ci]
    ws4 = conv_w(ks[1], hid, in_ch)
    wd4 = conv_w(ks[2], out_ch, 2 * hid)       # ci: [0,hid)=content, [hid,2hid)=style
    bc = 0.01 * jax.random.normal(ks[3], (hid, 1), jnp.float32)
    bs = 0.01 * jax.random.normal(ks[4], (hid, 1), jnp.float32)
    bd = 0.01 * jax.random.normal(ks[5], (out_ch, 1), jnp.float32)

    def enc_layout(w4):                        # (co,3,3,ci) -> (co, 9*CP)
        wp = jnp.pad(w4, ((0, 0), (0, 0), (0, 0), (0, CP - in_ch)))
        return wp.reshape(hid, 9 * CP)

    params = {
        "wc": enc_layout(wc4), "bc": bc,
        "ws": enc_layout(ws4), "bs": bs,
        # decoder content half: column index = (dy*3+dx)*hid + h
        "wdc": wd4[..., :hid].reshape(out_ch, 9 * hid),
        # decoder style half: row index = (dy*3+dx)*Cout + c   (t-major)
        "wds": wd4[..., hid:].transpose(1, 2, 0, 3).reshape(9 * out_ch, hid),
        "bd": bd,
    }
    ref = {   # HWIO layouts for the pure-JAX reference
        "wc": wc4.transpose(1, 2, 3, 0), "bc": bc[:, 0],
        "ws": ws4.transpose(1, 2, 3, 0), "bs": bs[:, 0],
        "wd": wd4.transpose(1, 2, 3, 0), "bd": bd[:, 0],
    }
    return params, ref


if __name__ == "__main__":
    key = jax.random.PRNGKey(0)
    k_content, k_style, k_params = jax.random.split(key, 3)

    # Small shapes consistent with the module's forward.
    N, C, H, W = 2, 4, 16, 16
    hidden_dim = 64 * 4          # _ngf * 4 per Generator.__init__

    content_images = jax.random.uniform(k_content, (N, C, H, W), jnp.float32)
    style_images = jax.random.uniform(k_style, (N, C, H, W), jnp.float32)
    params, ref_params = init_params(k_params, C, hidden_dim, C)

    out = generator_forward(params, content_images, style_images)
    out = jax.block_until_ready(out)
    assert out.shape == (N, C, H, W), out.shape

    ref = ref_forward(ref_params, content_images, style_images)
    max_err = float(jnp.max(jnp.abs(out - ref)))
    assert max_err < 2e-3, f"mismatch vs reference: {max_err}"

    print("KERNEL_OK")
</pallas_src>

<mosaic_0001>
module attributes {stable_mosaic.version = 11 : i64} {
  func.func @kernel(%arg0: i32, %arg1: memref<1x8x256xf32, #tpu.memory_space<vmem>>, %arg2: memref<1x8x256xf32, #tpu.memory_space<vmem>>, %arg3: memref<9x256xf32, #tpu.memory_space<vmem>>, %arg4: memref<256x72xf32, #tpu.memory_space<vmem>>, %arg5: memref<256x1xf32, #tpu.memory_space<vmem>>, %arg6: memref<256x72xf32, #tpu.memory_space<vmem>>, %arg7: memref<256x1xf32, #tpu.memory_space<vmem>>, %arg8: memref<4x2304xf32, #tpu.memory_space<vmem>>, %arg9: memref<36x256xf32, #tpu.memory_space<vmem>>, %arg10: memref<4x1xf32, #tpu.memory_space<vmem>>, %arg11: memref<1x4x256xf32, #tpu.memory_space<vmem>>) attributes {dimension_semantics = [#tpu.dimension_semantics<parallel>], iteration_bounds = array<i64: 2>, scalar_prefetch = 0 : i64, scratch_operands = 0 : i64, tpu.core_type = #tpu.core_type<tc>, window_params = [{transform_indices = @transform_0, window_bounds = array<i64: 1, 8, 256>}, {transform_indices = @transform_1, window_bounds = array<i64: 1, 8, 256>}, {pipeline_mode = #tpu.pipeline_mode<synchronous>, transform_indices = @transform_2, window_bounds = array<i64: 9, 256>}, {pipeline_mode = #tpu.pipeline_mode<synchronous>, transform_indices = @transform_3, window_bounds = array<i64: 256, 72>}, {pipeline_mode = #tpu.pipeline_mode<synchronous>, transform_indices = @transform_4, window_bounds = array<i64: 256, 1>}, {pipeline_mode = #tpu.pipeline_mode<synchronous>, transform_indices = @transform_5, window_bounds = array<i64: 256, 72>}, {pipeline_mode = #tpu.pipeline_mode<synchronous>, transform_indices = @transform_6, window_bounds = array<i64: 256, 1>}, {pipeline_mode = #tpu.pipeline_mode<synchronous>, transform_indices = @transform_7, window_bounds = array<i64: 4, 2304>}, {pipeline_mode = #tpu.pipeline_mode<synchronous>, transform_indices = @transform_8, window_bounds = array<i64: 36, 256>}, {pipeline_mode = #tpu.pipeline_mode<synchronous>, transform_indices = @transform_9, window_bounds = array<i64: 4, 1>}, {transform_indices = @transform_10, window_bounds = array<i64: 1, 4, 256>}]} {
    %c0 = arith.constant 0 : index
    %c0_0 = arith.constant 0 : index
    %0 = vector.load %arg3[%c0, %c0_0] : memref<9x256xf32, #tpu.memory_space<vmem>>, vector<9x256xf32>
    %c0_1 = arith.constant 0 : index
    %c0_2 = arith.constant 0 : index
    %1 = vector.load %arg4[%c0_1, %c0_2] : memref<256x72xf32, #tpu.memory_space<vmem>>, vector<256x72xf32>
    %c0_3 = arith.constant 0 : index
    %c0_4 = arith.constant 0 : index
    %c0_5 = arith.constant 0 : index
    %2 = vector.load %arg1[%c0_3, %c0_4, %c0_5] : memref<1x8x256xf32, #tpu.memory_space<vmem>>, vector<1x8x256xf32>
    %3 = vector.shape_cast %2 : vector<1x8x256xf32> to vector<8x256xf32>
    %c17_i32 = arith.constant 17 : i32
    %4 = tpu.dynamic_rotate %3 by %c17_i32 dim 1 : vector<8x256xf32>, i32 -> vector<8x256xf32>
    %5 = vector.extract_strided_slice %0 {offsets = [0, 0], sizes = [1, 256], strides = [1, 1]} : vector<9x256xf32> to vector<1x256xf32>
    %6 = vector.broadcast %5 : vector<1x256xf32> to vector<8x256xf32>
    %7 = arith.mulf %4, %6 : vector<8x256xf32>
    %c16_i32 = arith.constant 16 : i32
    %8 = tpu.dynamic_rotate %3 by %c16_i32 dim 1 : vector<8x256xf32>, i32 -> vector<8x256xf32>
    %9 = vector.extract_strided_slice %0 {offsets = [1, 0], sizes = [1, 256], strides = [1, 1]} : vector<9x256xf32> to vector<1x256xf32>
    %10 = vector.broadcast %9 : vector<1x256xf32> to vector<8x256xf32>
    %11 = arith.mulf %8, %10 : vector<8x256xf32>
    %c15_i32 = arith.constant 15 : i32
    %12 = tpu.dynamic_rotate %3 by %c15_i32 dim 1 : vector<8x256xf32>, i32 -> vector<8x256xf32>
    %13 = vector.extract_strided_slice %0 {offsets = [2, 0], sizes = [1, 256], strides = [1, 1]} : vector<9x256xf32> to vector<1x256xf32>
    %14 = vector.broadcast %13 : vector<1x256xf32> to vector<8x256xf32>
    %15 = arith.mulf %12, %14 : vector<8x256xf32>
    %c1_i32 = arith.constant 1 : i32
    %16 = tpu.dynamic_rotate %3 by %c1_i32 dim 1 : vector<8x256xf32>, i32 -> vector<8x256xf32>
    %17 = vector.extract_strided_slice %0 {offsets = [3, 0], sizes = [1, 256], strides = [1, 1]} : vector<9x256xf32> to vector<1x256xf32>
    %18 = vector.broadcast %17 : vector<1x256xf32> to vector<8x256xf32>
    %19 = arith.mulf %16, %18 : vector<8x256xf32>
    %c255_i32 = arith.constant 255 : i32
    %20 = tpu.dynamic_rotate %3 by %c255_i32 dim 1 : vector<8x256xf32>, i32 -> vector<8x256xf32>
    %21 = vector.extract_strided_slice %0 {offsets = [5, 0], sizes = [1, 256], strides = [1, 1]} : vector<9x256xf32> to vector<1x256xf32>
    %22 = vector.broadcast %21 : vector<1x256xf32> to vector<8x256xf32>
    %23 = arith.mulf %20, %22 : vector<8x256xf32>
    %c241_i32 = arith.constant 241 : i32
    %24 = tpu.dynamic_rotate %3 by %c241_i32 dim 1 : vector<8x256xf32>, i32 -> vector<8x256xf32>
    %25 = vector.extract_strided_slice %0 {offsets = [6, 0], sizes = [1, 256], strides = [1, 1]} : vector<9x256xf32> to vector<1x256xf32>
    %26 = vector.broadcast %25 : vector<1x256xf32> to vector<8x256xf32>
    %27 = arith.mulf %24, %26 : vector<8x256xf32>
    %c240_i32 = arith.constant 240 : i32
    %28 = tpu.dynamic_rotate %3 by %c240_i32 dim 1 : vector<8x256xf32>, i32 -> vector<8x256xf32>
    %29 = vector.extract_strided_slice %0 {offsets = [7, 0], sizes = [1, 256], strides = [1, 1]} : vector<9x256xf32> to vector<1x256xf32>
    %30 = vector.broadcast %29 : vector<1x256xf32> to vector<8x256xf32>
    %31 = arith.mulf %28, %30 : vector<8x256xf32>
    %c239_i32 = arith.constant 239 : i32
    %32 = tpu.dynamic_rotate %3 by %c239_i32 dim 1 : vector<8x256xf32>, i32 -> vector<8x256xf32>
    %33 = vector.extract_strided_slice %0 {offsets = [8, 0], sizes = [1, 256], strides = [1, 1]} : vector<9x256xf32> to vector<1x256xf32>
    %34 = vector.broadcast %33 : vector<1x256xf32> to vector<8x256xf32>
    %35 = arith.mulf %32, %34 : vector<8x256xf32>
    %36 = tpu.concatenate %7, %11, %15, %19, %3, %23, %27, %31, %35 in 0 : vector<8x256xf32>, vector<8x256xf32>, vector<8x256xf32>, vector<8x256xf32>, vector<8x256xf32>, vector<8x256xf32>, vector<8x256xf32>, vector<8x256xf32>, vector<8x256xf32> -> vector<72x256xf32>
    %cst = arith.constant dense<0.000000e+00> : vector<256x256xf32>
    %37 = tpu.matmul %1, %36, %cst {dimension_numbers = #tpu.dot_dimension_numbers<[1], [0], [0], [1], [0, 0, 1, 1], [], []>} : vector<256x72xf32>, vector<72x256xf32>, vector<256x256xf32> -> vector<256x256xf32>
    %c0_6 = arith.constant 0 : index
    %c0_7 = arith.constant 0 : index
    %38 = vector.load %arg5[%c0_6, %c0_7] : memref<256x1xf32, #tpu.memory_space<vmem>>, vector<256x1xf32>
    %39 = vector.broadcast %38 : vector<256x1xf32> to vector<256x256xf32>
    %40 = arith.addf %37, %39 : vector<256x256xf32>
    %cst_8 = arith.constant 0.000000e+00 : f32
    %41 = vector.broadcast %cst_8 : f32 to vector<256x256xf32>
    %42 = arith.maximumf %40, %41 : vector<256x256xf32>
    %c0_9 = arith.constant 0 : index
    %c0_10 = arith.constant 0 : index
    %c0_11 = arith.constant 0 : index
    %43 = vector.load %arg2[%c0_9, %c0_10, %c0_11] : memref<1x8x256xf32, #tpu.memory_space<vmem>>, vector<1x8x256xf32>
    %44 = vector.shape_cast %43 : vector<1x8x256xf32> to vector<8x256xf32>
    %cst_12 = arith.constant 2.000000e+00 : f32
    %45 = vector.broadcast %cst_12 : f32 to vector<8x256xf32>
    %46 = arith.mulf %44, %45 : vector<8x256xf32>
    %cst_13 = arith.constant 1.000000e+00 : f32
    %47 = vector.broadcast %cst_13 : f32 to vector<8x256xf32>
    %48 = arith.subf %46, %47 : vector<8x256xf32>
    %c0_14 = arith.constant 0 : index
    %c0_15 = arith.constant 0 : index
    %49 = vector.load %arg6[%c0_14, %c0_15] : memref<256x72xf32, #tpu.memory_space<vmem>>, vector<256x72xf32>
    %c17_i32_16 = arith.constant 17 : i32
    %50 = tpu.dynamic_rotate %48 by %c17_i32_16 dim 1 : vector<8x256xf32>, i32 -> vector<8x256xf32>
    %51 = vector.extract_strided_slice %0 {offsets = [0, 0], sizes = [1, 256], strides = [1, 1]} : vector<9x256xf32> to vector<1x256xf32>
    %52 = vector.broadcast %51 : vector<1x256xf32> to vector<8x256xf32>
    %53 = arith.mulf %50, %52 : vector<8x256xf32>
    %c16_i32_17 = arith.constant 16 : i32
    %54 = tpu.dynamic_rotate %48 by %c16_i32_17 dim 1 : vector<8x256xf32>, i32 -> vector<8x256xf32>
    %55 = vector.extract_strided_slice %0 {offsets = [1, 0], sizes = [1, 256], strides = [1, 1]} : vector<9x256xf32> to vector<1x256xf32>
    %56 = vector.broadcast %55 : vector<1x256xf32> to vector<8x256xf32>
    %57 = arith.mulf %54, %56 : vector<8x256xf32>
    %c15_i32_18 = arith.constant 15 : i32
    %58 = tpu.dynamic_rotate %48 by %c15_i32_18 dim 1 : vector<8x256xf32>, i32 -> vector<8x256xf32>
    %59 = vector.extract_strided_slice %0 {offsets = [2, 0], sizes = [1, 256], strides = [1, 1]} : vector<9x256xf32> to vector<1x256xf32>
    %60 = vector.broadcast %59 : vector<1x256xf32> to vector<8x256xf32>
    %61 = arith.mulf %58, %60 : vector<8x256xf32>
    %c1_i32_19 = arith.constant 1 : i32
    %62 = tpu.dynamic_rotate %48 by %c1_i32_19 dim 1 : vector<8x256xf32>, i32 -> vector<8x256xf32>
    %63 = vector.extract_strided_slice %0 {offsets = [3, 0], sizes = [1, 256], strides = [1, 1]} : vector<9x256xf32> to vector<1x256xf32>
    %64 = vector.broadcast %63 : vector<1x256xf32> to vector<8x256xf32>
    %65 = arith.mulf %62, %64 : vector<8x256xf32>
    %c255_i32_20 = arith.constant 255 : i32
    %66 = tpu.dynamic_rotate %48 by %c255_i32_20 dim 1 : vector<8x256xf32>, i32 -> vector<8x256xf32>
    %67 = vector.extract_strided_slice %0 {offsets = [5, 0], sizes = [1, 256], strides = [1, 1]} : vector<9x256xf32> to vector<1x256xf32>
    %68 = vector.broadcast %67 : vector<1x256xf32> to vector<8x256xf32>
    %69 = arith.mulf %66, %68 : vector<8x256xf32>
    %c241_i32_21 = arith.constant 241 : i32
    %70 = tpu.dynamic_rotate %48 by %c241_i32_21 dim 1 : vector<8x256xf32>, i32 -> vector<8x256xf32>
    %71 = vector.extract_strided_slice %0 {offsets = [6, 0], sizes = [1, 256], strides = [1, 1]} : vector<9x256xf32> to vector<1x256xf32>
    %72 = vector.broadcast %71 : vector<1x256xf32> to vector<8x256xf32>
    %73 = arith.mulf %70, %72 : vector<8x256xf32>
    %c240_i32_22 = arith.constant 240 : i32
    %74 = tpu.dynamic_rotate %48 by %c240_i32_22 dim 1 : vector<8x256xf32>, i32 -> vector<8x256xf32>
    %75 = vector.extract_strided_slice %0 {offsets = [7, 0], sizes = [1, 256], strides = [1, 1]} : vector<9x256xf32> to vector<1x256xf32>
    %76 = vector.broadcast %75 : vector<1x256xf32> to vector<8x256xf32>
    %77 = arith.mulf %74, %76 : vector<8x256xf32>
    %c239_i32_23 = arith.constant 239 : i32
    %78 = tpu.dynamic_rotate %48 by %c239_i32_23 dim 1 : vector<8x256xf32>, i32 -> vector<8x256xf32>
    %79 = vector.extract_strided_slice %0 {offsets = [8, 0], sizes = [1, 256], strides = [1, 1]} : vector<9x256xf32> to vector<1x256xf32>
    %80 = vector.broadcast %79 : vector<1x256xf32> to vector<8x256xf32>
    %81 = arith.mulf %78, %80 : vector<8x256xf32>
    %82 = tpu.concatenate %53, %57, %61, %65, %48, %69, %73, %77, %81 in 0 : vector<8x256xf32>, vector<8x256xf32>, vector<8x256xf32>, vector<8x256xf32>, vector<8x256xf32>, vector<8x256xf32>, vector<8x256xf32>, vector<8x256xf32>, vector<8x256xf32> -> vector<72x256xf32>
    %cst_24 = arith.constant dense<0.000000e+00> : vector<256x256xf32>
    %83 = tpu.matmul %49, %82, %cst_24 {dimension_numbers = #tpu.dot_dimension_numbers<[1], [0], [0], [1], [0, 0, 1, 1], [], []>} : vector<256x72xf32>, vector<72x256xf32>, vector<256x256xf32> -> vector<256x256xf32>
    %c0_25 = arith.constant 0 : index
    %c0_26 = arith.constant 0 : index
    %84 = vector.load %arg7[%c0_25, %c0_26] : memref<256x1xf32, #tpu.memory_space<vmem>>, vector<256x1xf32>
    %85 = vector.broadcast %84 : vector<256x1xf32> to vector<256x256xf32>
    %86 = arith.addf %83, %85 : vector<256x256xf32>
    %cst_27 = arith.constant 0.000000e+00 : f32
    %87 = vector.broadcast %cst_27 : f32 to vector<256x256xf32>
    %88 = arith.maximumf %86, %87 : vector<256x256xf32>
    %cst_28 = arith.constant dense<0.000000e+00> : vector<256xf32>
    %89 = vector.multi_reduction <add>, %88, %cst_28 [1] : vector<256x256xf32> to vector<256xf32>
    %90 = vector.shape_cast %89 : vector<256xf32> to vector<256x1xf32>
    %cst_29 = arith.constant 2.560000e+02 : f32
    %91 = vector.broadcast %cst_29 : f32 to vector<256x1xf32>
    %92 = arith.divf %90, %91 : vector<256x1xf32>
    %c0_30 = arith.constant 0 : index
    %c0_31 = arith.constant 0 : index
    %93 = vector.load %arg9[%c0_30, %c0_31] : memref<36x256xf32, #tpu.memory_space<vmem>>, vector<36x256xf32>
    %cst_32 = arith.constant dense<0.000000e+00> : vector<36x1xf32>
    %94 = tpu.matmul %93, %92, %cst_32 {dimension_numbers = #tpu.dot_dimension_numbers<[1], [0], [0], [1], [0, 0, 1, 1], [], []>} : vector<36x256xf32>, vector<256x1xf32>, vector<36x1xf32> -> vector<36x1xf32>
    %c0_33 = arith.constant 0 : index
    %c0_34 = arith.constant 0 : index
    %95 = vector.load %arg10[%c0_33, %c0_34] : memref<4x1xf32, #tpu.memory_space<vmem>>, vector<4x1xf32>
    %cst_35 = arith.constant 1.000000e+00 : f32
    %96 = vector.broadcast %cst_35 : f32 to vector<1x256xf32>
    %97 = vector.broadcast %95 : vector<4x1xf32> to vector<4x256xf32>
    %98 = vector.broadcast %96 : vector<1x256xf32> to vector<4x256xf32>
    %99 = arith.mulf %97, %98 : vector<4x256xf32>
    %100 = vector.extract_strided_slice %94 {offsets = [0, 0], sizes = [4, 1], strides = [1, 1]} : vector<36x1xf32> to vector<4x1xf32>
    %101 = vector.extract_strided_slice %0 {offsets = [0, 0], sizes = [1, 256], strides = [1, 1]} : vector<9x256xf32> to vector<1x256xf32>
    %102 = vector.broadcast %100 : vector<4x1xf32> to vector<4x256xf32>
    %103 = vector.broadcast %101 : vector<1x256xf32> to vector<4x256xf32>
    %104 = arith.mulf %102, %103 : vector<4x256xf32>
    %105 = arith.addf %99, %104 : vector<4x256xf32>
    %106 = vector.extract_strided_slice %94 {offsets = [4, 0], sizes = [4, 1], strides = [1, 1]} : vector<36x1xf32> to vector<4x1xf32>
    %107 = vector.extract_strided_slice %0 {offsets = [1, 0], sizes = [1, 256], strides = [1, 1]} : vector<9x256xf32> to vector<1x256xf32>
    %108 = vector.broadcast %106 : vector<4x1xf32> to vector<4x256xf32>
    %109 = vector.broadcast %107 : vector<1x256xf32> to vector<4x256xf32>
    %110 = arith.mulf %108, %109 : vector<4x256xf32>
    %111 = arith.addf %105, %110 : vector<4x256xf32>
    %112 = vector.extract_strided_slice %94 {offsets = [8, 0], sizes = [4, 1], strides = [1, 1]} : vector<36x1xf32> to vector<4x1xf32>
    %113 = vector.extract_strided_slice %0 {offsets = [2, 0], sizes = [1, 256], strides = [1, 1]} : vector<9x256xf32> to vector<1x256xf32>
    %114 = vector.broadcast %112 : vector<4x1xf32> to vector<4x256xf32>
    %115 = vector.broadcast %113 : vector<1x256xf32> to vector<4x256xf32>
    %116 = arith.mulf %114, %115 : vector<4x256xf32>
    %117 = arith.addf %111, %116 : vector<4x256xf32>
    %118 = vector.extract_strided_slice %94 {offsets = [12, 0], sizes = [4, 1], strides = [1, 1]} : vector<36x1xf32> to vector<4x1xf32>
    %119 = vector.extract_strided_slice %0 {offsets = [3, 0], sizes = [1, 256], strides = [1, 1]} : vector<9x256xf32> to vector<1x256xf32>
    %120 = vector.broadcast %118 : vector<4x1xf32> to vector<4x256xf32>
    %121 = vector.broadcast %119 : vector<1x256xf32> to vector<4x256xf32>
    %122 = arith.mulf %120, %121 : vector<4x256xf32>
    %123 = arith.addf %117, %122 : vector<4x256xf32>
    %124 = vector.extract_strided_slice %94 {offsets = [16, 0], sizes = [4, 1], strides = [1, 1]} : vector<36x1xf32> to vector<4x1xf32>
    %125 = vector.broadcast %124 : vector<4x1xf32> to vector<4x256xf32>
    %126 = arith.addf %123, %125 : vector<4x256xf32>
    %127 = vector.extract_strided_slice %94 {offsets = [20, 0], sizes = [4, 1], strides = [1, 1]} : vector<36x1xf32> to vector<4x1xf32>
    %128 = vector.extract_strided_slice %0 {offsets = [5, 0], sizes = [1, 256], strides = [1, 1]} : vector<9x256xf32> to vector<1x256xf32>
    %129 = vector.broadcast %127 : vector<4x1xf32> to vector<4x256xf32>
    %130 = vector.broadcast %128 : vector<1x256xf32> to vector<4x256xf32>
    %131 = arith.mulf %129, %130 : vector<4x256xf32>
    %132 = arith.addf %126, %131 : vector<4x256xf32>
    %133 = vector.extract_strided_slice %94 {offsets = [24, 0], sizes = [4, 1], strides = [1, 1]} : vector<36x1xf32> to vector<4x1xf32>
    %134 = vector.extract_strided_slice %0 {offsets = [6, 0], sizes = [1, 256], strides = [1, 1]} : vector<9x256xf32> to vector<1x256xf32>
    %135 = vector.broadcast %133 : vector<4x1xf32> to vector<4x256xf32>
    %136 = vector.broadcast %134 : vector<1x256xf32> to vector<4x256xf32>
    %137 = arith.mulf %135, %136 : vector<4x256xf32>
    %138 = arith.addf %132, %137 : vector<4x256xf32>
    %139 = vector.extract_strided_slice %94 {offsets = [28, 0], sizes = [4, 1], strides = [1, 1]} : vector<36x1xf32> to vector<4x1xf32>
    %140 = vector.extract_strided_slice %0 {offsets = [7, 0], sizes = [1, 256], strides = [1, 1]} : vector<9x256xf32> to vector<1x256xf32>
    %141 = vector.broadcast %139 : vector<4x1xf32> to vector<4x256xf32>
    %142 = vector.broadcast %140 : vector<1x256xf32> to vector<4x256xf32>
    %143 = arith.mulf %141, %142 : vector<4x256xf32>
    %144 = arith.addf %138, %143 : vector<4x256xf32>
    %145 = vector.extract_strided_slice %94 {offsets = [32, 0], sizes = [4, 1], strides = [1, 1]} : vector<36x1xf32> to vector<4x1xf32>
    %146 = vector.extract_strided_slice %0 {offsets = [8, 0], sizes = [1, 256], strides = [1, 1]} : vector<9x256xf32> to vector<1x256xf32>
    %147 = vector.broadcast %145 : vector<4x1xf32> to vector<4x256xf32>
    %148 = vector.broadcast %146 : vector<1x256xf32> to vector<4x256xf32>
    %149 = arith.mulf %147, %148 : vector<4x256xf32>
    %150 = arith.addf %144, %149 : vector<4x256xf32>
    %c17_i32_36 = arith.constant 17 : i32
    %151 = tpu.dynamic_rotate %42 by %c17_i32_36 dim 1 : vector<256x256xf32>, i32 -> vector<256x256xf32>
    %c0_37 = arith.constant 0 : index
    %c0_38 = arith.constant 0 : index
    %152 = vector.load %arg8[%c0_37, %c0_38] : memref<4x2304xf32, #tpu.memory_space<vmem>>, vector<4x256xf32>
    %cst_39 = arith.constant dense<0.000000e+00> : vector<4x256xf32>
    %153 = tpu.matmul %152, %151, %cst_39 {dimension_numbers = #tpu.dot_dimension_numbers<[1], [0], [0], [1], [0, 0, 1, 1], [], []>} : vector<4x256xf32>, vector<256x256xf32>, vector<4x256xf32> -> vector<4x256xf32>
    %154 = vector.extract_strided_slice %0 {offsets = [0, 0], sizes = [1, 256], strides = [1, 1]} : vector<9x256xf32> to vector<1x256xf32>
    %155 = vector.broadcast %154 : vector<1x256xf32> to vector<4x256xf32>
    %156 = arith.mulf %153, %155 : vector<4x256xf32>
    %157 = arith.addf %150, %156 : vector<4x256xf32>
    %c16_i32_40 = arith.constant 16 : i32
    %158 = tpu.dynamic_rotate %42 by %c16_i32_40 dim 1 : vector<256x256xf32>, i32 -> vector<256x256xf32>
    %c0_41 = arith.constant 0 : index
    %c256 = arith.constant 256 : index
    %159 = vector.load %arg8[%c0_41, %c256] : memref<4x2304xf32, #tpu.memory_space<vmem>>, vector<4x256xf32>
    %cst_42 = arith.constant dense<0.000000e+00> : vector<4x256xf32>
    %160 = tpu.matmul %159, %158, %cst_42 {dimension_numbers = #tpu.dot_dimension_numbers<[1], [0], [0], [1], [0, 0, 1, 1], [], []>} : vector<4x256xf32>, vector<256x256xf32>, vector<4x256xf32> -> vector<4x256xf32>
    %161 = vector.extract_strided_slice %0 {offsets = [1, 0], sizes = [1, 256], strides = [1, 1]} : vector<9x256xf32> to vector<1x256xf32>
    %162 = vector.broadcast %161 : vector<1x256xf32> to vector<4x256xf32>
    %163 = arith.mulf %160, %162 : vector<4x256xf32>
    %164 = arith.addf %157, %163 : vector<4x256xf32>
    %c15_i32_43 = arith.constant 15 : i32
    %165 = tpu.dynamic_rotate %42 by %c15_i32_43 dim 1 : vector<256x256xf32>, i32 -> vector<256x256xf32>
    %c0_44 = arith.constant 0 : index
    %c512 = arith.constant 512 : index
    %166 = vector.load %arg8[%c0_44, %c512] : memref<4x2304xf32, #tpu.memory_space<vmem>>, vector<4x256xf32>
    %cst_45 = arith.constant dense<0.000000e+00> : vector<4x256xf32>
    %167 = tpu.matmul %166, %165, %cst_45 {dimension_numbers = #tpu.dot_dimension_numbers<[1], [0], [0], [1], [0, 0, 1, 1], [], []>} : vector<4x256xf32>, vector<256x256xf32>, vector<4x256xf32> -> vector<4x256xf32>
    %168 = vector.extract_strided_slice %0 {offsets = [2, 0], sizes = [1, 256], strides = [1, 1]} : vector<9x256xf32> to vector<1x256xf32>
    %169 = vector.broadcast %168 : vector<1x256xf32> to vector<4x256xf32>
    %170 = arith.mulf %167, %169 : vector<4x256xf32>
    %171 = arith.addf %164, %170 : vector<4x256xf32>
    %c1_i32_46 = arith.constant 1 : i32
    %172 = tpu.dynamic_rotate %42 by %c1_i32_46 dim 1 : vector<256x256xf32>, i32 -> vector<256x256xf32>
    %c0_47 = arith.constant 0 : index
    %c768 = arith.constant 768 : index
    %173 = vector.load %arg8[%c0_47, %c768] : memref<4x2304xf32, #tpu.memory_space<vmem>>, vector<4x256xf32>
    %cst_48 = arith.constant dense<0.000000e+00> : vector<4x256xf32>
    %174 = tpu.matmul %173, %172, %cst_48 {dimension_numbers = #tpu.dot_dimension_numbers<[1], [0], [0], [1], [0, 0, 1, 1], [], []>} : vector<4x256xf32>, vector<256x256xf32>, vector<4x256xf32> -> vector<4x256xf32>
    %175 = vector.extract_strided_slice %0 {offsets = [3, 0], sizes = [1, 256], strides = [1, 1]} : vector<9x256xf32> to vector<1x256xf32>
    %176 = vector.broadcast %175 : vector<1x256xf32> to vector<4x256xf32>
    %177 = arith.mulf %174, %176 : vector<4x256xf32>
    %178 = arith.addf %171, %177 : vector<4x256xf32>
    %c0_49 = arith.constant 0 : index
    %c1024 = arith.constant 1024 : index
    %179 = vector.load %arg8[%c0_49, %c1024] : memref<4x2304xf32, #tpu.memory_space<vmem>>, vector<4x256xf32>
    %cst_50 = arith.constant dense<0.000000e+00> : vector<4x256xf32>
    %180 = tpu.matmul %179, %42, %cst_50 {dimension_numbers = #tpu.dot_dimension_numbers<[1], [0], [0], [1], [0, 0, 1, 1], [], []>} : vector<4x256xf32>, vector<256x256xf32>, vector<4x256xf32> -> vector<4x256xf32>
    %181 = arith.addf %178, %180 : vector<4x256xf32>
    %c255_i32_51 = arith.constant 255 : i32
    %182 = tpu.dynamic_rotate %42 by %c255_i32_51 dim 1 : vector<256x256xf32>, i32 -> vector<256x256xf32>
    %c0_52 = arith.constant 0 : index
    %c1280 = arith.constant 1280 : index
    %183 = vector.load %arg8[%c0_52, %c1280] : memref<4x2304xf32, #tpu.memory_space<vmem>>, vector<4x256xf32>
    %cst_53 = arith.constant dense<0.000000e+00> : vector<4x256xf32>
    %184 = tpu.matmul %183, %182, %cst_53 {dimension_numbers = #tpu.dot_dimension_numbers<[1], [0], [0], [1], [0, 0, 1, 1], [], []>} : vector<4x256xf32>, vector<256x256xf32>, vector<4x256xf32> -> vector<4x256xf32>
    %185 = vector.extract_strided_slice %0 {offsets = [5, 0], sizes = [1, 256], strides = [1, 1]} : vector<9x256xf32> to vector<1x256xf32>
    %186 = vector.broadcast %185 : vector<1x256xf32> to vector<4x256xf32>
    %187 = arith.mulf %184, %186 : vector<4x256xf32>
    %188 = arith.addf %181, %187 : vector<4x256xf32>
    %c241_i32_54 = arith.constant 241 : i32
    %189 = tpu.dynamic_rotate %42 by %c241_i32_54 dim 1 : vector<256x256xf32>, i32 -> vector<256x256xf32>
    %c0_55 = arith.constant 0 : index
    %c1536 = arith.constant 1536 : index
    %190 = vector.load %arg8[%c0_55, %c1536] : memref<4x2304xf32, #tpu.memory_space<vmem>>, vector<4x256xf32>
    %cst_56 = arith.constant dense<0.000000e+00> : vector<4x256xf32>
    %191 = tpu.matmul %190, %189, %cst_56 {dimension_numbers = #tpu.dot_dimension_numbers<[1], [0], [0], [1], [0, 0, 1, 1], [], []>} : vector<4x256xf32>, vector<256x256xf32>, vector<4x256xf32> -> vector<4x256xf32>
    %192 = vector.extract_strided_slice %0 {offsets = [6, 0], sizes = [1, 256], strides = [1, 1]} : vector<9x256xf32> to vector<1x256xf32>
    %193 = vector.broadcast %192 : vector<1x256xf32> to vector<4x256xf32>
    %194 = arith.mulf %191, %193 : vector<4x256xf32>
    %195 = arith.addf %188, %194 : vector<4x256xf32>
    %c240_i32_57 = arith.constant 240 : i32
    %196 = tpu.dynamic_rotate %42 by %c240_i32_57 dim 1 : vector<256x256xf32>, i32 -> vector<256x256xf32>
    %c0_58 = arith.constant 0 : index
    %c1792 = arith.constant 1792 : index
    %197 = vector.load %arg8[%c0_58, %c1792] : memref<4x2304xf32, #tpu.memory_space<vmem>>, vector<4x256xf32>
    %cst_59 = arith.constant dense<0.000000e+00> : vector<4x256xf32>
    %198 = tpu.matmul %197, %196, %cst_59 {dimension_numbers = #tpu.dot_dimension_numbers<[1], [0], [0], [1], [0, 0, 1, 1], [], []>} : vector<4x256xf32>, vector<256x256xf32>, vector<4x256xf32> -> vector<4x256xf32>
    %199 = vector.extract_strided_slice %0 {offsets = [7, 0], sizes = [1, 256], strides = [1, 1]} : vector<9x256xf32> to vector<1x256xf32>
    %200 = vector.broadcast %199 : vector<1x256xf32> to vector<4x256xf32>
    %201 = arith.mulf %198, %200 : vector<4x256xf32>
    %202 = arith.addf %195, %201 : vector<4x256xf32>
    %c239_i32_60 = arith.constant 239 : i32
    %203 = tpu.dynamic_rotate %42 by %c239_i32_60 dim 1 : vector<256x256xf32>, i32 -> vector<256x256xf32>
    %c0_61 = arith.constant 0 : index
    %c2048 = arith.constant 2048 : index
    %204 = vector.load %arg8[%c0_61, %c2048] : memref<4x2304xf32, #tpu.memory_space<vmem>>, vector<4x256xf32>
    %cst_62 = arith.constant dense<0.000000e+00> : vector<4x256xf32>
    %205 = tpu.matmul %204, %203, %cst_62 {dimension_numbers = #tpu.dot_dimension_numbers<[1], [0], [0], [1], [0, 0, 1, 1], [], []>} : vector<4x256xf32>, vector<256x256xf32>, vector<4x256xf32> -> vector<4x256xf32>
    %206 = vector.extract_strided_slice %0 {offsets = [8, 0], sizes = [1, 256], strides = [1, 1]} : vector<9x256xf32> to vector<1x256xf32>
    %207 = vector.broadcast %206 : vector<1x256xf32> to vector<4x256xf32>
    %208 = arith.mulf %205, %207 : vector<4x256xf32>
    %209 = arith.addf %202, %208 : vector<4x256xf32>
    %210 = math.tanh %209 : vector<4x256xf32>
    %c0_63 = arith.constant 0 : index
    %c0_64 = arith.constant 0 : index
    %c0_65 = arith.constant 0 : index
    %211 = vector.load %arg11[%c0_63, %c0_64, %c0_65] : memref<1x4x256xf32, #tpu.memory_space<vmem>>, vector<1x4x256xf32>
    %212 = vector.shape_cast %211 : vector<1x4x256xf32> to vector<4x256xf32>
    %213 = vector.shape_cast %210 : vector<4x256xf32> to vector<1x4x256xf32>
    tpu.vector_store %arg11[%c0_63, %c0_64, %c0_65], %213 {strides = array<i32>} : memref<1x4x256xf32, #tpu.memory_space<vmem>>, vector<1x4x256xf32>,
    return
  }
  func.func @transform_0(%arg0: i32) -> (i32, i32, i32) {
    %c0_i32 = arith.constant 0 : i32
    %c0_i32_0 = arith.constant 0 : i32
    %c0_i32_1 = arith.constant 0 : i32
    return %arg0, %c0_i32, %c0_i32_0 : i32, i32, i32
  }
  func.func @transform_1(%arg0: i32) -> (i32, i32, i32) {
    %c0_i32 = arith.constant 0 : i32
    %c0_i32_0 = arith.constant 0 : i32
    %c0_i32_1 = arith.constant 0 : i32
    return %arg0, %c0_i32, %c0_i32_0 : i32, i32, i32
  }
  func.func @transform_2(%arg0: i32) -> (i32, i32) {
    %c0_i32 = arith.constant 0 : i32
    %c0_i32_0 = arith.constant 0 : i32
    %c0_i32_1 = arith.constant 0 : i32
    return %c0_i32, %c0_i32_0 : i32, i32
  }
  func.func @transform_3(%arg0: i32) -> (i32, i32) {
    %c0_i32 = arith.constant 0 : i32
    %c0_i32_0 = arith.constant 0 : i32
    %c0_i32_1 = arith.constant 0 : i32
    return %c0_i32, %c0_i32_0 : i32, i32
  }
  func.func @transform_4(%arg0: i32) -> (i32, i32) {
    %c0_i32 = arith.constant 0 : i32
    %c0_i32_0 = arith.constant 0 : i32
    %c0_i32_1 = arith.constant 0 : i32
    return %c0_i32, %c0_i32_0 : i32, i32
  }
  func.func @transform_5(%arg0: i32) -> (i32, i32) {
    %c0_i32 = arith.constant 0 : i32
    %c0_i32_0 = arith.constant 0 : i32
    %c0_i32_1 = arith.constant 0 : i32
    return %c0_i32, %c0_i32_0 : i32, i32
  }
  func.func @transform_6(%arg0: i32) -> (i32, i32) {
    %c0_i32 = arith.constant 0 : i32
    %c0_i32_0 = arith.constant 0 : i32
    %c0_i32_1 = arith.constant 0 : i32
    return %c0_i32, %c0_i32_0 : i32, i32
  }
  func.func @transform_7(%arg0: i32) -> (i32, i32) {
    %c0_i32 = arith.constant 0 : i32
    %c0_i32_0 = arith.constant 0 : i32
    %c0_i32_1 = arith.constant 0 : i32
    return %c0_i32, %c0_i32_0 : i32, i32
  }
  func.func @transform_8(%arg0: i32) -> (i32, i32) {
    %c0_i32 = arith.constant 0 : i32
    %c0_i32_0 = arith.constant 0 : i32
    %c0_i32_1 = arith.constant 0 : i32
    return %c0_i32, %c0_i32_0 : i32, i32
  }
  func.func @transform_9(%arg0: i32) -> (i32, i32) {
    %c0_i32 = arith.constant 0 : i32
    %c0_i32_0 = arith.constant 0 : i32
    %c0_i32_1 = arith.constant 0 : i32
    return %c0_i32, %c0_i32_0 : i32, i32
  }
  func.func @transform_10(%arg0: i32) -> (i32, i32, i32) {
    %c0_i32 = arith.constant 0 : i32
    %c0_i32_0 = arith.constant 0 : i32
    %c0_i32_1 = arith.constant 0 : i32
    return %arg0, %c0_i32, %c0_i32_0 : i32, i32, i32
  }
}

</mosaic_0001>

<llo_original>
// kernel: generator_forward.1
$region0: #{generator_forward.1}
  #allocation0 [shape = 'u32[]', space=smem, size = 0x4, offset = 0x4, fixed_abs, tag = 'smem constant byte address 0x4 - core index']
  #allocation1 [shape = 'u32[72,128]{1,0:T(1,128)}', space=vmem, size = 0x9000, scoped, tag = 'internal scratch']
  %s0 = inlined_call_operand.vmem [shape: f32[2,8,256], index: 0, kind: input, shape index: {}]
  %s1 = inlined_call_operand.vmem [shape: f32[2,8,256], index: 1, kind: input, shape index: {}]
  %s2 = inlined_call_operand.vmem [shape: f32[9,256], index: 2, kind: input, shape index: {}]
  %s3 = inlined_call_operand.vmem [shape: f32[256,72], index: 3, kind: input, shape index: {}]
  %s4 = inlined_call_operand.vmem [shape: f32[256,1], index: 4, kind: input, shape index: {}]
  %s5 = inlined_call_operand.vmem [shape: f32[256,72], index: 5, kind: input, shape index: {}]
  %s6 = inlined_call_operand.vmem [shape: f32[256,1], index: 6, kind: input, shape index: {}]
  %s7 = inlined_call_operand.vmem [shape: f32[4,2304], index: 7, kind: input, shape index: {}]
  %s8 = inlined_call_operand.vmem [shape: f32[36,256], index: 8, kind: input, shape index: {}]
  %s9 = inlined_call_operand.vmem [shape: f32[4,1], index: 9, kind: input, shape index: {}]
  %s10 = inlined_call_operand.vmem [shape: f32[2,4,256], index: 10, kind: output, shape index: {}]
  %s11 = sld [smem:[#allocation0]]
  $region73: #{generator_forward.1} parent=0
    _
  %s13 = ssub.s32 1, %s11
  %s14 = scalar_select 0, %s13, %s11
  loop: start=0, step=1, limit=4
  $region2: #{generator_forward.1} parent=0 // loop_pre_header
    _
  $region3: #{generator_forward.1} parent=0 // loop_header
    %s16 = sphi 0, %s20
    %p17 = scmp.ge.s32.totalorder %s16, 4
    %s26 = sphi 0, %s28
    %s29 = sphi 0, %s26
    %s30 = sphi 0, %s29
    %s46 = sphi 0, %s30
    %s52 = sphi 0, %s54
    %s55 = sphi 0, %s52
    %s56 = sphi 0, %s55
    %s72 = sphi 0, %s56
    %s76 = sphi 0, %s76
    %s78 = sphi 0, %s76
    %s79 = sphi 0, %s78
    %s93 = sphi 0, %s79
    %s97 = sphi 0, %s97
    %s99 = sphi 0, %s97
    %s100 = sphi 0, %s99
    %s114 = sphi 0, %s100
    %s118 = sphi 0, %s118
    %s120 = sphi 0, %s118
    %s121 = sphi 0, %s120
    %s135 = sphi 0, %s121
    %s139 = sphi 0, %s139
    %s141 = sphi 0, %s139
    %s142 = sphi 0, %s141
    %s156 = sphi 0, %s142
    %s160 = sphi 0, %s160
    %s162 = sphi 0, %s160
    %s163 = sphi 0, %s162
    %s177 = sphi 0, %s163
    %s181 = sphi 0, %s181
    %s183 = sphi 0, %s181
    %s184 = sphi 0, %s183
    %s198 = sphi 0, %s184
    %s202 = sphi 0, %s202
    %s204 = sphi 0, %s202
    %s205 = sphi 0, %s204
    %s219 = sphi 0, %s205
    %s223 = sphi 0, %s223
    %s225 = sphi 0, %s223
    %s226 = sphi 0, %s225
    %s240 = sphi 0, %s226
    %s246 = sphi 0, %s248
    %s249 = sphi 0, %s246
    %s250 = sphi 0, %s249
    %s266 = sphi 0, %s250
  $region4: #{generator_forward.1} parent=0 // loop_header_branch
    %19 = sbr.rel (%p17) target = $region8
  $region5: #{generator_forward.1} parent=0 // loop_body
    %s21 = ssub.s32 %s16, 1
    %s22 = ssub.s32 %s16, 2
    %s23 = sadd.s32 %s16, 1
    %s24 = ssub.s32 %s16, %s23
    %p25 = scmp.eq.s32.totalorder %s24, 0
    %s27 = sadd.s32 %s26, 1
    %s28 = scalar_select %p25, %s26, %s27
    %p31 = pneg %p25
    %p32 = scmp.eq.s32.totalorder %s16, 1
    %p33 = por %p31, %p32
    %p34 = scmp.ne.s32.totalorder %s26, %s29
    %p35 = scmp.eq.s32.totalorder %s16, 0
    %p36 = por %p34, %p35
    %p37 = scmp.ne.s32.totalorder %s26, %s29
    %p38 = scmp.eq.s32.totalorder %s21, 1
    %p39 = por %p37, %p38
    %p40 = scmp.ne.s32.totalorder %s29, %s30
    %p41 = scmp.eq.s32.totalorder %s21, 0
    %p42 = por %p40, %p41
    %p43 = scmp.ne.s32.totalorder %s29, %s30
    %p44 = scmp.eq.s32.totalorder %s22, 1
    %p45 = por %p43, %p44
    %p47 = scmp.ne.s32.totalorder %s30, %s46
    %p48 = scmp.eq.s32.totalorder %s22, 0
    %p49 = por %p47, %p48
    %s50 = ssub.s32 %s16, %s23
    %p51 = scmp.eq.s32.totalorder %s50, 0
    %s53 = sadd.s32 %s52, 1
    %s54 = scalar_select %p51, %s52, %s53
    %p57 = pneg %p51
    %p58 = scmp.eq.s32.totalorder %s16, 1
    %p59 = por %p57, %p58
    %p60 = scmp.ne.s32.totalorder %s52, %s55
    %p61 = scmp.eq.s32.totalorder %s16, 0
    %p62 = por %p60, %p61
    %p63 = scmp.ne.s32.totalorder %s52, %s55
    %p64 = scmp.eq.s32.totalorder %s21, 1
    %p65 = por %p63, %p64
    %p66 = scmp.ne.s32.totalorder %s55, %s56
    %p67 = scmp.eq.s32.totalorder %s21, 0
    %p68 = por %p66, %p67
    %p69 = scmp.ne.s32.totalorder %s55, %s56
    %p70 = scmp.eq.s32.totalorder %s22, 1
    %p71 = por %p69, %p70
    %p73 = scmp.ne.s32.totalorder %s56, %s72
    %p74 = scmp.eq.s32.totalorder %s22, 0
    %p75 = por %p73, %p74
    %s77 = sadd.s32 %s76, 1
    %p80 = scmp.eq.s32.totalorder %s16, 1
    %p81 = scmp.ne.s32.totalorder %s76, %s78
    %p82 = scmp.eq.s32.totalorder %s16, 0
    %p83 = por %p81, %p82
    %p84 = scmp.ne.s32.totalorder %s76, %s78
    %p85 = scmp.eq.s32.totalorder %s21, 1
    %p86 = por %p84, %p85
    %p87 = scmp.ne.s32.totalorder %s78, %s79
    %p88 = scmp.eq.s32.totalorder %s21, 0
    %p89 = por %p87, %p88
    %p90 = scmp.ne.s32.totalorder %s78, %s79
    %p91 = scmp.eq.s32.totalorder %s22, 1
    %p92 = por %p90, %p91
    %p94 = scmp.ne.s32.totalorder %s79, %s93
    %p95 = scmp.eq.s32.totalorder %s22, 0
    %p96 = por %p94, %p95
    %s98 = sadd.s32 %s97, 1
    %p101 = scmp.eq.s32.totalorder %s16, 1
    %p102 = scmp.ne.s32.totalorder %s97, %s99
    %p103 = scmp.eq.s32.totalorder %s16, 0
    %p104 = por %p102, %p103
    %p105 = scmp.ne.s32.totalorder %s97, %s99
    %p106 = scmp.eq.s32.totalorder %s21, 1
    %p107 = por %p105, %p106
    %p108 = scmp.ne.s32.totalorder %s99, %s100
    %p109 = scmp.eq.s32.totalorder %s21, 0
    %p110 = por %p108, %p109
    %p111 = scmp.ne.s32.totalorder %s99, %s100
    %p112 = scmp.eq.s32.totalorder %s22, 1
    %p113 = por %p111, %p112
    %p115 = scmp.ne.s32.totalorder %s100, %s114
    %p116 = scmp.eq.s32.totalorder %s22, 0
    %p117 = por %p115, %p116
    %s119 = sadd.s32 %s118, 1
    %p122 = scmp.eq.s32.totalorder %s16, 1
    %p123 = scmp.ne.s32.totalorder %s118, %s120
    %p124 = scmp.eq.s32.totalorder %s16, 0
    %p125 = por %p123, %p124
    %p126 = scmp.ne.s32.totalorder %s118, %s120
    %p127 = scmp.eq.s32.totalorder %s21, 1
    %p128 = por %p126, %p127
    %p129 = scmp.ne.s32.totalorder %s120, %s121
    %p130 = scmp.eq.s32.totalorder %s21, 0
    %p131 = por %p129, %p130
    %p132 = scmp.ne.s32.totalorder %s120, %s121
    %p133 = scmp.eq.s32.totalorder %s22, 1
    %p134 = por %p132, %p133
    %p136 = scmp.ne.s32.totalorder %s121, %s135
    %p137 = scmp.eq.s32.totalorder %s22, 0
    %p138 = por %p136, %p137
    %s140 = sadd.s32 %s139, 1
    %p143 = scmp.eq.s32.totalorder %s16, 1
    %p144 = scmp.ne.s32.totalorder %s139, %s141
    %p145 = scmp.eq.s32.totalorder %s16, 0
    %p146 = por %p144, %p145
    %p147 = scmp.ne.s32.totalorder %s139, %s141
    %p148 = scmp.eq.s32.totalorder %s21, 1
    %p149 = por %p147, %p148
    %p150 = scmp.ne.s32.totalorder %s141, %s142
    %p151 = scmp.eq.s32.totalorder %s21, 0
    %p152 = por %p150, %p151
    %p153 = scmp.ne.s32.totalorder %s141, %s142
    %p154 = scmp.eq.s32.totalorder %s22, 1
    %p155 = por %p153, %p154
    %p157 = scmp.ne.s32.totalorder %s142, %s156
    %p158 = scmp.eq.s32.totalorder %s22, 0
    %p159 = por %p157, %p158
    %s161 = sadd.s32 %s160, 1
    %p164 = scmp.eq.s32.totalorder %s16, 1
    %p165 = scmp.ne.s32.totalorder %s160, %s162
    %p166 = scmp.eq.s32.totalorder %s16, 0
    %p167 = por %p165, %p166
    %p168 = scmp.ne.s32.totalorder %s160, %s162
    %p169 = scmp.eq.s32.totalorder %s21, 1
    %p170 = por %p168, %p169
    %p171 = scmp.ne.s32.totalorder %s162, %s163
    %p172 = scmp.eq.s32.totalorder %s21, 0
    %p173 = por %p171, %p172
    %p174 = scmp.ne.s32.totalorder %s162, %s163
    %p175 = scmp.eq.s32.totalorder %s22, 1
    %p176 = por %p174, %p175
    %p178 = scmp.ne.s32.totalorder %s163, %s177
    %p179 = scmp.eq.s32.totalorder %s22, 0
    %p180 = por %p178, %p179
    %s182 = sadd.s32 %s181, 1
    %p185 = scmp.eq.s32.totalorder %s16, 1
    %p186 = scmp.ne.s32.totalorder %s181, %s183
    %p187 = scmp.eq.s32.totalorder %s16, 0
    %p188 = por %p186, %p187
    %p189 = scmp.ne.s32.totalorder %s181, %s183
    %p190 = scmp.eq.s32.totalorder %s21, 1
    %p191 = por %p189, %p190
    %p192 = scmp.ne.s32.totalorder %s183, %s184
    %p193 = scmp.eq.s32.totalorder %s21, 0
    %p194 = por %p192, %p193
    %p195 = scmp.ne.s32.totalorder %s183, %s184
    %p196 = scmp.eq.s32.totalorder %s22, 1
    %p197 = por %p195, %p196
    %p199 = scmp.ne.s32.totalorder %s184, %s198
    %p200 = scmp.eq.s32.totalorder %s22, 0
    %p201 = por %p199, %p200
    %s203 = sadd.s32 %s202, 1
    %p206 = scmp.eq.s32.totalorder %s16, 1
    %p207 = scmp.ne.s32.totalorder %s202, %s204
    %p208 = scmp.eq.s32.totalorder %s16, 0
    %p209 = por %p207, %p208
    %p210 = scmp.ne.s32.totalorder %s202, %s204
    %p211 = scmp.eq.s32.totalorder %s21, 1
    %p212 = por %p210, %p211
    %p213 = scmp.ne.s32.totalorder %s204, %s205
    %p214 = scmp.eq.s32.totalorder %s21, 0
    %p215 = por %p213, %p214
    %p216 = scmp.ne.s32.totalorder %s204, %s205
    %p217 = scmp.eq.s32.totalorder %s22, 1
    %p218 = por %p216, %p217
    %p220 = scmp.ne.s32.totalorder %s205, %s219
    %p221 = scmp.eq.s32.totalorder %s22, 0
    %p222 = por %p220, %p221
    %s224 = sadd.s32 %s223, 1
    %p227 = scmp.eq.s32.totalorder %s16, 1
    %p228 = scmp.ne.s32.totalorder %s223, %s225
    %p229 = scmp.eq.s32.totalorder %s16, 0
    %p230 = por %p228, %p229
    %p231 = scmp.ne.s32.totalorder %s223, %s225
    %p232 = scmp.eq.s32.totalorder %s21, 1
    %p233 = por %p231, %p232
    %p234 = scmp.ne.s32.totalorder %s225, %s226
    %p235 = scmp.eq.s32.totalorder %s21, 0
    %p236 = por %p234, %p235
    %p237 = scmp.ne.s32.totalorder %s225, %s226
    %p238 = scmp.eq.s32.totalorder %s22, 1
    %p239 = por %p237, %p238
    %p241 = scmp.ne.s32.totalorder %s226, %s240
    %p242 = scmp.eq.s32.totalorder %s22, 0
    %p243 = por %p241, %p242
    %s244 = ssub.s32 %s16, %s23
    %p245 = scmp.eq.s32.totalorder %s244, 0
    %s247 = sadd.s32 %s246, 1
    %s248 = scalar_select %p245, %s246, %s247
    %p251 = pneg %p245
    %p252 = scmp.eq.s32.totalorder %s16, 1
    %p253 = por %p251, %p252
    %p254 = scmp.ne.s32.totalorder %s246, %s249
    %p255 = scmp.eq.s32.totalorder %s16, 0
    %p256 = por %p254, %p255
    %p257 = scmp.ne.s32.totalorder %s246, %s249
    %p258 = scmp.eq.s32.totalorder %s21, 1
    %p259 = por %p257, %p258
    %p260 = scmp.ne.s32.totalorder %s249, %s250
    %p261 = scmp.eq.s32.totalorder %s21, 0
    %p262 = por %p260, %p261
    %p263 = scmp.ne.s32.totalorder %s249, %s250
    %p264 = scmp.eq.s32.totalorder %s22, 1
    %p265 = por %p263, %p264
    %p267 = scmp.ne.s32.totalorder %s250, %s266
    %p268 = scmp.eq.s32.totalorder %s22, 0
    %p269 = por %p267, %p268
    %p270 = scmp.le.s32.totalorder 1, %s16
    %p271 = scmp.lt.s32.totalorder %s16, 3
    %p272 = pnand %p270, %p271
    %p273 = pneg %p272
    // Predicated region
    $region9: #{generator_forward.1} parent=5 // pred_check
      _
    $region10: #{generator_forward.1} parent=5 // pred_check_branch
      %275 = sbr.rel (%p272) target = $region12
    $region11: #{generator_forward.1} parent=5 // pred_region
      %s276 = ssub.s32 %s16, 1
      // Predicated region
      $region13: #{generator_forward.1} parent=11 // pred_check
        %p277 = pneg %p89
      $region14: #{generator_forward.1} parent=11 // pred_check_branch
        %279 = sbr.rel (%p277) target = $region16
      $region15: #{generator_forward.1} parent=11 // pred_region
        _
      $region16: #{generator_forward.1} parent=11 // pred_fallthru
        _
      // Predicated region
      $region17: #{generator_forward.1} parent=11 // pred_check
        %p280 = pneg %p110
      $region18: #{generator_forward.1} parent=11 // pred_check_branch
        %282 = sbr.rel (%p280) target = $region20
      $region19: #{generator_forward.1} parent=11 // pred_region
        _
      $region20: #{generator_forward.1} parent=11 // pred_fallthru
        _
      // Predicated region
      $region21: #{generator_forward.1} parent=11 // pred_check
        %p283 = pneg %p131
      $region22: #{generator_forward.1} parent=11 // pred_check_branch
        %285 = sbr.rel (%p283) target = $region24
      $region23: #{generator_forward.1} parent=11 // pred_region
        _
      $region24: #{generator_forward.1} parent=11 // pred_fallthru
        _
      // Predicated region
      $region25: #{generator_forward.1} parent=11 // pred_check
        %p286 = pneg %p152
      $region26: #{generator_forward.1} parent=11 // pred_check_branch
        %288 = sbr.rel (%p286) target = $region28
      $region27: #{generator_forward.1} parent=11 // pred_region
        _
      $region28: #{generator_forward.1} parent=11 // pred_fallthru
        _
      // Predicated region
      $region29: #{generator_forward.1} parent=11 // pred_check
        %p289 = pneg %p173
      $region30: #{generator_forward.1} parent=11 // pred_check_branch
        %291 = sbr.rel (%p289) target = $region32
      $region31: #{generator_forward.1} parent=11 // pred_region
        _
      $region32: #{generator_forward.1} parent=11 // pred_fallthru
        _
      // Predicated region
      $region33: #{generator_forward.1} parent=11 // pred_check
        %p292 = pneg %p194
      $region34: #{generator_forward.1} parent=11 // pred_check_branch
        %294 = sbr.rel (%p292) target = $region36
      $region35: #{generator_forward.1} parent=11 // pred_region
        _
      $region36: #{generator_forward.1} parent=11 // pred_fallthru
        _
      // Predicated region
      $region37: #{generator_forward.1} parent=11 // pred_check
        %p295 = pneg %p215
      $region38: #{generator_forward.1} parent=11 // pred_check_branch
        %297 = sbr.rel (%p295) target = $region40
      $region39: #{generator_forward.1} parent=11 // pred_region
        _
      $region40: #{generator_forward.1} parent=11 // pred_fallthru
        _
      // Predicated region
      $region41: #{generator_forward.1} parent=11 // pred_check
        %p298 = pneg %p236
      $region42: #{generator_forward.1} parent=11 // pred_check_branch
        %300 = sbr.rel (%p298) target = $region44
      $region43: #{generator_forward.1} parent=11 // pred_region
        _
      $region44: #{generator_forward.1} parent=11 // pred_fallthru
        _
    $region12: #{generator_forward.1} parent=5 // pred_fallthru
      _
    %p301 = scmp.lt.s32.totalorder %s16, 2
    // Predicated region
    $region45: #{generator_forward.1} parent=5 // pred_check
      %p302 = pneg %p301
    $region46: #{generator_forward.1} parent=5 // pred_check_branch
      %304 = sbr.rel (%p302) target = $region48
    $region47: #{generator_forward.1} parent=5 // pred_region
      // Predicated region
      $region49: #{generator_forward.1} parent=47 // pred_check
        %p305 = pneg %p36
      $region50: #{generator_forward.1} parent=47 // pred_check_branch
        %307 = sbr.rel (%p305) target = $region52
      $region51: #{generator_forward.1} parent=47 // pred_region
        %p308 = scmp.lt.s32.totalorder %s16, 1
        %s309 = scalar_select %p308, %s16, 1
        %s310 = smul.addr %s309, 2
        %s311 = smul.addr %s310, 8
        %s312 = scalar_lea.vmem %s0, %s311
      $region52: #{generator_forward.1} parent=47 // pred_fallthru
        _
      // Predicated region
      $region53: #{generator_forward.1} parent=47 // pred_check
        %p313 = pneg %p62
      $region54: #{generator_forward.1} parent=47 // pred_check_branch
        %315 = sbr.rel (%p313) target = $region56
      $region55: #{generator_forward.1} parent=47 // pred_region
        %p316 = scmp.lt.s32.totalorder %s16, 1
        %s317 = scalar_select %p316, %s16, 1
        %s318 = smul.addr %s317, 2
        %s319 = smul.addr %s318, 8
        %s320 = scalar_lea.vmem %s1, %s319
      $region56: #{generator_forward.1} parent=47 // pred_fallthru
        _
    $region48: #{generator_forward.1} parent=5 // pred_fallthru
      _
    %p321 = scmp.le.s32.totalorder 1, %s16
    %p322 = scmp.lt.s32.totalorder %s16, 3
    %p323 = pnand %p321, %p322
    %p324 = pneg %p323
    // Predicated region
    $region57: #{generator_forward.1} parent=5 // pred_check
      _
    $region58: #{generator_forward.1} parent=5 // pred_check_branch
      %326 = sbr.rel (%p323) target = $region60
    $region59: #{generator_forward.1} parent=5 // pred_region
      %s327 = ssub.s32 %s16, 1
      %p328 = scmp.lt.s32.totalorder %s21, 1
      %s329 = scalar_select %p328, %s21, 1
      %s330 = smul.addr %s329, 2
      %s331 = smul.addr %s330, 8
      %s332 = scalar_lea.vmem %s0, %s331
      %p333 = pneg %p42
      %p334 = pneg %p39
      %p335 = scmp.lt.s32.totalorder %s21, 1
      %s336 = scalar_select %p335, %s21, 1
      %s337 = smul.addr %s336, 2
      %s338 = smul.addr %s337, 8
      %s339 = scalar_lea.vmem %s1, %s338
      %p340 = pneg %p68
      %p341 = pneg %p65
      %p342 = pneg %p89
      %p343 = pneg %p86
      %p344 = pneg %p110
      %p345 = pneg %p107
      %p346 = pneg %p131
      %p347 = pneg %p128
      %p348 = pneg %p152
      %p349 = pneg %p149
      %p350 = pneg %p173
      %p351 = pneg %p170
      %p352 = pneg %p194
      %p353 = pneg %p191
      %p354 = pneg %p215
      %p355 = pneg %p212
      %p356 = pneg %p236
      %p357 = pneg %p233
      %p358 = pneg %p262
      %p359 = pneg %p259
      %p360 = scmp.lt.s32.totalorder %s21, 1
      %s361 = scalar_select %p360, %s21, 1
      %s362 = smul.addr %s361, 2
      %s363 = smul.addr %s362, 4
      %s364 = scalar_lea.vmem %s10, %s363
      %p365 = scmp.lt.s32.totalorder %s21, 1
      %s366 = scalar_select %p365, %s21, 1
      %s367 = smul.addr %s366, 2
      %s368 = smul.addr %s367, 8
      %s369 = scalar_lea.vmem %s0, %s368
      %p370 = scmp.lt.s32.totalorder %s21, 1
      %s371 = scalar_select %p370, %s21, 1
      %s372 = smul.addr %s371, 2
      %s373 = smul.addr %s372, 8
      %s374 = scalar_lea.vmem %s1, %s373
      %p375 = scmp.lt.s32.totalorder %s21, 1
      %s376 = scalar_select %p375, %s21, 1
      %s377 = smul.addr %s376, 2
      %s378 = smul.addr %s377, 4
      %s379 = scalar_lea.vmem %s10, %s378
      %v380 = vld [vmem:[%s2] sm:$0xff]
      %v381 = vld [vmem:[%s2 + $0x8] sm:$0xff]
      %v382 = vld [vmem:[%s2 + $0x10] sm:$0x1]
      %v383 = vld [vmem:[%s2 + $0x18] sm:$0x1]
      %v384 = vld [vmem:[%s3] sm:$0xff]
      %v385 = vld [vmem:[%s3 + $0x8] sm:$0xff]
      %v386 = vld [vmem:[%s3 + $0x10] sm:$0xff]
      %v387 = vld [vmem:[%s3 + $0x18] sm:$0xff]
      %v388 = vld [vmem:[%s3 + $0x20] sm:$0xff]
      %v389 = vld [vmem:[%s3 + $0x28] sm:$0xff]
      %v390 = vld [vmem:[%s3 + $0x30] sm:$0xff]
      %v391 = vld [vmem:[%s3 + $0x38] sm:$0xff]
      %v392 = vld [vmem:[%s3 + $0x40] sm:$0xff]
      %v393 = vld [vmem:[%s3 + $0x48] sm:$0xff]
      %v394 = vld [vmem:[%s3 + $0x50] sm:$0xff]
      %v395 = vld [vmem:[%s3 + $0x58] sm:$0xff]
      %v396 = vld [vmem:[%s3 + $0x60] sm:$0xff]
      %v397 = vld [vmem:[%s3 + $0x68] sm:$0xff]
      %v398 = vld [vmem:[%s3 + $0x70] sm:$0xff]
      %v399 = vld [vmem:[%s3 + $0x78] sm:$0xff]
      %v400 = vld [vmem:[%s3 + $0x80] sm:$0xff]
      %v401 = vld [vmem:[%s3 + $0x88] sm:$0xff]
      %v402 = vld [vmem:[%s3 + $0x90] sm:$0xff]
      %v403 = vld [vmem:[%s3 + $0x98] sm:$0xff]
      %v404 = vld [vmem:[%s3 + $0xa0] sm:$0xff]
      %v405 = vld [vmem:[%s3 + $0xa8] sm:$0xff]
      %v406 = vld [vmem:[%s3 + $0xb0] sm:$0xff]
      %v407 = vld [vmem:[%s3 + $0xb8] sm:$0xff]
      %v408 = vld [vmem:[%s3 + $0xc0] sm:$0xff]
      %v409 = vld [vmem:[%s3 + $0xc8] sm:$0xff]
      %v410 = vld [vmem:[%s3 + $0xd0] sm:$0xff]
      %v411 = vld [vmem:[%s3 + $0xd8] sm:$0xff]
      %v412 = vld [vmem:[%s3 + $0xe0] sm:$0xff]
      %v413 = vld [vmem:[%s3 + $0xe8] sm:$0xff]
      %v414 = vld [vmem:[%s3 + $0xf0] sm:$0xff]
      %v415 = vld [vmem:[%s3 + $0xf8] sm:$0xff]
      %v416 = vld [vmem:[%s369] sm:$0xff]
      %v417 = vld [vmem:[%s369 + $0x8] sm:$0xff]
      %418 = vrot.lane.b32.xlu0 %v416, 17
      %v419 = vpop.permute.xlu0 %418
      %420 = vrot.lane.b32.xlu0 %v417, 17
      %v421 = vpop.permute.xlu0 %420
      %v422 = vlaneseq
      %v423 = vand.u32 %v422, 127
      %vm424 = vcmp.lt.s32.totalorder %v423, 17
      %v425 = vsel %vm424, %v419, %v421
      %v426 = vsel %vm424, %v421, %v419
      %v427 = vperm.slane %v380, 0
      %v428 = vperm.slane %v381, 0
      %v429 = vmul.f32 %v426, %v427
      %v430 = vmul.f32 %v425, %v428
      %431 = vrot.lane.b32.xlu0 %v416, 16
      %v432 = vpop.permute.xlu0 %431
      %433 = vrot.lane.b32.xlu0 %v417, 16
      %v434 = vpop.permute.xlu0 %433
      %vm435 = vcmp.lt.s32.totalorder %v423, 16
      %v436 = vsel %vm435, %v432, %v434
      %v437 = vsel %vm435, %v434, %v432
      %v438 = vperm.slane %v380, 1
      %v439 = vperm.slane %v381, 1
      %v440 = vmul.f32 %v437, %v438
      %v441 = vmul.f32 %v436, %v439
      %442 = vrot.lane.b32.xlu0 %v416, 15
      %v443 = vpop.permute.xlu0 %442
      %444 = vrot.lane.b32.xlu0 %v417, 15
      %v445 = vpop.permute.xlu0 %444
      %vm446 = vcmp.lt.s32.totalorder %v423, 15
      %v447 = vsel %vm446, %v443, %v445
      %v448 = vsel %vm446, %v445, %v443
      %v449 = vperm.slane %v380, 2
      %v450 = vperm.slane %v381, 2
      %v451 = vmul.f32 %v448, %v449
      %v452 = vmul.f32 %v447, %v450
      %453 = vrot.lane.b32.xlu0 %v416, 1
      %v454 = vpop.permute.xlu0 %453
      %455 = vrot.lane.b32.xlu0 %v417, 1
      %v456 = vpop.permute.xlu0 %455
      %vm457 = vcmp.lt.s32.totalorder %v423, 1
      %v458 = vsel %vm457, %v454, %v456
      %v459 = vsel %vm457, %v456, %v454
      %v460 = vperm.slane %v380, 3
      %v461 = vperm.slane %v381, 3
      %v462 = vmul.f32 %v459, %v460
      %v463 = vmul.f32 %v458, %v461
      %464 = vrot.lane.b32.xlu0 %v416, 127
      %v465 = vpop.permute.xlu0 %464
      %466 = vrot.lane.b32.xlu0 %v417, 127
      %v467 = vpop.permute.xlu0 %466
      %vm468 = vcmp.lt.s32.totalorder %v423, 127
      %v469 = vsel %vm468, %v465, %v467
      %v470 = vsel %vm468, %v467, %v465
      %v471 = vperm.slane %v380, 5
      %v472 = vperm.slane %v381, 5
      %v473 = vmul.f32 %v469, %v471
      %v474 = vmul.f32 %v470, %v472
      %475 = vrot.lane.b32.xlu0 %v416, 113
      %v476 = vpop.permute.xlu0 %475
      %477 = vrot.lane.b32.xlu0 %v417, 113
      %v478 = vpop.permute.xlu0 %477
      %vm479 = vcmp.lt.s32.totalorder %v423, 113
      %v480 = vsel %vm479, %v476, %v478
      %v481 = vsel %vm479, %v478, %v476
      %v482 = vperm.slane %v380, 6
      %v483 = vperm.slane %v381, 6
      %v484 = vmul.f32 %v480, %v482
      %v485 = vmul.f32 %v481, %v483
      %486 = vrot.lane.b32.xlu0 %v416, 112
      %v487 = vpop.permute.xlu0 %486
      %488 = vrot.lane.b32.xlu0 %v417, 112
      %v489 = vpop.permute.xlu0 %488
      %vm490 = vcmp.lt.s32.totalorder %v423, 112
      %v491 = vsel %vm490, %v487, %v489
      %v492 = vsel %vm490, %v489, %v487
      %v493 = vperm.slane %v380, 7
      %v494 = vperm.slane %v381, 7
      %v495 = vmul.f32 %v491, %v493
      %v496 = vmul.f32 %v492, %v494
      %497 = vrot.lane.b32.xlu0 %v416, 111
      %v498 = vpop.permute.xlu0 %497
      %499 = vrot.lane.b32.xlu0 %v417, 111
      %v500 = vpop.permute.xlu0 %499
      %vm501 = vcmp.lt.s32.totalorder %v423, 111
      %v502 = vsel %vm501, %v498, %v500
      %v503 = vsel %vm501, %v500, %v498
      %v504 = vperm.slane %v382, 0
      %v505 = vperm.slane %v383, 0
      %v506 = vmul.f32 %v502, %v504
      %v507 = vmul.f32 %v503, %v505
      %v508 = vld [vmem:[%s4] sm:$0xff]
      %v509 = vld [vmem:[%s4 + $0x8] sm:$0xff]
      %v510 = vld [vmem:[%s4 + $0x10] sm:$0xff]
      %v511 = vld [vmem:[%s4 + $0x18] sm:$0xff]
      %v512 = vld [vmem:[%s4 + $0x20] sm:$0xff]
      %v513 = vld [vmem:[%s4 + $0x28] sm:$0xff]
      %v514 = vld [vmem:[%s4 + $0x30] sm:$0xff]
      %v515 = vld [vmem:[%s4 + $0x38] sm:$0xff]
      %v516 = vld [vmem:[%s4 + $0x40] sm:$0xff]
      %v517 = vld [vmem:[%s4 + $0x48] sm:$0xff]
      %v518 = vld [vmem:[%s4 + $0x50] sm:$0xff]
      %v519 = vld [vmem:[%s4 + $0x58] sm:$0xff]
      %v520 = vld [vmem:[%s4 + $0x60] sm:$0xff]
      %v521 = vld [vmem:[%s4 + $0x68] sm:$0xff]
      %v522 = vld [vmem:[%s4 + $0x70] sm:$0xff]
      %v523 = vld [vmem:[%s4 + $0x78] sm:$0xff]
      %v524 = vld [vmem:[%s4 + $0x80] sm:$0xff]
      %v525 = vld [vmem:[%s4 + $0x88] sm:$0xff]
      %v526 = vld [vmem:[%s4 + $0x90] sm:$0xff]
      %v527 = vld [vmem:[%s4 + $0x98] sm:$0xff]
      %v528 = vld [vmem:[%s4 + $0xa0] sm:$0xff]
      %v529 = vld [vmem:[%s4 + $0xa8] sm:$0xff]
      %v530 = vld [vmem:[%s4 + $0xb0] sm:$0xff]
      %v531 = vld [vmem:[%s4 + $0xb8] sm:$0xff]
      %v532 = vld [vmem:[%s4 + $0xc0] sm:$0xff]
      %v533 = vld [vmem:[%s4 + $0xc8] sm:$0xff]
      %v534 = vld [vmem:[%s4 + $0xd0] sm:$0xff]
      %v535 = vld [vmem:[%s4 + $0xd8] sm:$0xff]
      %v536 = vld [vmem:[%s4 + $0xe0] sm:$0xff]
      %v537 = vld [vmem:[%s4 + $0xe8] sm:$0xff]
      %v538 = vld [vmem:[%s4 + $0xf0] sm:$0xff]
      %v539 = vld [vmem:[%s4 + $0xf8] sm:$0xff]
      %541 = vset.pattern.permute.xlu0 0
      %542 = vperm.xlu0 %541, %v508
      %v543 = vpop.permute.xlu0 %542
      %546 = vset.pattern.permute.xlu0 0
      %547 = vperm.xlu0 %546, %v509
      %v548 = vpop.permute.xlu0 %547
      %551 = vset.pattern.permute.xlu0 0
      %552 = vperm.xlu0 %551, %v510
      %v553 = vpop.permute.xlu0 %552
      %556 = vset.pattern.permute.xlu0 0
      %557 = vperm.xlu0 %556, %v511
      %v558 = vpop.permute.xlu0 %557
      %561 = vset.pattern.permute.xlu0 0
      %562 = vperm.xlu0 %561, %v512
      %v563 = vpop.permute.xlu0 %562
      %566 = vset.pattern.permute.xlu0 0
      %567 = vperm.xlu0 %566, %v513
      %v568 = vpop.permute.xlu0 %567
      %571 = vset.pattern.permute.xlu0 0
      %572 = vperm.xlu0 %571, %v514
      %v573 = vpop.permute.xlu0 %572
      %576 = vset.pattern.permute.xlu0 0
      %577 = vperm.xlu0 %576, %v515
      %v578 = vpop.permute.xlu0 %577
      %581 = vset.pattern.permute.xlu0 0
      %582 = vperm.xlu0 %581, %v516
      %v583 = vpop.permute.xlu0 %582
      %586 = vset.pattern.permute.xlu0 0
      %587 = vperm.xlu0 %586, %v517
      %v588 = vpop.permute.xlu0 %587
      %591 = vset.pattern.permute.xlu0 0
      %592 = vperm.xlu0 %591, %v518
      %v593 = vpop.permute.xlu0 %592
      %596 = vset.pattern.permute.xlu0 0
      %597 = vperm.xlu0 %596, %v519
      %v598 = vpop.permute.xlu0 %597
      %601 = vset.pattern.permute.xlu0 0
      %602 = vperm.xlu0 %601, %v520
      %v603 = vpop.permute.xlu0 %602
      %606 = vset.pattern.permute.xlu0 0
      %607 = vperm.xlu0 %606, %v521
      %v608 = vpop.permute.xlu0 %607
      %611 = vset.pattern.permute.xlu0 0
      %612 = vperm.xlu0 %611, %v522
      %v613 = vpop.permute.xlu0 %612
      %616 = vset.pattern.permute.xlu0 0
      %617 = vperm.xlu0 %616, %v523
      %v618 = vpop.permute.xlu0 %617
      %621 = vset.pattern.permute.xlu0 0
      %622 = vperm.xlu0 %621, %v524
      %v623 = vpop.permute.xlu0 %622
      %626 = vset.pattern.permute.xlu0 0
      %627 = vperm.xlu0 %626, %v525
      %v628 = vpop.permute.xlu0 %627
      %631 = vset.pattern.permute.xlu0 0
      %632 = vperm.xlu0 %631, %v526
      %v633 = vpop.permute.xlu0 %632
      %636 = vset.pattern.permute.xlu0 0
      %637 = vperm.xlu0 %636, %v527
      %v638 = vpop.permute.xlu0 %637
      %641 = vset.pattern.permute.xlu0 0
      %642 = vperm.xlu0 %641, %v528
      %v643 = vpop.permute.xlu0 %642
      %646 = vset.pattern.permute.xlu0 0
      %647 = vperm.xlu0 %646, %v529
      %v648 = vpop.permute.xlu0 %647
      %651 = vset.pattern.permute.xlu0 0
      %652 = vperm.xlu0 %651, %v530
      %v653 = vpop.permute.xlu0 %652
      %656 = vset.pattern.permute.xlu0 0
      %657 = vperm.xlu0 %656, %v531
      %v658 = vpop.permute.xlu0 %657
      %661 = vset.pattern.permute.xlu0 0
      %662 = vperm.xlu0 %661, %v532
      %v663 = vpop.permute.xlu0 %662
      %666 = vset.pattern.permute.xlu0 0
      %667 = vperm.xlu0 %666, %v533
      %v668 = vpop.permute.xlu0 %667
      %671 = vset.pattern.permute.xlu0 0
      %672 = vperm.xlu0 %671, %v534
      %v673 = vpop.permute.xlu0 %672
      %676 = vset.pattern.permute.xlu0 0
      %677 = vperm.xlu0 %676, %v535
      %v678 = vpop.permute.xlu0 %677
      %681 = vset.pattern.permute.xlu0 0
      %682 = vperm.xlu0 %681, %v536
      %v683 = vpop.permute.xlu0 %682
      %686 = vset.pattern.permute.xlu0 0
      %687 = vperm.xlu0 %686, %v537
      %v688 = vpop.permute.xlu0 %687
      %691 = vset.pattern.permute.xlu0 0
      %692 = vperm.xlu0 %691, %v538
      %v693 = vpop.permute.xlu0 %692
      %696 = vset.pattern.permute.xlu0 0
      %697 = vperm.xlu0 %696, %v539
      %v698 = vpop.permute.xlu0 %697
      %vm700 = vcmask 588800
      %v702 = vsel %vm700, %v384, 0
      %v705 = vsel %vm700, %v385, 0
      %v708 = vsel %vm700, %v386, 0
      %v711 = vsel %vm700, %v387, 0
      %v714 = vsel %vm700, %v388, 0
      %v717 = vsel %vm700, %v389, 0
      %v720 = vsel %vm700, %v390, 0
      %v723 = vsel %vm700, %v391, 0
      %v726 = vsel %vm700, %v392, 0
      %v729 = vsel %vm700, %v393, 0
      %v732 = vsel %vm700, %v394, 0
      %v735 = vsel %vm700, %v395, 0
      %v738 = vsel %vm700, %v396, 0
      %v741 = vsel %vm700, %v397, 0
      %v744 = vsel %vm700, %v398, 0
      %v747 = vsel %vm700, %v399, 0
      %v750 = vsel %vm700, %v400, 0
      %v753 = vsel %vm700, %v401, 0
      %v756 = vsel %vm700, %v402, 0
      %v759 = vsel %vm700, %v403, 0
      %v762 = vsel %vm700, %v404, 0
      %v765 = vsel %vm700, %v405, 0
      %v768 = vsel %vm700, %v406, 0
      %v771 = vsel %vm700, %v407, 0
      %v774 = vsel %vm700, %v408, 0
      %v777 = vsel %vm700, %v409, 0
      %v780 = vsel %vm700, %v410, 0
      %v783 = vsel %vm700, %v411, 0
      %v786 = vsel %vm700, %v412, 0
      %v789 = vsel %vm700, %v413, 0
      %v792 = vsel %vm700, %v414, 0
      %v795 = vsel %vm700, %v415, 0
      %797 = vmatpush.msra.mxu0 0.0
      %798 = vmatpush.msra.mxu0 0.0
      %799 = vmatpush.msra.mxu0 0.0
      %800 = vmatpush.msra.mxu0 0.0
      %801 = vmatpush.msra.mxu0 0.0
      %802 = vmatpush.msra.mxu0 0.0
      %803 = vmatpush.msra.mxu0 0.0
      %804 = vmatpush.msra.mxu0 %v506
      %805 = vmatpush.msra.mxu0 %v495
      %806 = vmatpush.msra.mxu0 %v484
      %807 = vmatpush.msra.mxu0 %v473
      %808 = vmatpush.msra.mxu0 %v416
      %809 = vmatpush.msra.mxu0 %v462
      %810 = vmatpush.msra.mxu0 %v451
      %811 = vmatpush.msra.mxu0 %v440
      %812 = vmatpush.msra.mxu0 %v429
      %813 = vmatmul.f32.gmra.mxu0 %v702
      %v814 = vpop.f32.mrf.mxu0
      %v815 = vadd.f32 %v543, %v814
      %816 = vmatmul.f32.gmra.mxu0 %v705
      %v817 = vpop.f32.mrf.mxu0
      %v818 = vadd.f32 %v548, %v817
      %819 = vmatmul.f32.gmra.mxu0 %v708
      %v820 = vpop.f32.mrf.mxu0
      %v821 = vadd.f32 %v553, %v820
      %822 = vmatmul.f32.gmra.mxu0 %v711
      %v823 = vpop.f32.mrf.mxu0
      %v824 = vadd.f32 %v558, %v823
      %825 = vmatmul.f32.gmra.mxu0 %v714
      %v826 = vpop.f32.mrf.mxu0
      %v827 = vadd.f32 %v563, %v826
      %828 = vmatmul.f32.gmra.mxu0 %v717
      %v829 = vpop.f32.mrf.mxu0
      %v830 = vadd.f32 %v568, %v829
      %831 = vmatmul.f32.gmra.mxu0 %v720
      %v832 = vpop.f32.mrf.mxu0
      %v833 = vadd.f32 %v573, %v832
      %834 = vmatmul.f32.gmra.mxu0 %v723
      %v835 = vpop.f32.mrf.mxu0
      %v836 = vadd.f32 %v578, %v835
      %837 = vmatmul.f32.gmra.mxu0 %v726
      %v838 = vpop.f32.mrf.mxu0
      %v839 = vadd.f32 %v583, %v838
      %840 = vmatmul.f32.gmra.mxu0 %v729
      %v841 = vpop.f32.mrf.mxu0
      %v842 = vadd.f32 %v588, %v841
      %843 = vmatmul.f32.gmra.mxu0 %v732
      %v844 = vpop.f32.mrf.mxu0
      %v845 = vadd.f32 %v593, %v844
      %846 = vmatmul.f32.gmra.mxu0 %v735
      %v847 = vpop.f32.mrf.mxu0
      %v848 = vadd.f32 %v598, %v847
      %849 = vmatmul.f32.gmra.mxu0 %v738
      %v850 = vpop.f32.mrf.mxu0
      %v851 = vadd.f32 %v603, %v850
      %852 = vmatmul.f32.gmra.mxu0 %v741
      %v853 = vpop.f32.mrf.mxu0
      %v854 = vadd.f32 %v608, %v853
      %855 = vmatmul.f32.gmra.mxu0 %v744
      %v856 = vpop.f32.mrf.mxu0
      %v857 = vadd.f32 %v613, %v856
      %858 = vmatmul.f32.gmra.mxu0 %v747
      %v859 = vpop.f32.mrf.mxu0
      %v860 = vadd.f32 %v618, %v859
      %861 = vmatmul.f32.gmra.mxu0 %v750
      %v862 = vpop.f32.mrf.mxu0
      %v863 = vadd.f32 %v623, %v862
      %864 = vmatmul.f32.gmra.mxu0 %v753
      %v865 = vpop.f32.mrf.mxu0
      %v866 = vadd.f32 %v628, %v865
      %867 = vmatmul.f32.gmra.mxu0 %v756
      %v868 = vpop.f32.mrf.mxu0
      %v869 = vadd.f32 %v633, %v868
      %870 = vmatmul.f32.gmra.mxu0 %v759
      %v871 = vpop.f32.mrf.mxu0
      %v872 = vadd.f32 %v638, %v871
      %873 = vmatmul.f32.gmra.mxu0 %v762
      %v874 = vpop.f32.mrf.mxu0
      %v875 = vadd.f32 %v643, %v874
      %876 = vmatmul.f32.gmra.mxu0 %v765
      %v877 = vpop.f32.mrf.mxu0
      %v878 = vadd.f32 %v648, %v877
      %879 = vmatmul.f32.gmra.mxu0 %v768
      %v880 = vpop.f32.mrf.mxu0
      %v881 = vadd.f32 %v653, %v880
      %882 = vmatmul.f32.gmra.mxu0 %v771
      %v883 = vpop.f32.mrf.mxu0
      %v884 = vadd.f32 %v658, %v883
      %885 = vmatmul.f32.gmra.mxu0 %v774
      %v886 = vpop.f32.mrf.mxu0
      %v887 = vadd.f32 %v663, %v886
      %888 = vmatmul.f32.gmra.mxu0 %v777
      %v889 = vpop.f32.mrf.mxu0
      %v890 = vadd.f32 %v668, %v889
      %891 = vmatmul.f32.gmra.mxu0 %v780
      %v892 = vpop.f32.mrf.mxu0
      %v893 = vadd.f32 %v673, %v892
      %894 = vmatmul.f32.gmra.mxu0 %v783
      %v895 = vpop.f32.mrf.mxu0
      %v896 = vadd.f32 %v678, %v895
      %897 = vmatmul.f32.gmra.mxu0 %v786
      %v898 = vpop.f32.mrf.mxu0
      %v899 = vadd.f32 %v683, %v898
      %900 = vmatmul.f32.gmra.mxu0 %v789
      %v901 = vpop.f32.mrf.mxu0
      %v902 = vadd.f32 %v688, %v901
      %903 = vmatmul.f32.gmra.mxu0 %v792
      %v904 = vpop.f32.mrf.mxu0
      %v905 = vadd.f32 %v693, %v904
      %906 = vmatmul.f32.gmra.mxu0 %v795
      %v907 = vpop.f32.mrf.mxu0
      %v908 = vadd.f32 %v698, %v907
      %909 = vdwg.mxu0
      %910 = vmatpush.msra.mxu0 0.0
      %911 = vmatpush.msra.mxu0 0.0
      %912 = vmatpush.msra.mxu0 0.0
      %913 = vmatpush.msra.mxu0 0.0
      %914 = vmatpush.msra.mxu0 0.0
      %915 = vmatpush.msra.mxu0 0.0
      %916 = vmatpush.msra.mxu0 0.0
      %917 = vmatpush.msra.mxu0 %v507
      %918 = vmatpush.msra.mxu0 %v496
      %919 = vmatpush.msra.mxu0 %v485
      %920 = vmatpush.msra.mxu0 %v474
      %921 = vmatpush.msra.mxu0 %v417
      %922 = vmatpush.msra.mxu0 %v463
      %923 = vmatpush.msra.mxu0 %v452
      %924 = vmatpush.msra.mxu0 %v441
      %925 = vmatpush.msra.mxu0 %v430
      %926 = vmatmul.f32.gmra.mxu0 %v702
      %v927 = vpop.f32.mrf.mxu0
      %v928 = vadd.f32 %v543, %v927
      %929 = vmatmul.f32.gmra.mxu0 %v705
      %v930 = vpop.f32.mrf.mxu0
      %v931 = vadd.f32 %v548, %v930
      %932 = vmatmul.f32.gmra.mxu0 %v708
      %v933 = vpop.f32.mrf.mxu0
      %v934 = vadd.f32 %v553, %v933
      %935 = vmatmul.f32.gmra.mxu0 %v711
      %v936 = vpop.f32.mrf.mxu0
      %v937 = vadd.f32 %v558, %v936
      %938 = vmatmul.f32.gmra.mxu0 %v714
      %v939 = vpop.f32.mrf.mxu0
      %v940 = vadd.f32 %v563, %v939
      %941 = vmatmul.f32.gmra.mxu0 %v717
      %v942 = vpop.f32.mrf.mxu0
      %v943 = vadd.f32 %v568, %v942
      %944 = vmatmul.f32.gmra.mxu0 %v720
      %v945 = vpop.f32.mrf.mxu0
      %v946 = vadd.f32 %v573, %v945
      %947 = vmatmul.f32.gmra.mxu0 %v723
      %v948 = vpop.f32.mrf.mxu0
      %v949 = vadd.f32 %v578, %v948
      %950 = vmatmul.f32.gmra.mxu0 %v726
      %v951 = vpop.f32.mrf.mxu0
      %v952 = vadd.f32 %v583, %v951
      %953 = vmatmul.f32.gmra.mxu0 %v729
      %v954 = vpop.f32.mrf.mxu0
      %v955 = vadd.f32 %v588, %v954
      %956 = vmatmul.f32.gmra.mxu0 %v732
      %v957 = vpop.f32.mrf.mxu0
      %v958 = vadd.f32 %v593, %v957
      %959 = vmatmul.f32.gmra.mxu0 %v735
      %v960 = vpop.f32.mrf.mxu0
      %v961 = vadd.f32 %v598, %v960
      %962 = vmatmul.f32.gmra.mxu0 %v738
      %v963 = vpop.f32.mrf.mxu0
      %v964 = vadd.f32 %v603, %v963
      %965 = vmatmul.f32.gmra.mxu0 %v741
      %v966 = vpop.f32.mrf.mxu0
      %v967 = vadd.f32 %v608, %v966
      %968 = vmatmul.f32.gmra.mxu0 %v744
      %v969 = vpop.f32.mrf.mxu0
      %v970 = vadd.f32 %v613, %v969
      %971 = vmatmul.f32.gmra.mxu0 %v747
      %v972 = vpop.f32.mrf.mxu0
      %v973 = vadd.f32 %v618, %v972
      %974 = vmatmul.f32.gmra.mxu0 %v750
      %v975 = vpop.f32.mrf.mxu0
      %v976 = vadd.f32 %v623, %v975
      %977 = vmatmul.f32.gmra.mxu0 %v753
      %v978 = vpop.f32.mrf.mxu0
      %v979 = vadd.f32 %v628, %v978
      %980 = vmatmul.f32.gmra.mxu0 %v756
      %v981 = vpop.f32.mrf.mxu0
      %v982 = vadd.f32 %v633, %v981
      %983 = vmatmul.f32.gmra.mxu0 %v759
      %v984 = vpop.f32.mrf.mxu0
      %v985 = vadd.f32 %v638, %v984
      %986 = vmatmul.f32.gmra.mxu0 %v762
      %v987 = vpop.f32.mrf.mxu0
      %v988 = vadd.f32 %v643, %v987
      %989 = vmatmul.f32.gmra.mxu0 %v765
      %v990 = vpop.f32.mrf.mxu0
      %v991 = vadd.f32 %v648, %v990
      %992 = vmatmul.f32.gmra.mxu0 %v768
      %v993 = vpop.f32.mrf.mxu0
      %v994 = vadd.f32 %v653, %v993
      %995 = vmatmul.f32.gmra.mxu0 %v771
      %v996 = vpop.f32.mrf.mxu0
      %v997 = vadd.f32 %v658, %v996
      %998 = vmatmul.f32.gmra.mxu0 %v774
      %v999 = vpop.f32.mrf.mxu0
      %v1000 = vadd.f32 %v663, %v999
      %1001 = vmatmul.f32.gmra.mxu0 %v777
      %v1002 = vpop.f32.mrf.mxu0
      %v1003 = vadd.f32 %v668, %v1002
      %1004 = vmatmul.f32.gmra.mxu0 %v780
      %v1005 = vpop.f32.mrf.mxu0
      %v1006 = vadd.f32 %v673, %v1005
      %1007 = vmatmul.f32.gmra.mxu0 %v783
      %v1008 = vpop.f32.mrf.mxu0
      %v1009 = vadd.f32 %v678, %v1008
      %1010 = vmatmul.f32.gmra.mxu0 %v786
      %v1011 = vpop.f32.mrf.mxu0
      %v1012 = vadd.f32 %v683, %v1011
      %1013 = vmatmul.f32.gmra.mxu0 %v789
      %v1014 = vpop.f32.mrf.mxu0
      %v1015 = vadd.f32 %v688, %v1014
      %1016 = vmatmul.f32.gmra.mxu0 %v792
      %v1017 = vpop.f32.mrf.mxu0
      %v1018 = vadd.f32 %v693, %v1017
      %1019 = vmatmul.f32.gmra.mxu0 %v795
      %v1020 = vpop.f32.mrf.mxu0
      %v1021 = vadd.f32 %v698, %v1020
      %1022 = vdwg.mxu0
      %v1023 = vmax.f32 %v815, 0.0
      %v1024 = vmax.f32 %v928, 0.0
      %v1025 = vmax.f32 %v818, 0.0
      %v1026 = vmax.f32 %v931, 0.0
      %v1027 = vmax.f32 %v821, 0.0
      %v1028 = vmax.f32 %v934, 0.0
      %v1029 = vmax.f32 %v824, 0.0
      %v1030 = vmax.f32 %v937, 0.0
      %v1031 = vmax.f32 %v827, 0.0
      %v1032 = vmax.f32 %v940, 0.0
      %v1033 = vmax.f32 %v830, 0.0
      %v1034 = vmax.f32 %v943, 0.0
      %v1035 = vmax.f32 %v833, 0.0
      %v1036 = vmax.f32 %v946, 0.0
      %v1037 = vmax.f32 %v836, 0.0
      %v1038 = vmax.f32 %v949, 0.0
      %v1039 = vmax.f32 %v839, 0.0
      %v1040 = vmax.f32 %v952, 0.0
      %v1041 = vmax.f32 %v842, 0.0
      %v1042 = vmax.f32 %v955, 0.0
      %v1043 = vmax.f32 %v845, 0.0
      %v1044 = vmax.f32 %v958, 0.0
      %v1045 = vmax.f32 %v848, 0.0
      %v1046 = vmax.f32 %v961, 0.0
      %v1047 = vmax.f32 %v851, 0.0
      %v1048 = vmax.f32 %v964, 0.0
      %v1049 = vmax.f32 %v854, 0.0
      %v1050 = vmax.f32 %v967, 0.0
      %v1051 = vmax.f32 %v857, 0.0
      %v1052 = vmax.f32 %v970, 0.0
      %v1053 = vmax.f32 %v860, 0.0
      %v1054 = vmax.f32 %v973, 0.0
      %v1055 = vmax.f32 %v863, 0.0
      %v1056 = vmax.f32 %v976, 0.0
      %v1057 = vmax.f32 %v866, 0.0
      %v1058 = vmax.f32 %v979, 0.0
      %v1059 = vmax.f32 %v869, 0.0
      %v1060 = vmax.f32 %v982, 0.0
      %v1061 = vmax.f32 %v872, 0.0
      %v1062 = vmax.f32 %v985, 0.0
      %v1063 = vmax.f32 %v875, 0.0
      %v1064 = vmax.f32 %v988, 0.0
      %v1065 = vmax.f32 %v878, 0.0
      %v1066 = vmax.f32 %v991, 0.0
      %v1067 = vmax.f32 %v881, 0.0
      %v1068 = vmax.f32 %v994, 0.0
      %v1069 = vmax.f32 %v884, 0.0
      %v1070 = vmax.f32 %v997, 0.0
      %v1071 = vmax.f32 %v887, 0.0
      %v1072 = vmax.f32 %v1000, 0.0
      %v1073 = vmax.f32 %v890, 0.0
      %v1074 = vmax.f32 %v1003, 0.0
      %v1075 = vmax.f32 %v893, 0.0
      %v1076 = vmax.f32 %v1006, 0.0
      %v1077 = vmax.f32 %v896, 0.0
      %v1078 = vmax.f32 %v1009, 0.0
      %v1079 = vmax.f32 %v899, 0.0
      %v1080 = vmax.f32 %v1012, 0.0
      %v1081 = vmax.f32 %v902, 0.0
      %v1082 = vmax.f32 %v1015, 0.0
      %v1083 = vmax.f32 %v905, 0.0
      %v1084 = vmax.f32 %v1018, 0.0
      %v1085 = vmax.f32 %v908, 0.0
      %v1086 = vmax.f32 %v1021, 0.0
      %v1087 = vld [vmem:[%s374] sm:$0xff]
      %v1088 = vld [vmem:[%s374 + $0x8] sm:$0xff]
      %v1089 = vmul.f32 %v1087, 2.0
      %v1090 = vmul.f32 %v1088, 2.0
      %v1091 = vsub.f32 %v1089, 1.0
      %v1092 = vsub.f32 %v1090, 1.0
      %v1093 = vld [vmem:[%s5] sm:$0xff]
      %v1094 = vld [vmem:[%s5 + $0x8] sm:$0xff]
      %v1095 = vld [vmem:[%s5 + $0x10] sm:$0xff]
      %v1096 = vld [vmem:[%s5 + $0x18] sm:$0xff]
      %v1097 = vld [vmem:[%s5 + $0x20] sm:$0xff]
      %v1098 = vld [vmem:[%s5 + $0x28] sm:$0xff]
      %v1099 = vld [vmem:[%s5 + $0x30] sm:$0xff]
      %v1100 = vld [vmem:[%s5 + $0x38] sm:$0xff]
      %v1101 = vld [vmem:[%s5 + $0x40] sm:$0xff]
      %v1102 = vld [vmem:[%s5 + $0x48] sm:$0xff]
      %v1103 = vld [vmem:[%s5 + $0x50] sm:$0xff]
      %v1104 = vld [vmem:[%s5 + $0x58] sm:$0xff]
      %v1105 = vld [vmem:[%s5 + $0x60] sm:$0xff]
      %v1106 = vld [vmem:[%s5 + $0x68] sm:$0xff]
      %v1107 = vld [vmem:[%s5 + $0x70] sm:$0xff]
      %v1108 = vld [vmem:[%s5 + $0x78] sm:$0xff]
      %v1109 = vld [vmem:[%s5 + $0x80] sm:$0xff]
      %v1110 = vld [vmem:[%s5 + $0x88] sm:$0xff]
      %v1111 = vld [vmem:[%s5 + $0x90] sm:$0xff]
      %v1112 = vld [vmem:[%s5 + $0x98] sm:$0xff]
      %v1113 = vld [vmem:[%s5 + $0xa0] sm:$0xff]
      %v1114 = vld [vmem:[%s5 + $0xa8] sm:$0xff]
      %v1115 = vld [vmem:[%s5 + $0xb0] sm:$0xff]
      %v1116 = vld [vmem:[%s5 + $0xb8] sm:$0xff]
      %v1117 = vld [vmem:[%s5 + $0xc0] sm:$0xff]
      %v1118 = vld [vmem:[%s5 + $0xc8] sm:$0xff]
      %v1119 = vld [vmem:[%s5 + $0xd0] sm:$0xff]
      %v1120 = vld [vmem:[%s5 + $0xd8] sm:$0xff]
      %v1121 = vld [vmem:[%s5 + $0xe0] sm:$0xff]
      %v1122 = vld [vmem:[%s5 + $0xe8] sm:$0xff]
      %v1123 = vld [vmem:[%s5 + $0xf0] sm:$0xff]
      %v1124 = vld [vmem:[%s5 + $0xf8] sm:$0xff]
      %1125 = vrot.lane.b32.xlu0 %v1091, 17
      %v1126 = vpop.permute.xlu0 %1125
      %1127 = vrot.lane.b32.xlu0 %v1092, 17
      %v1128 = vpop.permute.xlu0 %1127
      %v1129 = vsel %vm424, %v1126, %v1128
      %v1130 = vsel %vm424, %v1128, %v1126
      %v1131 = vmul.f32 %v1130, %v427
      %v1132 = vmul.f32 %v1129, %v428
      %1133 = vrot.lane.b32.xlu0 %v1091, 16
      %v1134 = vpop.permute.xlu0 %1133
      %1135 = vrot.lane.b32.xlu0 %v1092, 16
      %v1136 = vpop.permute.xlu0 %1135
      %v1137 = vsel %vm435, %v1134, %v1136
      %v1138 = vsel %vm435, %v1136, %v1134
      %v1139 = vmul.f32 %v1138, %v438
      %v1140 = vmul.f32 %v1137, %v439
      %1141 = vrot.lane.b32.xlu0 %v1091, 15
      %v1142 = vpop.permute.xlu0 %1141
      %1143 = vrot.lane.b32.xlu0 %v1092, 15
      %v1144 = vpop.permute.xlu0 %1143
      %v1145 = vsel %vm446, %v1142, %v1144
      %v1146 = vsel %vm446, %v1144, %v1142
      %v1147 = vmul.f32 %v1146, %v449
      %v1148 = vmul.f32 %v1145, %v450
      %1149 = vrot.lane.b32.xlu0 %v1091, 1
      %v1150 = vpop.permute.xlu0 %1149
      %1151 = vrot.lane.b32.xlu0 %v1092, 1
      %v1152 = vpop.permute.xlu0 %1151
      %v1153 = vsel %vm457, %v1150, %v1152
      %v1154 = vsel %vm457, %v1152, %v1150
      %v1155 = vmul.f32 %v1154, %v460
      %v1156 = vmul.f32 %v1153, %v461
      %1157 = vrot.lane.b32.xlu0 %v1091, 127
      %v1158 = vpop.permute.xlu0 %1157
      %1159 = vrot.lane.b32.xlu0 %v1092, 127
      %v1160 = vpop.permute.xlu0 %1159
      %v1161 = vsel %vm468, %v1158, %v1160
      %v1162 = vsel %vm468, %v1160, %v1158
      %v1163 = vmul.f32 %v1161, %v471
      %v1164 = vmul.f32 %v1162, %v472
      %1165 = vrot.lane.b32.xlu0 %v1091, 113
      %v1166 = vpop.permute.xlu0 %1165
      %1167 = vrot.lane.b32.xlu0 %v1092, 113
      %v1168 = vpop.permute.xlu0 %1167
      %v1169 = vsel %vm479, %v1166, %v1168
      %v1170 = vsel %vm479, %v1168, %v1166
      %v1171 = vmul.f32 %v1169, %v482
      %v1172 = vmul.f32 %v1170, %v483
      %1173 = vrot.lane.b32.xlu0 %v1091, 112
      %v1174 = vpop.permute.xlu0 %1173
      %1175 = vrot.lane.b32.xlu0 %v1092, 112
      %v1176 = vpop.permute.xlu0 %1175
      %v1177 = vsel %vm490, %v1174, %v1176
      %v1178 = vsel %vm490, %v1176, %v1174
      %v1179 = vmul.f32 %v1177, %v493
      %v1180 = vmul.f32 %v1178, %v494
      %1181 = vrot.lane.b32.xlu0 %v1091, 111
      %v1182 = vpop.permute.xlu0 %1181
      %1183 = vrot.lane.b32.xlu0 %v1092, 111
      %v1184 = vpop.permute.xlu0 %1183
      %v1185 = vsel %vm501, %v1182, %v1184
      %v1186 = vsel %vm501, %v1184, %v1182
      %v1187 = vmul.f32 %v1185, %v504
      %v1188 = vmul.f32 %v1186, %v505
      %v1189 = vld [vmem:[%s6] sm:$0xff]
      %v1190 = vld [vmem:[%s6 + $0x8] sm:$0xff]
      %v1191 = vld [vmem:[%s6 + $0x10] sm:$0xff]
      %v1192 = vld [vmem:[%s6 + $0x18] sm:$0xff]
      %v1193 = vld [vmem:[%s6 + $0x20] sm:$0xff]
      %v1194 = vld [vmem:[%s6 + $0x28] sm:$0xff]
      %v1195 = vld [vmem:[%s6 + $0x30] sm:$0xff]
      %v1196 = vld [vmem:[%s6 + $0x38] sm:$0xff]
      %v1197 = vld [vmem:[%s6 + $0x40] sm:$0xff]
      %v1198 = vld [vmem:[%s6 + $0x48] sm:$0xff]
      %v1199 = vld [vmem:[%s6 + $0x50] sm:$0xff]
      %v1200 = vld [vmem:[%s6 + $0x58] sm:$0xff]
      %v1201 = vld [vmem:[%s6 + $0x60] sm:$0xff]
      %v1202 = vld [vmem:[%s6 + $0x68] sm:$0xff]
      %v1203 = vld [vmem:[%s6 + $0x70] sm:$0xff]
      %v1204 = vld [vmem:[%s6 + $0x78] sm:$0xff]
      %v1205 = vld [vmem:[%s6 + $0x80] sm:$0xff]
      %v1206 = vld [vmem:[%s6 + $0x88] sm:$0xff]
      %v1207 = vld [vmem:[%s6 + $0x90] sm:$0xff]
      %v1208 = vld [vmem:[%s6 + $0x98] sm:$0xff]
      %v1209 = vld [vmem:[%s6 + $0xa0] sm:$0xff]
      %v1210 = vld [vmem:[%s6 + $0xa8] sm:$0xff]
      %v1211 = vld [vmem:[%s6 + $0xb0] sm:$0xff]
      %v1212 = vld [vmem:[%s6 + $0xb8] sm:$0xff]
      %v1213 = vld [vmem:[%s6 + $0xc0] sm:$0xff]
      %v1214 = vld [vmem:[%s6 + $0xc8] sm:$0xff]
      %v1215 = vld [vmem:[%s6 + $0xd0] sm:$0xff]
      %v1216 = vld [vmem:[%s6 + $0xd8] sm:$0xff]
      %v1217 = vld [vmem:[%s6 + $0xe0] sm:$0xff]
      %v1218 = vld [vmem:[%s6 + $0xe8] sm:$0xff]
      %v1219 = vld [vmem:[%s6 + $0xf0] sm:$0xff]
      %v1220 = vld [vmem:[%s6 + $0xf8] sm:$0xff]
      %1222 = vset.pattern.permute.xlu0 0
      %1223 = vperm.xlu0 %1222, %v1189
      %v1224 = vpop.permute.xlu0 %1223
      %1227 = vset.pattern.permute.xlu0 0
      %1228 = vperm.xlu0 %1227, %v1190
      %v1229 = vpop.permute.xlu0 %1228
      %1232 = vset.pattern.permute.xlu0 0
      %1233 = vperm.xlu0 %1232, %v1191
      %v1234 = vpop.permute.xlu0 %1233
      %1237 = vset.pattern.permute.xlu0 0
      %1238 = vperm.xlu0 %1237, %v1192
      %v1239 = vpop.permute.xlu0 %1238
      %1242 = vset.pattern.permute.xlu0 0
      %1243 = vperm.xlu0 %1242, %v1193
      %v1244 = vpop.permute.xlu0 %1243
      %1247 = vset.pattern.permute.xlu0 0
      %1248 = vperm.xlu0 %1247, %v1194
      %v1249 = vpop.permute.xlu0 %1248
      %1252 = vset.pattern.permute.xlu0 0
      %1253 = vperm.xlu0 %1252, %v1195
      %v1254 = vpop.permute.xlu0 %1253
      %1257 = vset.pattern.permute.xlu0 0
      %1258 = vperm.xlu0 %1257, %v1196
      %v1259 = vpop.permute.xlu0 %1258
      %1262 = vset.pattern.permute.xlu0 0
      %1263 = vperm.xlu0 %1262, %v1197
      %v1264 = vpop.permute.xlu0 %1263
      %1267 = vset.pattern.permute.xlu0 0
      %1268 = vperm.xlu0 %1267, %v1198
      %v1269 = vpop.permute.xlu0 %1268
      %1272 = vset.pattern.permute.xlu0 0
      %1273 = vperm.xlu0 %1272, %v1199
      %v1274 = vpop.permute.xlu0 %1273
      %1277 = vset.pattern.permute.xlu0 0
      %1278 = vperm.xlu0 %1277, %v1200
      %v1279 = vpop.permute.xlu0 %1278
      %1282 = vset.pattern.permute.xlu0 0
      %1283 = vperm.xlu0 %1282, %v1201
      %v1284 = vpop.permute.xlu0 %1283
      %1287 = vset.pattern.permute.xlu0 0
      %1288 = vperm.xlu0 %1287, %v1202
      %v1289 = vpop.permute.xlu0 %1288
      %1292 = vset.pattern.permute.xlu0 0
      %1293 = vperm.xlu0 %1292, %v1203
      %v1294 = vpop.permute.xlu0 %1293
      %1297 = vset.pattern.permute.xlu0 0
      %1298 = vperm.xlu0 %1297, %v1204
      %v1299 = vpop.permute.xlu0 %1298
      %1302 = vset.pattern.permute.xlu0 0
      %1303 = vperm.xlu0 %1302, %v1205
      %v1304 = vpop.permute.xlu0 %1303
      %1307 = vset.pattern.permute.xlu0 0
      %1308 = vperm.xlu0 %1307, %v1206
      %v1309 = vpop.permute.xlu0 %1308
      %1312 = vset.pattern.permute.xlu0 0
      %1313 = vperm.xlu0 %1312, %v1207
      %v1314 = vpop.permute.xlu0 %1313
      %1317 = vset.pattern.permute.xlu0 0
      %1318 = vperm.xlu0 %1317, %v1208
      %v1319 = vpop.permute.xlu0 %1318
      %1322 = vset.pattern.permute.xlu0 0
      %1323 = vperm.xlu0 %1322, %v1209
      %v1324 = vpop.permute.xlu0 %1323
      %1327 = vset.pattern.permute.xlu0 0
      %1328 = vperm.xlu0 %1327, %v1210
      %v1329 = vpop.permute.xlu0 %1328
      %1332 = vset.pattern.permute.xlu0 0
      %1333 = vperm.xlu0 %1332, %v1211
      %v1334 = vpop.permute.xlu0 %1333
      %1337 = vset.pattern.permute.xlu0 0
      %1338 = vperm.xlu0 %1337, %v1212
      %v1339 = vpop.permute.xlu0 %1338
      %1342 = vset.pattern.permute.xlu0 0
      %1343 = vperm.xlu0 %1342, %v1213
      %v1344 = vpop.permute.xlu0 %1343
      %1347 = vset.pattern.permute.xlu0 0
      %1348 = vperm.xlu0 %1347, %v1214
      %v1349 = vpop.permute.xlu0 %1348
      %1352 = vset.pattern.permute.xlu0 0
      %1353 = vperm.xlu0 %1352, %v1215
      %v1354 = vpop.permute.xlu0 %1353
      %1357 = vset.pattern.permute.xlu0 0
      %1358 = vperm.xlu0 %1357, %v1216
      %v1359 = vpop.permute.xlu0 %1358
      %1362 = vset.pattern.permute.xlu0 0
      %1363 = vperm.xlu0 %1362, %v1217
      %v1364 = vpop.permute.xlu0 %1363
      %1367 = vset.pattern.permute.xlu0 0
      %1368 = vperm.xlu0 %1367, %v1218
      %v1369 = vpop.permute.xlu0 %1368
      %1372 = vset.pattern.permute.xlu0 0
      %1373 = vperm.xlu0 %1372, %v1219
      %v1374 = vpop.permute.xlu0 %1373
      %1377 = vset.pattern.permute.xlu0 0
      %1378 = vperm.xlu0 %1377, %v1220
      %v1379 = vpop.permute.xlu0 %1378
      %v1382 = vsel %vm700, %v1093, 0
      %v1385 = vsel %vm700, %v1094, 0
      %v1388 = vsel %vm700, %v1095, 0
      %v1391 = vsel %vm700, %v1096, 0
      %v1394 = vsel %vm700, %v1097, 0
      %v1397 = vsel %vm700, %v1098, 0
      %v1400 = vsel %vm700, %v1099, 0
      %v1403 = vsel %vm700, %v1100, 0
      %v1406 = vsel %vm700, %v1101, 0
      %v1409 = vsel %vm700, %v1102, 0
      %v1412 = vsel %vm700, %v1103, 0
      %v1415 = vsel %vm700, %v1104, 0
      %v1418 = vsel %vm700, %v1105, 0
      %v1421 = vsel %vm700, %v1106, 0
      %v1424 = vsel %vm700, %v1107, 0
      %v1427 = vsel %vm700, %v1108, 0
      %v1430 = vsel %vm700, %v1109, 0
      %v1433 = vsel %vm700, %v1110, 0
      %v1436 = vsel %vm700, %v1111, 0
      %v1439 = vsel %vm700, %v1112, 0
      %v1442 = vsel %vm700, %v1113, 0
      %v1445 = vsel %vm700, %v1114, 0
      %v1448 = vsel %vm700, %v1115, 0
      %v1451 = vsel %vm700, %v1116, 0
      %v1454 = vsel %vm700, %v1117, 0
      %v1457 = vsel %vm700, %v1118, 0
      %v1460 = vsel %vm700, %v1119, 0
      %v1463 = vsel %vm700, %v1120, 0
      %v1466 = vsel %vm700, %v1121, 0
      %v1469 = vsel %vm700, %v1122, 0
      %v1472 = vsel %vm700, %v1123, 0
      %v1475 = vsel %vm700, %v1124, 0
      %1477 = vmatpush.msra.mxu0 0.0
      %1478 = vmatpush.msra.mxu0 0.0
      %1479 = vmatpush.msra.mxu0 0.0
      %1480 = vmatpush.msra.mxu0 0.0
      %1481 = vmatpush.msra.mxu0 0.0
      %1482 = vmatpush.msra.mxu0 0.0
      %1483 = vmatpush.msra.mxu0 0.0
      %1484 = vmatpush.msra.mxu0 %v1187
      %1485 = vmatpush.msra.mxu0 %v1179
      %1486 = vmatpush.msra.mxu0 %v1171
      %1487 = vmatpush.msra.mxu0 %v1163
      %1488 = vmatpush.msra.mxu0 %v1091
      %1489 = vmatpush.msra.mxu0 %v1155
      %1490 = vmatpush.msra.mxu0 %v1147
      %1491 = vmatpush.msra.mxu0 %v1139
      %1492 = vmatpush.msra.mxu0 %v1131
      %1493 = vmatmul.f32.gmra.mxu0 %v1382
      %v1494 = vpop.f32.mrf.mxu0
      %v1495 = vadd.f32 %v1224, %v1494
      %1496 = vmatmul.f32.gmra.mxu0 %v1385
      %v1497 = vpop.f32.mrf.mxu0
      %v1498 = vadd.f32 %v1229, %v1497
      %1499 = vmatmul.f32.gmra.mxu0 %v1388
      %v1500 = vpop.f32.mrf.mxu0
      %v1501 = vadd.f32 %v1234, %v1500
      %1502 = vmatmul.f32.gmra.mxu0 %v1391
      %v1503 = vpop.f32.mrf.mxu0
      %v1504 = vadd.f32 %v1239, %v1503
      %1505 = vmatmul.f32.gmra.mxu0 %v1394
      %v1506 = vpop.f32.mrf.mxu0
      %v1507 = vadd.f32 %v1244, %v1506
      %1508 = vmatmul.f32.gmra.mxu0 %v1397
      %v1509 = vpop.f32.mrf.mxu0
      %v1510 = vadd.f32 %v1249, %v1509
      %1511 = vmatmul.f32.gmra.mxu0 %v1400
      %v1512 = vpop.f32.mrf.mxu0
      %v1513 = vadd.f32 %v1254, %v1512
      %1514 = vmatmul.f32.gmra.mxu0 %v1403
      %v1515 = vpop.f32.mrf.mxu0
      %v1516 = vadd.f32 %v1259, %v1515
      %1517 = vmatmul.f32.gmra.mxu0 %v1406
      %v1518 = vpop.f32.mrf.mxu0
      %v1519 = vadd.f32 %v1264, %v1518
      %1520 = vmatmul.f32.gmra.mxu0 %v1409
      %v1521 = vpop.f32.mrf.mxu0
      %v1522 = vadd.f32 %v1269, %v1521
      %1523 = vmatmul.f32.gmra.mxu0 %v1412
      %v1524 = vpop.f32.mrf.mxu0
      %v1525 = vadd.f32 %v1274, %v1524
      %1526 = vmatmul.f32.gmra.mxu0 %v1415
      %v1527 = vpop.f32.mrf.mxu0
      %v1528 = vadd.f32 %v1279, %v1527
      %1529 = vmatmul.f32.gmra.mxu0 %v1418
      %v1530 = vpop.f32.mrf.mxu0
      %v1531 = vadd.f32 %v1284, %v1530
      %1532 = vmatmul.f32.gmra.mxu0 %v1421
      %v1533 = vpop.f32.mrf.mxu0
      %v1534 = vadd.f32 %v1289, %v1533
      %1535 = vmatmul.f32.gmra.mxu0 %v1424
      %v1536 = vpop.f32.mrf.mxu0
      %v1537 = vadd.f32 %v1294, %v1536
      %1538 = vmatmul.f32.gmra.mxu0 %v1427
      %v1539 = vpop.f32.mrf.mxu0
      %v1540 = vadd.f32 %v1299, %v1539
      %1541 = vmatmul.f32.gmra.mxu0 %v1430
      %v1542 = vpop.f32.mrf.mxu0
      %v1543 = vadd.f32 %v1304, %v1542
      %1544 = vmatmul.f32.gmra.mxu0 %v1433
      %v1545 = vpop.f32.mrf.mxu0
      %v1546 = vadd.f32 %v1309, %v1545
      %1547 = vmatmul.f32.gmra.mxu0 %v1436
      %v1548 = vpop.f32.mrf.mxu0
      %v1549 = vadd.f32 %v1314, %v1548
      %1550 = vmatmul.f32.gmra.mxu0 %v1439
      %v1551 = vpop.f32.mrf.mxu0
      %v1552 = vadd.f32 %v1319, %v1551
      %1553 = vmatmul.f32.gmra.mxu0 %v1442
      %v1554 = vpop.f32.mrf.mxu0
      %v1555 = vadd.f32 %v1324, %v1554
      %1556 = vmatmul.f32.gmra.mxu0 %v1445
      %v1557 = vpop.f32.mrf.mxu0
      %v1558 = vadd.f32 %v1329, %v1557
      %1559 = vmatmul.f32.gmra.mxu0 %v1448
      %v1560 = vpop.f32.mrf.mxu0
      %v1561 = vadd.f32 %v1334, %v1560
      %1562 = vmatmul.f32.gmra.mxu0 %v1451
      %v1563 = vpop.f32.mrf.mxu0
      %v1564 = vadd.f32 %v1339, %v1563
      %1565 = vmatmul.f32.gmra.mxu0 %v1454
      %v1566 = vpop.f32.mrf.mxu0
      %v1567 = vadd.f32 %v1344, %v1566
      %1568 = vmatmul.f32.gmra.mxu0 %v1457
      %v1569 = vpop.f32.mrf.mxu0
      %v1570 = vadd.f32 %v1349, %v1569
      %1571 = vmatmul.f32.gmra.mxu0 %v1460
      %v1572 = vpop.f32.mrf.mxu0
      %v1573 = vadd.f32 %v1354, %v1572
      %1574 = vmatmul.f32.gmra.mxu0 %v1463
      %v1575 = vpop.f32.mrf.mxu0
      %v1576 = vadd.f32 %v1359, %v1575
      %1577 = vmatmul.f32.gmra.mxu0 %v1466
      %v1578 = vpop.f32.mrf.mxu0
      %v1579 = vadd.f32 %v1364, %v1578
      %1580 = vmatmul.f32.gmra.mxu0 %v1469
      %v1581 = vpop.f32.mrf.mxu0
      %v1582 = vadd.f32 %v1369, %v1581
      %1583 = vmatmul.f32.gmra.mxu0 %v1472
      %v1584 = vpop.f32.mrf.mxu0
      %v1585 = vadd.f32 %v1374, %v1584
      %1586 = vmatmul.f32.gmra.mxu0 %v1475
      %v1587 = vpop.f32.mrf.mxu0
      %v1588 = vadd.f32 %v1379, %v1587
      %1589 = vdwg.mxu0
      %1590 = vmatpush.msra.mxu0 0.0
      %1591 = vmatpush.msra.mxu0 0.0
      %1592 = vmatpush.msra.mxu0 0.0
      %1593 = vmatpush.msra.mxu0 0.0
      %1594 = vmatpush.msra.mxu0 0.0
      %1595 = vmatpush.msra.mxu0 0.0
      %1596 = vmatpush.msra.mxu0 0.0
      %1597 = vmatpush.msra.mxu0 %v1188
      %1598 = vmatpush.msra.mxu0 %v1180
      %1599 = vmatpush.msra.mxu0 %v1172
      %1600 = vmatpush.msra.mxu0 %v1164
      %1601 = vmatpush.msra.mxu0 %v1092
      %1602 = vmatpush.msra.mxu0 %v1156
      %1603 = vmatpush.msra.mxu0 %v1148
      %1604 = vmatpush.msra.mxu0 %v1140
      %1605 = vmatpush.msra.mxu0 %v1132
      %1606 = vmatmul.f32.gmra.mxu0 %v1382
      %v1607 = vpop.f32.mrf.mxu0
      %v1608 = vadd.f32 %v1224, %v1607
      %1609 = vmatmul.f32.gmra.mxu0 %v1385
      %v1610 = vpop.f32.mrf.mxu0
      %v1611 = vadd.f32 %v1229, %v1610
      %1612 = vmatmul.f32.gmra.mxu0 %v1388
      %v1613 = vpop.f32.mrf.mxu0
      %v1614 = vadd.f32 %v1234, %v1613
      %1615 = vmatmul.f32.gmra.mxu0 %v1391
      %v1616 = vpop.f32.mrf.mxu0
      %v1617 = vadd.f32 %v1239, %v1616
      %1618 = vmatmul.f32.gmra.mxu0 %v1394
      %v1619 = vpop.f32.mrf.mxu0
      %v1620 = vadd.f32 %v1244, %v1619
      %1621 = vmatmul.f32.gmra.mxu0 %v1397
      %v1622 = vpop.f32.mrf.mxu0
      %v1623 = vadd.f32 %v1249, %v1622
      %1624 = vmatmul.f32.gmra.mxu0 %v1400
      %v1625 = vpop.f32.mrf.mxu0
      %v1626 = vadd.f32 %v1254, %v1625
      %1627 = vmatmul.f32.gmra.mxu0 %v1403
      %v1628 = vpop.f32.mrf.mxu0
      %v1629 = vadd.f32 %v1259, %v1628
      %1630 = vmatmul.f32.gmra.mxu0 %v1406
      %v1631 = vpop.f32.mrf.mxu0
      %v1632 = vadd.f32 %v1264, %v1631
      %1633 = vmatmul.f32.gmra.mxu0 %v1409
      %v1634 = vpop.f32.mrf.mxu0
      %v1635 = vadd.f32 %v1269, %v1634
      %1636 = vmatmul.f32.gmra.mxu0 %v1412
      %v1637 = vpop.f32.mrf.mxu0
      %v1638 = vadd.f32 %v1274, %v1637
      %1639 = vmatmul.f32.gmra.mxu0 %v1415
      %v1640 = vpop.f32.mrf.mxu0
      %v1641 = vadd.f32 %v1279, %v1640
      %1642 = vmatmul.f32.gmra.mxu0 %v1418
      %v1643 = vpop.f32.mrf.mxu0
      %v1644 = vadd.f32 %v1284, %v1643
      %1645 = vmatmul.f32.gmra.mxu0 %v1421
      %v1646 = vpop.f32.mrf.mxu0
      %v1647 = vadd.f32 %v1289, %v1646
      %1648 = vmatmul.f32.gmra.mxu0 %v1424
      %v1649 = vpop.f32.mrf.mxu0
      %v1650 = vadd.f32 %v1294, %v1649
      %1651 = vmatmul.f32.gmra.mxu0 %v1427
      %v1652 = vpop.f32.mrf.mxu0
      %v1653 = vadd.f32 %v1299, %v1652
      %1654 = vmatmul.f32.gmra.mxu0 %v1430
      %v1655 = vpop.f32.mrf.mxu0
      %v1656 = vadd.f32 %v1304, %v1655
      %1657 = vmatmul.f32.gmra.mxu0 %v1433
      %v1658 = vpop.f32.mrf.mxu0
      %v1659 = vadd.f32 %v1309, %v1658
      %1660 = vmatmul.f32.gmra.mxu0 %v1436
      %v1661 = vpop.f32.mrf.mxu0
      %v1662 = vadd.f32 %v1314, %v1661
      %1663 = vmatmul.f32.gmra.mxu0 %v1439
      %v1664 = vpop.f32.mrf.mxu0
      %v1665 = vadd.f32 %v1319, %v1664
      %1666 = vmatmul.f32.gmra.mxu0 %v1442
      %v1667 = vpop.f32.mrf.mxu0
      %v1668 = vadd.f32 %v1324, %v1667
      %1669 = vmatmul.f32.gmra.mxu0 %v1445
      %v1670 = vpop.f32.mrf.mxu0
      %v1671 = vadd.f32 %v1329, %v1670
      %1672 = vmatmul.f32.gmra.mxu0 %v1448
      %v1673 = vpop.f32.mrf.mxu0
      %v1674 = vadd.f32 %v1334, %v1673
      %1675 = vmatmul.f32.gmra.mxu0 %v1451
      %v1676 = vpop.f32.mrf.mxu0
      %v1677 = vadd.f32 %v1339, %v1676
      %1678 = vmatmul.f32.gmra.mxu0 %v1454
      %v1679 = vpop.f32.mrf.mxu0
      %v1680 = vadd.f32 %v1344, %v1679
      %1681 = vmatmul.f32.gmra.mxu0 %v1457
      %v1682 = vpop.f32.mrf.mxu0
      %v1683 = vadd.f32 %v1349, %v1682
      %1684 = vmatmul.f32.gmra.mxu0 %v1460
      %v1685 = vpop.f32.mrf.mxu0
      %v1686 = vadd.f32 %v1354, %v1685
      %1687 = vmatmul.f32.gmra.mxu0 %v1463
      %v1688 = vpop.f32.mrf.mxu0
      %v1689 = vadd.f32 %v1359, %v1688
      %1690 = vmatmul.f32.gmra.mxu0 %v1466
      %v1691 = vpop.f32.mrf.mxu0
      %v1692 = vadd.f32 %v1364, %v1691
      %1693 = vmatmul.f32.gmra.mxu0 %v1469
      %v1694 = vpop.f32.mrf.mxu0
      %v1695 = vadd.f32 %v1369, %v1694
      %1696 = vmatmul.f32.gmra.mxu0 %v1472
      %v1697 = vpop.f32.mrf.mxu0
      %v1698 = vadd.f32 %v1374, %v1697
      %1699 = vmatmul.f32.gmra.mxu0 %v1475
      %v1700 = vpop.f32.mrf.mxu0
      %v1701 = vadd.f32 %v1379, %v1700
      %1702 = vdwg.mxu0
      %v1703 = vmax.f32 %v1495, 0.0
      %v1704 = vmax.f32 %v1608, 0.0
      %v1705 = vmax.f32 %v1498, 0.0
      %v1706 = vmax.f32 %v1611, 0.0
      %v1707 = vmax.f32 %v1501, 0.0
      %v1708 = vmax.f32 %v1614, 0.0
      %v1709 = vmax.f32 %v1504, 0.0
      %v1710 = vmax.f32 %v1617, 0.0
      %v1711 = vmax.f32 %v1507, 0.0
      %v1712 = vmax.f32 %v1620, 0.0
      %v1713 = vmax.f32 %v1510, 0.0
      %v1714 = vmax.f32 %v1623, 0.0
      %v1715 = vmax.f32 %v1513, 0.0
      %v1716 = vmax.f32 %v1626, 0.0
      %v1717 = vmax.f32 %v1516, 0.0
      %v1718 = vmax.f32 %v1629, 0.0
      %v1719 = vmax.f32 %v1519, 0.0
      %v1720 = vmax.f32 %v1632, 0.0
      %v1721 = vmax.f32 %v1522, 0.0
      %v1722 = vmax.f32 %v1635, 0.0
      %v1723 = vmax.f32 %v1525, 0.0
      %v1724 = vmax.f32 %v1638, 0.0
      %v1725 = vmax.f32 %v1528, 0.0
      %v1726 = vmax.f32 %v1641, 0.0
      %v1727 = vmax.f32 %v1531, 0.0
      %v1728 = vmax.f32 %v1644, 0.0
      %v1729 = vmax.f32 %v1534, 0.0
      %v1730 = vmax.f32 %v1647, 0.0
      %v1731 = vmax.f32 %v1537, 0.0
      %v1732 = vmax.f32 %v1650, 0.0
      %v1733 = vmax.f32 %v1540, 0.0
      %v1734 = vmax.f32 %v1653, 0.0
      %v1735 = vmax.f32 %v1543, 0.0
      %v1736 = vmax.f32 %v1656, 0.0
      %v1737 = vmax.f32 %v1546, 0.0
      %v1738 = vmax.f32 %v1659, 0.0
      %v1739 = vmax.f32 %v1549, 0.0
      %v1740 = vmax.f32 %v1662, 0.0
      %v1741 = vmax.f32 %v1552, 0.0
      %v1742 = vmax.f32 %v1665, 0.0
      %v1743 = vmax.f32 %v1555, 0.0
      %v1744 = vmax.f32 %v1668, 0.0
      %v1745 = vmax.f32 %v1558, 0.0
      %v1746 = vmax.f32 %v1671, 0.0
      %v1747 = vmax.f32 %v1561, 0.0
      %v1748 = vmax.f32 %v1674, 0.0
      %v1749 = vmax.f32 %v1564, 0.0
      %v1750 = vmax.f32 %v1677, 0.0
      %v1751 = vmax.f32 %v1567, 0.0
      %v1752 = vmax.f32 %v1680, 0.0
      %v1753 = vmax.f32 %v1570, 0.0
      %v1754 = vmax.f32 %v1683, 0.0
      %v1755 = vmax.f32 %v1573, 0.0
      %v1756 = vmax.f32 %v1686, 0.0
      %v1757 = vmax.f32 %v1576, 0.0
      %v1758 = vmax.f32 %v1689, 0.0
      %v1759 = vmax.f32 %v1579, 0.0
      %v1760 = vmax.f32 %v1692, 0.0
      %v1761 = vmax.f32 %v1582, 0.0
      %v1762 = vmax.f32 %v1695, 0.0
      %v1763 = vmax.f32 %v1585, 0.0
      %v1764 = vmax.f32 %v1698, 0.0
      %v1765 = vmax.f32 %v1588, 0.0
      %v1766 = vmax.f32 %v1701, 0.0
      %v1767 = vadd.f32 %v1703, %v1704
      %1768 = vadd.xlane.f32.xlu0 %v1767
      %v1769 = vpop.xlane.xlu0 %1768
      %v1770 = vadd.f32 %v1705, %v1706
      %1771 = vadd.xlane.f32.xlu0 %v1770
      %v1772 = vpop.xlane.xlu0 %1771
      %v1773 = vadd.f32 %v1707, %v1708
      %1774 = vadd.xlane.f32.xlu0 %v1773
      %v1775 = vpop.xlane.xlu0 %1774
      %v1776 = vadd.f32 %v1709, %v1710
      %1777 = vadd.xlane.f32.xlu0 %v1776
      %v1778 = vpop.xlane.xlu0 %1777
      %v1779 = vadd.f32 %v1711, %v1712
      %1780 = vadd.xlane.f32.xlu0 %v1779
      %v1781 = vpop.xlane.xlu0 %1780
      %v1782 = vadd.f32 %v1713, %v1714
      %1783 = vadd.xlane.f32.xlu0 %v1782
      %v1784 = vpop.xlane.xlu0 %1783
      %v1785 = vadd.f32 %v1715, %v1716
      %1786 = vadd.xlane.f32.xlu0 %v1785
      %v1787 = vpop.xlane.xlu0 %1786
      %v1788 = vadd.f32 %v1717, %v1718
      %1789 = vadd.xlane.f32.xlu0 %v1788
      %v1790 = vpop.xlane.xlu0 %1789
      %v1791 = vadd.f32 %v1719, %v1720
      %1792 = vadd.xlane.f32.xlu0 %v1791
      %v1793 = vpop.xlane.xlu0 %1792
      %v1794 = vadd.f32 %v1721, %v1722
      %1795 = vadd.xlane.f32.xlu0 %v1794
      %v1796 = vpop.xlane.xlu0 %1795
      %v1797 = vadd.f32 %v1723, %v1724
      %1798 = vadd.xlane.f32.xlu0 %v1797
      %v1799 = vpop.xlane.xlu0 %1798
      %v1800 = vadd.f32 %v1725, %v1726
      %1801 = vadd.xlane.f32.xlu0 %v1800
      %v1802 = vpop.xlane.xlu0 %1801
      %v1803 = vadd.f32 %v1727, %v1728
      %1804 = vadd.xlane.f32.xlu0 %v1803
      %v1805 = vpop.xlane.xlu0 %1804
      %v1806 = vadd.f32 %v1729, %v1730
      %1807 = vadd.xlane.f32.xlu0 %v1806
      %v1808 = vpop.xlane.xlu0 %1807
      %v1809 = vadd.f32 %v1731, %v1732
      %1810 = vadd.xlane.f32.xlu0 %v1809
      %v1811 = vpop.xlane.xlu0 %1810
      %v1812 = vadd.f32 %v1733, %v1734
      %1813 = vadd.xlane.f32.xlu0 %v1812
      %v1814 = vpop.xlane.xlu0 %1813
      %v1815 = vadd.f32 %v1735, %v1736
      %1816 = vadd.xlane.f32.xlu0 %v1815
      %v1817 = vpop.xlane.xlu0 %1816
      %v1818 = vadd.f32 %v1737, %v1738
      %1819 = vadd.xlane.f32.xlu0 %v1818
      %v1820 = vpop.xlane.xlu0 %1819
      %v1821 = vadd.f32 %v1739, %v1740
      %1822 = vadd.xlane.f32.xlu0 %v1821
      %v1823 = vpop.xlane.xlu0 %1822
      %v1824 = vadd.f32 %v1741, %v1742
      %1825 = vadd.xlane.f32.xlu0 %v1824
      %v1826 = vpop.xlane.xlu0 %1825
      %v1827 = vadd.f32 %v1743, %v1744
      %1828 = vadd.xlane.f32.xlu0 %v1827
      %v1829 = vpop.xlane.xlu0 %1828
      %v1830 = vadd.f32 %v1745, %v1746
      %1831 = vadd.xlane.f32.xlu0 %v1830
      %v1832 = vpop.xlane.xlu0 %1831
      %v1833 = vadd.f32 %v1747, %v1748
      %1834 = vadd.xlane.f32.xlu0 %v1833
      %v1835 = vpop.xlane.xlu0 %1834
      %v1836 = vadd.f32 %v1749, %v1750
      %1837 = vadd.xlane.f32.xlu0 %v1836
      %v1838 = vpop.xlane.xlu0 %1837
      %v1839 = vadd.f32 %v1751, %v1752
      %1840 = vadd.xlane.f32.xlu0 %v1839
      %v1841 = vpop.xlane.xlu0 %1840
      %v1842 = vadd.f32 %v1753, %v1754
      %1843 = vadd.xlane.f32.xlu0 %v1842
      %v1844 = vpop.xlane.xlu0 %1843
      %v1845 = vadd.f32 %v1755, %v1756
      %1846 = vadd.xlane.f32.xlu0 %v1845
      %v1847 = vpop.xlane.xlu0 %1846
      %v1848 = vadd.f32 %v1757, %v1758
      %1849 = vadd.xlane.f32.xlu0 %v1848
      %v1850 = vpop.xlane.xlu0 %1849
      %v1851 = vadd.f32 %v1759, %v1760
      %1852 = vadd.xlane.f32.xlu0 %v1851
      %v1853 = vpop.xlane.xlu0 %1852
      %v1854 = vadd.f32 %v1761, %v1762
      %1855 = vadd.xlane.f32.xlu0 %v1854
      %v1856 = vpop.xlane.xlu0 %1855
      %v1857 = vadd.f32 %v1763, %v1764
      %1858 = vadd.xlane.f32.xlu0 %v1857
      %v1859 = vpop.xlane.xlu0 %1858
      %v1860 = vadd.f32 %v1765, %v1766
      %1861 = vadd.xlane.f32.xlu0 %v1860
      %v1862 = vpop.xlane.xlu0 %1861
      %v1863 = vrcp.pop 256.0
      %v1864 = vmul.f32 256.0, %v1863
      %v1865 = vsub.f32 1.0, %v1864
      %v1866 = vmul.f32 %v1863, %v1865
      %v1867 = vadd.f32 %v1863, %v1866
      %vm1868 = vweird.f32 %v1863
      %v1869 = vsel %vm1868, %v1863, %v1867
      %v1870 = vmul.f32 %v1769, %v1869
      %v1871 = vmul.f32 %v1772, %v1869
      %v1872 = vmul.f32 %v1775, %v1869
      %v1873 = vmul.f32 %v1778, %v1869
      %v1874 = vmul.f32 %v1781, %v1869
      %v1875 = vmul.f32 %v1784, %v1869
      %v1876 = vmul.f32 %v1787, %v1869
      %v1877 = vmul.f32 %v1790, %v1869
      %v1878 = vmul.f32 %v1793, %v1869
      %v1879 = vmul.f32 %v1796, %v1869
      %v1880 = vmul.f32 %v1799, %v1869
      %v1881 = vmul.f32 %v1802, %v1869
      %v1882 = vmul.f32 %v1805, %v1869
      %v1883 = vmul.f32 %v1808, %v1869
      %v1884 = vmul.f32 %v1811, %v1869
      %v1885 = vmul.f32 %v1814, %v1869
      %v1886 = vmul.f32 %v1817, %v1869
      %v1887 = vmul.f32 %v1820, %v1869
      %v1888 = vmul.f32 %v1823, %v1869
      %v1889 = vmul.f32 %v1826, %v1869
      %v1890 = vmul.f32 %v1829, %v1869
      %v1891 = vmul.f32 %v1832, %v1869
      %v1892 = vmul.f32 %v1835, %v1869
      %v1893 = vmul.f32 %v1838, %v1869
      %v1894 = vmul.f32 %v1841, %v1869
      %v1895 = vmul.f32 %v1844, %v1869
      %v1896 = vmul.f32 %v1847, %v1869
      %v1897 = vmul.f32 %v1850, %v1869
      %v1898 = vmul.f32 %v1853, %v1869
      %v1899 = vmul.f32 %v1856, %v1869
      %v1900 = vmul.f32 %v1859, %v1869
      %v1901 = vmul.f32 %v1862, %v1869
      %v1902 = vld [vmem:[%s8] sm:$0xff]
      %v1903 = vld [vmem:[%s8 + $0x8] sm:$0xff]
      %v1904 = vld [vmem:[%s8 + $0x10] sm:$0xff]
      %v1905 = vld [vmem:[%s8 + $0x18] sm:$0xff]
      %v1906 = vld [vmem:[%s8 + $0x20] sm:$0xff]
      %v1907 = vld [vmem:[%s8 + $0x28] sm:$0xff]
      %v1908 = vld [vmem:[%s8 + $0x30] sm:$0xff]
      %v1909 = vld [vmem:[%s8 + $0x38] sm:$0xff]
      %v1910 = vld [vmem:[%s8 + $0x40] sm:$0xf]
      %v1911 = vld [vmem:[%s8 + $0x48] sm:$0xf]
      %1912 = vmatpush.msra.mxu0 %v1885
      %1913 = vmatpush.msra.mxu0 %v1884
      %1914 = vmatpush.msra.mxu0 %v1883
      %1915 = vmatpush.msra.mxu0 %v1882
      %1916 = vmatpush.msra.mxu0 %v1881
      %1917 = vmatpush.msra.mxu0 %v1880
      %1918 = vmatpush.msra.mxu0 %v1879
      %1919 = vmatpush.msra.mxu0 %v1878
      %1920 = vmatpush.msra.mxu0 %v1877
      %1921 = vmatpush.msra.mxu0 %v1876
      %1922 = vmatpush.msra.mxu0 %v1875
      %1923 = vmatpush.msra.mxu0 %v1874
      %1924 = vmatpush.msra.mxu0 %v1873
      %1925 = vmatpush.msra.mxu0 %v1872
      %1926 = vmatpush.msra.mxu0 %v1871
      %1927 = vmatpush.msra.mxu0 %v1870
      %1928 = vmatmul.f32.gmra.mxu0 %v1902
      %v1929 = vpop.f32.mrf.mxu0
      %v1930 = vadd.f32 0.0, %v1929
      %1931 = vmatmul.f32.gmra.mxu0 %v1904
      %v1932 = vpop.f32.mrf.mxu0
      %v1933 = vadd.f32 0.0, %v1932
      %1934 = vmatmul.f32.gmra.mxu0 %v1906
      %v1935 = vpop.f32.mrf.mxu0
      %v1936 = vadd.f32 0.0, %v1935
      %1937 = vmatmul.f32.gmra.mxu0 %v1908
      %v1938 = vpop.f32.mrf.mxu0
      %v1939 = vadd.f32 0.0, %v1938
      %1940 = vmatmul.f32.gmra.mxu0 %v1910
      %v1941 = vpop.f32.mrf.mxu0
      %v1942 = vadd.f32 0.0, %v1941
      %1943 = vdwg.mxu0
      %1944 = vmatpush.msra.mxu0 %v1901
      %1945 = vmatpush.msra.mxu0 %v1900
      %1946 = vmatpush.msra.mxu0 %v1899
      %1947 = vmatpush.msra.mxu0 %v1898
      %1948 = vmatpush.msra.mxu0 %v1897
      %1949 = vmatpush.msra.mxu0 %v1896
      %1950 = vmatpush.msra.mxu0 %v1895
      %1951 = vmatpush.msra.mxu0 %v1894
      %1952 = vmatpush.msra.mxu0 %v1893
      %1953 = vmatpush.msra.mxu0 %v1892
      %1954 = vmatpush.msra.mxu0 %v1891
      %1955 = vmatpush.msra.mxu0 %v1890
      %1956 = vmatpush.msra.mxu0 %v1889
      %1957 = vmatpush.msra.mxu0 %v1888
      %1958 = vmatpush.msra.mxu0 %v1887
      %1959 = vmatpush.msra.mxu0 %v1886
      %1960 = vmatmul.f32.gmra.mxu0 %v1903
      %v1961 = vpop.f32.mrf.mxu0
      %v1962 = vadd.f32 %v1930, %v1961
      %1963 = vmatmul.f32.gmra.mxu0 %v1905
      %v1964 = vpop.f32.mrf.mxu0
      %v1965 = vadd.f32 %v1933, %v1964
      %1966 = vmatmul.f32.gmra.mxu0 %v1907
      %v1967 = vpop.f32.mrf.mxu0
      %v1968 = vadd.f32 %v1936, %v1967
      %1969 = vmatmul.f32.gmra.mxu0 %v1909
      %v1970 = vpop.f32.mrf.mxu0
      %v1971 = vadd.f32 %v1939, %v1970
      %1972 = vmatmul.f32.gmra.mxu0 %v1911
      %v1973 = vpop.f32.mrf.mxu0
      %v1974 = vadd.f32 %v1942, %v1973
      %1975 = vdwg.mxu0
      %v1976 = vld [vmem:[%s9] sm:$0xf]
      %1978 = vset.pattern.permute.xlu0 0
      %1979 = vperm.xlu0 %1978, %v1976
      %v1980 = vpop.permute.xlu0 %1979
      %1983 = vset.pattern.permute.xlu0 0
      %1984 = vperm.xlu0 %1983, %v1962
      %v1985 = vpop.permute.xlu0 %1984
      %v1987 = vmul.f32 %v1985, %v427
      %v1988 = vmul.f32 %v1985, %v428
      %v1989 = vadd.f32 %v1980, %v1987
      %v1990 = vadd.f32 %v1980, %v1988
      %v1991 = vmul.f32 %v1985, %v438
      %v1992 = vmul.f32 %v1985, %v439
      %v1995 = vrot.slane %v1991, 4
      %v1996 = vrot.slane %v1992, 4
      %v1999 = vadd.f32 %v1989, %v1995
      %v2000 = vadd.f32 %v1990, %v1996
      %2002 = vset.pattern.permute.xlu0 0
      %2003 = vperm.xlu0 %2002, %v1965
      %v2004 = vpop.permute.xlu0 %2003
      %v2006 = vmul.f32 %v2004, %v449
      %v2007 = vmul.f32 %v2004, %v450
      %v2008 = vadd.f32 %v1999, %v2006
      %v2009 = vadd.f32 %v2000, %v2007
      %v2010 = vmul.f32 %v2004, %v460
      %v2011 = vmul.f32 %v2004, %v461
      %v2014 = vrot.slane %v2010, 4
      %v2015 = vrot.slane %v2011, 4
      %v2018 = vadd.f32 %v2008, %v2014
      %v2019 = vadd.f32 %v2009, %v2015
      %2021 = vset.pattern.permute.xlu0 0
      %2022 = vperm.xlu0 %2021, %v1968
      %v2023 = vpop.permute.xlu0 %2022
      %v2025 = vadd.f32 %v2018, %v2023
      %v2026 = vadd.f32 %v2019, %v2023
      %v2027 = vmul.f32 %v2023, %v471
      %v2028 = vmul.f32 %v2023, %v472
      %v2031 = vrot.slane %v2027, 4
      %v2032 = vrot.slane %v2028, 4
      %v2035 = vadd.f32 %v2025, %v2031
      %v2036 = vadd.f32 %v2026, %v2032
      %2038 = vset.pattern.permute.xlu0 0
      %2039 = vperm.xlu0 %2038, %v1971
      %v2040 = vpop.permute.xlu0 %2039
      %v2042 = vmul.f32 %v2040, %v482
      %v2043 = vmul.f32 %v2040, %v483
      %v2044 = vadd.f32 %v2035, %v2042
      %v2045 = vadd.f32 %v2036, %v2043
      %v2046 = vmul.f32 %v2040, %v493
      %v2047 = vmul.f32 %v2040, %v494
      %v2050 = vrot.slane %v2046, 4
      %v2051 = vrot.slane %v2047, 4
      %v2054 = vadd.f32 %v2044, %v2050
      %v2055 = vadd.f32 %v2045, %v2051
      %2057 = vset.pattern.permute.xlu0 0
      %2058 = vperm.xlu0 %2057, %v1974
      %v2059 = vpop.permute.xlu0 %2058
      %v2061 = vmul.f32 %v2059, %v504
      %v2062 = vmul.f32 %v2059, %v505
      %v2063 = vadd.f32 %v2054, %v2061
      %v2064 = vadd.f32 %v2055, %v2062
      %2065 = vrot.lane.b32.xlu0 %v1023, 17
      %v2066 = vpop.permute.xlu0 %2065
      %2067 = vrot.lane.b32.xlu0 %v1025, 17
      %v2068 = vpop.permute.xlu0 %2067
      %2069 = vrot.lane.b32.xlu0 %v1027, 17
      %v2070 = vpop.permute.xlu0 %2069
      %2071 = vrot.lane.b32.xlu0 %v1029, 17
      %v2072 = vpop.permute.xlu0 %2071
      %2073 = vrot.lane.b32.xlu0 %v1031, 17
      %v2074 = vpop.permute.xlu0 %2073
      %2075 = vrot.lane.b32.xlu0 %v1033, 17
      %v2076 = vpop.permute.xlu0 %2075
      %2077 = vrot.lane.b32.xlu0 %v1035, 17
      %v2078 = vpop.permute.xlu0 %2077
      %2079 = vrot.lane.b32.xlu0 %v1037, 17
      %v2080 = vpop.permute.xlu0 %2079
      %2081 = vrot.lane.b32.xlu0 %v1039, 17
      %v2082 = vpop.permute.xlu0 %2081
      %2083 = vrot.lane.b32.xlu0 %v1041, 17
      %v2084 = vpop.permute.xlu0 %2083
      %2085 = vrot.lane.b32.xlu0 %v1043, 17
      %v2086 = vpop.permute.xlu0 %2085
      %2087 = vrot.lane.b32.xlu0 %v1045, 17
      %v2088 = vpop.permute.xlu0 %2087
      %2089 = vrot.lane.b32.xlu0 %v1047, 17
      %v2090 = vpop.permute.xlu0 %2089
      %2091 = vrot.lane.b32.xlu0 %v1049, 17
      %v2092 = vpop.permute.xlu0 %2091
      %2093 = vrot.lane.b32.xlu0 %v1051, 17
      %v2094 = vpop.permute.xlu0 %2093
      %2095 = vrot.lane.b32.xlu0 %v1053, 17
      %v2096 = vpop.permute.xlu0 %2095
      %2097 = vrot.lane.b32.xlu0 %v1055, 17
      %v2098 = vpop.permute.xlu0 %2097
      %2099 = vrot.lane.b32.xlu0 %v1057, 17
      %v2100 = vpop.permute.xlu0 %2099
      %2101 = vrot.lane.b32.xlu0 %v1059, 17
      %v2102 = vpop.permute.xlu0 %2101
      %2103 = vrot.lane.b32.xlu0 %v1061, 17
      %v2104 = vpop.permute.xlu0 %2103
      %2105 = vrot.lane.b32.xlu0 %v1063, 17
      %v2106 = vpop.permute.xlu0 %2105
      %2107 = vrot.lane.b32.xlu0 %v1065, 17
      %v2108 = vpop.permute.xlu0 %2107
      %2109 = vrot.lane.b32.xlu0 %v1067, 17
      %v2110 = vpop.permute.xlu0 %2109
      %2111 = vrot.lane.b32.xlu0 %v1069, 17
      %v2112 = vpop.permute.xlu0 %2111
      %2113 = vrot.lane.b32.xlu0 %v1071, 17
      %v2114 = vpop.permute.xlu0 %2113
      %2115 = vrot.lane.b32.xlu0 %v1073, 17
      %v2116 = vpop.permute.xlu0 %2115
      %2117 = vrot.lane.b32.xlu0 %v1075, 17
      %v2118 = vpop.permute.xlu0 %2117
      %2119 = vrot.lane.b32.xlu0 %v1077, 17
      %v2120 = vpop.permute.xlu0 %2119
      %2121 = vrot.lane.b32.xlu0 %v1079, 17
      %v2122 = vpop.permute.xlu0 %2121
      %2123 = vrot.lane.b32.xlu0 %v1081, 17
      %v2124 = vpop.permute.xlu0 %2123
      %2125 = vrot.lane.b32.xlu0 %v1083, 17
      %v2126 = vpop.permute.xlu0 %2125
      %2127 = vrot.lane.b32.xlu0 %v1085, 17
      %v2128 = vpop.permute.xlu0 %2127
      %2129 = vrot.lane.b32.xlu0 %v1024, 17
      %v2130 = vpop.permute.xlu0 %2129
      %2131 = vrot.lane.b32.xlu0 %v1026, 17
      %v2132 = vpop.permute.xlu0 %2131
      %2133 = vrot.lane.b32.xlu0 %v1028, 17
      %v2134 = vpop.permute.xlu0 %2133
      %2135 = vrot.lane.b32.xlu0 %v1030, 17
      %v2136 = vpop.permute.xlu0 %2135
      %2137 = vrot.lane.b32.xlu0 %v1032, 17
      %v2138 = vpop.permute.xlu0 %2137
      %2139 = vrot.lane.b32.xlu0 %v1034, 17
      %v2140 = vpop.permute.xlu0 %2139
      %2141 = vrot.lane.b32.xlu0 %v1036, 17
      %v2142 = vpop.permute.xlu0 %2141
      %2143 = vrot.lane.b32.xlu0 %v1038, 17
      %v2144 = vpop.permute.xlu0 %2143
      %2145 = vrot.lane.b32.xlu0 %v1040, 17
      %v2146 = vpop.permute.xlu0 %2145
      %2147 = vrot.lane.b32.xlu0 %v1042, 17
      %v2148 = vpop.permute.xlu0 %2147
      %2149 = vrot.lane.b32.xlu0 %v1044, 17
      %v2150 = vpop.permute.xlu0 %2149
      %2151 = vrot.lane.b32.xlu0 %v1046, 17
      %v2152 = vpop.permute.xlu0 %2151
      %2153 = vrot.lane.b32.xlu0 %v1048, 17
      %v2154 = vpop.permute.xlu0 %2153
      %2155 = vrot.lane.b32.xlu0 %v1050, 17
      %v2156 = vpop.permute.xlu0 %2155
      %2157 = vrot.lane.b32.xlu0 %v1052, 17
      %v2158 = vpop.permute.xlu0 %2157
      %2159 = vrot.lane.b32.xlu0 %v1054, 17
      %v2160 = vpop.permute.xlu0 %2159
      %2161 = vrot.lane.b32.xlu0 %v1056, 17
      %v2162 = vpop.permute.xlu0 %2161
      %2163 = vrot.lane.b32.xlu0 %v1058, 17
      %v2164 = vpop.permute.xlu0 %2163
      %2165 = vrot.lane.b32.xlu0 %v1060, 17
      %v2166 = vpop.permute.xlu0 %2165
      %2167 = vrot.lane.b32.xlu0 %v1062, 17
      %v2168 = vpop.permute.xlu0 %2167
      %2169 = vrot.lane.b32.xlu0 %v1064, 17
      %v2170 = vpop.permute.xlu0 %2169
      %2171 = vrot.lane.b32.xlu0 %v1066, 17
      %v2172 = vpop.permute.xlu0 %2171
      %2173 = vrot.lane.b32.xlu0 %v1068, 17
      %v2174 = vpop.permute.xlu0 %2173
      %2175 = vrot.lane.b32.xlu0 %v1070, 17
      %v2176 = vpop.permute.xlu0 %2175
      %2177 = vrot.lane.b32.xlu0 %v1072, 17
      %v2178 = vpop.permute.xlu0 %2177
      %2179 = vrot.lane.b32.xlu0 %v1074, 17
      %v2180 = vpop.permute.xlu0 %2179
      %2181 = vrot.lane.b32.xlu0 %v1076, 17
      %v2182 = vpop.permute.xlu0 %2181
      %2183 = vrot.lane.b32.xlu0 %v1078, 17
      %v2184 = vpop.permute.xlu0 %2183
      %2185 = vrot.lane.b32.xlu0 %v1080, 17
      %v2186 = vpop.permute.xlu0 %2185
      %2187 = vrot.lane.b32.xlu0 %v1082, 17
      %v2188 = vpop.permute.xlu0 %2187
      %2189 = vrot.lane.b32.xlu0 %v1084, 17
      %v2190 = vpop.permute.xlu0 %2189
      %2191 = vrot.lane.b32.xlu0 %v1086, 17
      %v2192 = vpop.permute.xlu0 %2191
      %v2193 = vsel %vm424, %v2066, %v2130
      %v2194 = vsel %vm424, %v2068, %v2132
      %v2195 = vsel %vm424, %v2070, %v2134
      %v2196 = vsel %vm424, %v2072, %v2136
      %v2197 = vsel %vm424, %v2074, %v2138
      %v2198 = vsel %vm424, %v2076, %v2140
      %v2199 = vsel %vm424, %v2078, %v2142
      %v2200 = vsel %vm424, %v2080, %v2144
      %v2201 = vsel %vm424, %v2082, %v2146
      %v2202 = vsel %vm424, %v2084, %v2148
      %v2203 = vsel %vm424, %v2086, %v2150
      %v2204 = vsel %vm424, %v2088, %v2152
      %v2205 = vsel %vm424, %v2090, %v2154
      %v2206 = vsel %vm424, %v2092, %v2156
      %v2207 = vsel %vm424, %v2094, %v2158
      %v2208 = vsel %vm424, %v2096, %v2160
      %v2209 = vsel %vm424, %v2098, %v2162
      %v2210 = vsel %vm424, %v2100, %v2164
      %v2211 = vsel %vm424, %v2102, %v2166
      %v2212 = vsel %vm424, %v2104, %v2168
      %v2213 = vsel %vm424, %v2106, %v2170
      %v2214 = vsel %vm424, %v2108, %v2172
      %v2215 = vsel %vm424, %v2110, %v2174
      %v2216 = vsel %vm424, %v2112, %v2176
      %v2217 = vsel %vm424, %v2114, %v2178
      %v2218 = vsel %vm424, %v2116, %v2180
      %v2219 = vsel %vm424, %v2118, %v2182
      %v2220 = vsel %vm424, %v2120, %v2184
      %v2221 = vsel %vm424, %v2122, %v2186
      %v2222 = vsel %vm424, %v2124, %v2188
      %v2223 = vsel %vm424, %v2126, %v2190
      %v2224 = vsel %vm424, %v2128, %v2192
      %v2225 = vsel %vm424, %v2130, %v2066
      %v2226 = vsel %vm424, %v2132, %v2068
      %v2227 = vsel %vm424, %v2134, %v2070
      %v2228 = vsel %vm424, %v2136, %v2072
      %v2229 = vsel %vm424, %v2138, %v2074
      %v2230 = vsel %vm424, %v2140, %v2076
      %v2231 = vsel %vm424, %v2142, %v2078
      %v2232 = vsel %vm424, %v2144, %v2080
      %v2233 = vsel %vm424, %v2146, %v2082
      %v2234 = vsel %vm424, %v2148, %v2084
      %v2235 = vsel %vm424, %v2150, %v2086
      %v2236 = vsel %vm424, %v2152, %v2088
      %v2237 = vsel %vm424, %v2154, %v2090
      %v2238 = vsel %vm424, %v2156, %v2092
      %v2239 = vsel %vm424, %v2158, %v2094
      %v2240 = vsel %vm424, %v2160, %v2096
      %v2241 = vsel %vm424, %v2162, %v2098
      %v2242 = vsel %vm424, %v2164, %v2100
      %v2243 = vsel %vm424, %v2166, %v2102
      %v2244 = vsel %vm424, %v2168, %v2104
      %v2245 = vsel %vm424, %v2170, %v2106
      %v2246 = vsel %vm424, %v2172, %v2108
      %v2247 = vsel %vm424, %v2174, %v2110
      %v2248 = vsel %vm424, %v2176, %v2112
      %v2249 = vsel %vm424, %v2178, %v2114
      %v2250 = vsel %vm424, %v2180, %v2116
      %v2251 = vsel %vm424, %v2182, %v2118
      %v2252 = vsel %vm424, %v2184, %v2120
      %v2253 = vsel %vm424, %v2186, %v2122
      %v2254 = vsel %vm424, %v2188, %v2124
      %v2255 = vsel %vm424, %v2190, %v2126
      %v2256 = vsel %vm424, %v2192, %v2128
      %v2257 = vld [vmem:[%s7] sm:$0xff]
      %2259 = vst [vmem:[#allocation1] ss:$2 sm:$0xff] %v2257
      %v2260 = vld.sshfl [vmem:[#allocation1] sm:$0xff pattern:$0x75316420]
      %v2261 = vld.sshfl [vmem:[#allocation1 + $0x8] sm:$0xff pattern:$0x75316420]
      %2264 = vmatpush.msra.mxu0 %v2240
      %2265 = vmatpush.msra.mxu0 %v2239
      %2266 = vmatpush.msra.mxu0 %v2238
      %2267 = vmatpush.msra.mxu0 %v2237
      %2268 = vmatpush.msra.mxu0 %v2236
      %2269 = vmatpush.msra.mxu0 %v2235
      %2270 = vmatpush.msra.mxu0 %v2234
      %2271 = vmatpush.msra.mxu0 %v2233
      %2272 = vmatpush.msra.mxu0 %v2232
      %2273 = vmatpush.msra.mxu0 %v2231
      %2274 = vmatpush.msra.mxu0 %v2230
      %2275 = vmatpush.msra.mxu0 %v2229
      %2276 = vmatpush.msra.mxu0 %v2228
      %2277 = vmatpush.msra.mxu0 %v2227
      %2278 = vmatpush.msra.mxu0 %v2226
      %2279 = vmatpush.msra.mxu0 %v2225
      %2280 = vmatmul.f32.gmra.mxu0 %v2260
      %v2281 = vpop.f32.mrf.mxu0
      %v2282 = vadd.f32 0.0, %v2281
      %2283 = vdwg.mxu0
      %2284 = vmatpush.msra.mxu0 %v2256
      %2285 = vmatpush.msra.mxu0 %v2255
      %2286 = vmatpush.msra.mxu0 %v2254
      %2287 = vmatpush.msra.mxu0 %v2253
      %2288 = vmatpush.msra.mxu0 %v2252
      %2289 = vmatpush.msra.mxu0 %v2251
      %2290 = vmatpush.msra.mxu0 %v2250
      %2291 = vmatpush.msra.mxu0 %v2249
      %2292 = vmatpush.msra.mxu0 %v2248
      %2293 = vmatpush.msra.mxu0 %v2247
      %2294 = vmatpush.msra.mxu0 %v2246
      %2295 = vmatpush.msra.mxu0 %v2245
      %2296 = vmatpush.msra.mxu0 %v2244
      %2297 = vmatpush.msra.mxu0 %v2243
      %2298 = vmatpush.msra.mxu0 %v2242
      %2299 = vmatpush.msra.mxu0 %v2241
      %2300 = vmatmul.f32.gmra.mxu0 %v2261
      %v2301 = vpop.f32.mrf.mxu0
      %v2302 = vadd.f32 %v2282, %v2301
      %2303 = vdwg.mxu0
      %2304 = vmatpush.msra.mxu0 %v2208
      %2305 = vmatpush.msra.mxu0 %v2207
      %2306 = vmatpush.msra.mxu0 %v2206
      %2307 = vmatpush.msra.mxu0 %v2205
      %2308 = vmatpush.msra.mxu0 %v2204
      %2309 = vmatpush.msra.mxu0 %v2203
      %2310 = vmatpush.msra.mxu0 %v2202
      %2311 = vmatpush.msra.mxu0 %v2201
      %2312 = vmatpush.msra.mxu0 %v2200
      %2313 = vmatpush.msra.mxu0 %v2199
      %2314 = vmatpush.msra.mxu0 %v2198
      %2315 = vmatpush.msra.mxu0 %v2197
      %2316 = vmatpush.msra.mxu0 %v2196
      %2317 = vmatpush.msra.mxu0 %v2195
      %2318 = vmatpush.msra.mxu0 %v2194
      %2319 = vmatpush.msra.mxu0 %v2193
      %2320 = vmatmul.f32.gmra.mxu0 %v2260
      %v2321 = vpop.f32.mrf.mxu0
      %v2322 = vadd.f32 0.0, %v2321
      %2323 = vdwg.mxu0
      %2324 = vmatpush.msra.mxu0 %v2224
      %2325 = vmatpush.msra.mxu0 %v2223
      %2326 = vmatpush.msra.mxu0 %v2222
      %2327 = vmatpush.msra.mxu0 %v2221
      %2328 = vmatpush.msra.mxu0 %v2220
      %2329 = vmatpush.msra.mxu0 %v2219
      %2330 = vmatpush.msra.mxu0 %v2218
      %2331 = vmatpush.msra.mxu0 %v2217
      %2332 = vmatpush.msra.mxu0 %v2216
      %2333 = vmatpush.msra.mxu0 %v2215
      %2334 = vmatpush.msra.mxu0 %v2214
      %2335 = vmatpush.msra.mxu0 %v2213
      %2336 = vmatpush.msra.mxu0 %v2212
      %2337 = vmatpush.msra.mxu0 %v2211
      %2338 = vmatpush.msra.mxu0 %v2210
      %2339 = vmatpush.msra.mxu0 %v2209
      %2340 = vmatmul.f32.gmra.mxu0 %v2261
      %v2341 = vpop.f32.mrf.mxu0
      %v2342 = vadd.f32 %v2322, %v2341
      %2343 = vdwg.mxu0
      %v2344 = vmul.f32 %v2302, %v427
      %v2345 = vmul.f32 %v2342, %v428
      %v2346 = vadd.f32 %v2063, %v2344
      %v2347 = vadd.f32 %v2064, %v2345
      %2348 = vrot.lane.b32.xlu0 %v1023, 16
      %v2349 = vpop.permute.xlu0 %2348
      %2350 = vrot.lane.b32.xlu0 %v1025, 16
      %v2351 = vpop.permute.xlu0 %2350
      %2352 = vrot.lane.b32.xlu0 %v1027, 16
      %v2353 = vpop.permute.xlu0 %2352
      %2354 = vrot.lane.b32.xlu0 %v1029, 16
      %v2355 = vpop.permute.xlu0 %2354
      %2356 = vrot.lane.b32.xlu0 %v1031, 16
      %v2357 = vpop.permute.xlu0 %2356
      %2358 = vrot.lane.b32.xlu0 %v1033, 16
      %v2359 = vpop.permute.xlu0 %2358
      %2360 = vrot.lane.b32.xlu0 %v1035, 16
      %v2361 = vpop.permute.xlu0 %2360
      %2362 = vrot.lane.b32.xlu0 %v1037, 16
      %v2363 = vpop.permute.xlu0 %2362
      %2364 = vrot.lane.b32.xlu0 %v1039, 16
      %v2365 = vpop.permute.xlu0 %2364
      %2366 = vrot.lane.b32.xlu0 %v1041, 16
      %v2367 = vpop.permute.xlu0 %2366
      %2368 = vrot.lane.b32.xlu0 %v1043, 16
      %v2369 = vpop.permute.xlu0 %2368
      %2370 = vrot.lane.b32.xlu0 %v1045, 16
      %v2371 = vpop.permute.xlu0 %2370
      %2372 = vrot.lane.b32.xlu0 %v1047, 16
      %v2373 = vpop.permute.xlu0 %2372
      %2374 = vrot.lane.b32.xlu0 %v1049, 16
      %v2375 = vpop.permute.xlu0 %2374
      %2376 = vrot.lane.b32.xlu0 %v1051, 16
      %v2377 = vpop.permute.xlu0 %2376
      %2378 = vrot.lane.b32.xlu0 %v1053, 16
      %v2379 = vpop.permute.xlu0 %2378
      %2380 = vrot.lane.b32.xlu0 %v1055, 16
      %v2381 = vpop.permute.xlu0 %2380
      %2382 = vrot.lane.b32.xlu0 %v1057, 16
      %v2383 = vpop.permute.xlu0 %2382
      %2384 = vrot.lane.b32.xlu0 %v1059, 16
      %v2385 = vpop.permute.xlu0 %2384
      %2386 = vrot.lane.b32.xlu0 %v1061, 16
      %v2387 = vpop.permute.xlu0 %2386
      %2388 = vrot.lane.b32.xlu0 %v1063, 16
      %v2389 = vpop.permute.xlu0 %2388
      %2390 = vrot.lane.b32.xlu0 %v1065, 16
      %v2391 = vpop.permute.xlu0 %2390
      %2392 = vrot.lane.b32.xlu0 %v1067, 16
      %v2393 = vpop.permute.xlu0 %2392
      %2394 = vrot.lane.b32.xlu0 %v1069, 16
      %v2395 = vpop.permute.xlu0 %2394
      %2396 = vrot.lane.b32.xlu0 %v1071, 16
      %v2397 = vpop.permute.xlu0 %2396
      %2398 = vrot.lane.b32.xlu0 %v1073, 16
      %v2399 = vpop.permute.xlu0 %2398
      %2400 = vrot.lane.b32.xlu0 %v1075, 16
      %v2401 = vpop.permute.xlu0 %2400
      %2402 = vrot.lane.b32.xlu0 %v1077, 16
      %v2403 = vpop.permute.xlu0 %2402
      %2404 = vrot.lane.b32.xlu0 %v1079, 16
      %v2405 = vpop.permute.xlu0 %2404
      %2406 = vrot.lane.b32.xlu0 %v1081, 16
      %v2407 = vpop.permute.xlu0 %2406
      %2408 = vrot.lane.b32.xlu0 %v1083, 16
      %v2409 = vpop.permute.xlu0 %2408
      %2410 = vrot.lane.b32.xlu0 %v1085, 16
      %v2411 = vpop.permute.xlu0 %2410
      %2412 = vrot.lane.b32.xlu0 %v1024, 16
      %v2413 = vpop.permute.xlu0 %2412
      %2414 = vrot.lane.b32.xlu0 %v1026, 16
      %v2415 = vpop.permute.xlu0 %2414
      %2416 = vrot.lane.b32.xlu0 %v1028, 16
      %v2417 = vpop.permute.xlu0 %2416
      %2418 = vrot.lane.b32.xlu0 %v1030, 16
      %v2419 = vpop.permute.xlu0 %2418
      %2420 = vrot.lane.b32.xlu0 %v1032, 16
      %v2421 = vpop.permute.xlu0 %2420
      %2422 = vrot.lane.b32.xlu0 %v1034, 16
      %v2423 = vpop.permute.xlu0 %2422
      %2424 = vrot.lane.b32.xlu0 %v1036, 16
      %v2425 = vpop.permute.xlu0 %2424
      %2426 = vrot.lane.b32.xlu0 %v1038, 16
      %v2427 = vpop.permute.xlu0 %2426
      %2428 = vrot.lane.b32.xlu0 %v1040, 16
      %v2429 = vpop.permute.xlu0 %2428
      %2430 = vrot.lane.b32.xlu0 %v1042, 16
      %v2431 = vpop.permute.xlu0 %2430
      %2432 = vrot.lane.b32.xlu0 %v1044, 16
      %v2433 = vpop.permute.xlu0 %2432
      %2434 = vrot.lane.b32.xlu0 %v1046, 16
      %v2435 = vpop.permute.xlu0 %2434
      %2436 = vrot.lane.b32.xlu0 %v1048, 16
      %v2437 = vpop.permute.xlu0 %2436
      %2438 = vrot.lane.b32.xlu0 %v1050, 16
      %v2439 = vpop.permute.xlu0 %2438
      %2440 = vrot.lane.b32.xlu0 %v1052, 16
      %v2441 = vpop.permute.xlu0 %2440
      %2442 = vrot.lane.b32.xlu0 %v1054, 16
      %v2443 = vpop.permute.xlu0 %2442
      %2444 = vrot.lane.b32.xlu0 %v1056, 16
      %v2445 = vpop.permute.xlu0 %2444
      %2446 = vrot.lane.b32.xlu0 %v1058, 16
      %v2447 = vpop.permute.xlu0 %2446
      %2448 = vrot.lane.b32.xlu0 %v1060, 16
      %v2449 = vpop.permute.xlu0 %2448
      %2450 = vrot.lane.b32.xlu0 %v1062, 16
      %v2451 = vpop.permute.xlu0 %2450
      %2452 = vrot.lane.b32.xlu0 %v1064, 16
      %v2453 = vpop.permute.xlu0 %2452
      %2454 = vrot.lane.b32.xlu0 %v1066, 16
      %v2455 = vpop.permute.xlu0 %2454
      %2456 = vrot.lane.b32.xlu0 %v1068, 16
      %v2457 = vpop.permute.xlu0 %2456
      %2458 = vrot.lane.b32.xlu0 %v1070, 16
      %v2459 = vpop.permute.xlu0 %2458
      %2460 = vrot.lane.b32.xlu0 %v1072, 16
      %v2461 = vpop.permute.xlu0 %2460
      %2462 = vrot.lane.b32.xlu0 %v1074, 16
      %v2463 = vpop.permute.xlu0 %2462
      %2464 = vrot.lane.b32.xlu0 %v1076, 16
      %v2465 = vpop.permute.xlu0 %2464
      %2466 = vrot.lane.b32.xlu0 %v1078, 16
      %v2467 = vpop.permute.xlu0 %2466
      %2468 = vrot.lane.b32.xlu0 %v1080, 16
      %v2469 = vpop.permute.xlu0 %2468
      %2470 = vrot.lane.b32.xlu0 %v1082, 16
      %v2471 = vpop.permute.xlu0 %2470
      %2472 = vrot.lane.b32.xlu0 %v1084, 16
      %v2473 = vpop.permute.xlu0 %2472
      %2474 = vrot.lane.b32.xlu0 %v1086, 16
      %v2475 = vpop.permute.xlu0 %2474
      %v2476 = vsel %vm435, %v2349, %v2413
      %v2477 = vsel %vm435, %v2351, %v2415
      %v2478 = vsel %vm435, %v2353, %v2417
      %v2479 = vsel %vm435, %v2355, %v2419
      %v2480 = vsel %vm435, %v2357, %v2421
      %v2481 = vsel %vm435, %v2359, %v2423
      %v2482 = vsel %vm435, %v2361, %v2425
      %v2483 = vsel %vm435, %v2363, %v2427
      %v2484 = vsel %vm435, %v2365, %v2429
      %v2485 = vsel %vm435, %v2367, %v2431
      %v2486 = vsel %vm435, %v2369, %v2433
      %v2487 = vsel %vm435, %v2371, %v2435
      %v2488 = vsel %vm435, %v2373, %v2437
      %v2489 = vsel %vm435, %v2375, %v2439
      %v2490 = vsel %vm435, %v2377, %v2441
      %v2491 = vsel %vm435, %v2379, %v2443
      %v2492 = vsel %vm435, %v2381, %v2445
      %v2493 = vsel %vm435, %v2383, %v2447
      %v2494 = vsel %vm435, %v2385, %v2449
      %v2495 = vsel %vm435, %v2387, %v2451
      %v2496 = vsel %vm435, %v2389, %v2453
      %v2497 = vsel %vm435, %v2391, %v2455
      %v2498 = vsel %vm435, %v2393, %v2457
      %v2499 = vsel %vm435, %v2395, %v2459
      %v2500 = vsel %vm435, %v2397, %v2461
      %v2501 = vsel %vm435, %v2399, %v2463
      %v2502 = vsel %vm435, %v2401, %v2465
      %v2503 = vsel %vm435, %v2403, %v2467
      %v2504 = vsel %vm435, %v2405, %v2469
      %v2505 = vsel %vm435, %v2407, %v2471
      %v2506 = vsel %vm435, %v2409, %v2473
      %v2507 = vsel %vm435, %v2411, %v2475
      %v2508 = vsel %vm435, %v2413, %v2349
      %v2509 = vsel %vm435, %v2415, %v2351
      %v2510 = vsel %vm435, %v2417, %v2353
      %v2511 = vsel %vm435, %v2419, %v2355
      %v2512 = vsel %vm435, %v2421, %v2357
      %v2513 = vsel %vm435, %v2423, %v2359
      %v2514 = vsel %vm435, %v2425, %v2361
      %v2515 = vsel %vm435, %v2427, %v2363
      %v2516 = vsel %vm435, %v2429, %v2365
      %v2517 = vsel %vm435, %v2431, %v2367
      %v2518 = vsel %vm435, %v2433, %v2369
      %v2519 = vsel %vm435, %v2435, %v2371
      %v2520 = vsel %vm435, %v2437, %v2373
      %v2521 = vsel %vm435, %v2439, %v2375
      %v2522 = vsel %vm435, %v2441, %v2377
      %v2523 = vsel %vm435, %v2443, %v2379
      %v2524 = vsel %vm435, %v2445, %v2381
      %v2525 = vsel %vm435, %v2447, %v2383
      %v2526 = vsel %vm435, %v2449, %v2385
      %v2527 = vsel %vm435, %v2451, %v2387
      %v2528 = vsel %vm435, %v2453, %v2389
      %v2529 = vsel %vm435, %v2455, %v2391
      %v2530 = vsel %vm435, %v2457, %v2393
      %v2531 = vsel %vm435, %v2459, %v2395
      %v2532 = vsel %vm435, %v2461, %v2397
      %v2533 = vsel %vm435, %v2463, %v2399
      %v2534 = vsel %vm435, %v2465, %v2401
      %v2535 = vsel %vm435, %v2467, %v2403
      %v2536 = vsel %vm435, %v2469, %v2405
      %v2537 = vsel %vm435, %v2471, %v2407
      %v2538 = vsel %vm435, %v2473, %v2409
      %v2539 = vsel %vm435, %v2475, %v2411
      %v2540 = vld [vmem:[%s7 + $0x8] sm:$0xff]
      %2542 = vst [vmem:[#allocation1] ss:$2 sm:$0xff] %v2540
      %v2543 = vld.sshfl [vmem:[#allocation1] sm:$0xff pattern:$0x75316420]
      %v2544 = vld.sshfl [vmem:[#allocation1 + $0x8] sm:$0xff pattern:$0x75316420]
      %2547 = vmatpush.msra.mxu0 %v2523
      %2548 = vmatpush.msra.mxu0 %v2522
      %2549 = vmatpush.msra.mxu0 %v2521
      %2550 = vmatpush.msra.mxu0 %v2520
      %2551 = vmatpush.msra.mxu0 %v2519
      %2552 = vmatpush.msra.mxu0 %v2518
      %2553 = vmatpush.msra.mxu0 %v2517
      %2554 = vmatpush.msra.mxu0 %v2516
      %2555 = vmatpush.msra.mxu0 %v2515
      %2556 = vmatpush.msra.mxu0 %v2514
      %2557 = vmatpush.msra.mxu0 %v2513
      %2558 = vmatpush.msra.mxu0 %v2512
      %2559 = vmatpush.msra.mxu0 %v2511
      %2560 = vmatpush.msra.mxu0 %v2510
      %2561 = vmatpush.msra.mxu0 %v2509
      %2562 = vmatpush.msra.mxu0 %v2508
      %2563 = vmatmul.f32.gmra.mxu0 %v2543
      %v2564 = vpop.f32.mrf.mxu0
      %v2565 = vadd.f32 0.0, %v2564
      %2566 = vdwg.mxu0
      %2567 = vmatpush.msra.mxu0 %v2539
      %2568 = vmatpush.msra.mxu0 %v2538
      %2569 = vmatpush.msra.mxu0 %v2537
      %2570 = vmatpush.msra.mxu0 %v2536
      %2571 = vmatpush.msra.mxu0 %v2535
      %2572 = vmatpush.msra.mxu0 %v2534
      %2573 = vmatpush.msra.mxu0 %v2533
      %2574 = vmatpush.msra.mxu0 %v2532
      %2575 = vmatpush.msra.mxu0 %v2531
      %2576 = vmatpush.msra.mxu0 %v2530
      %2577 = vmatpush.msra.mxu0 %v2529
      %2578 = vmatpush.msra.mxu0 %v2528
      %2579 = vmatpush.msra.mxu0 %v2527
      %2580 = vmatpush.msra.mxu0 %v2526
      %2581 = vmatpush.msra.mxu0 %v2525
      %2582 = vmatpush.msra.mxu0 %v2524
      %2583 = vmatmul.f32.gmra.mxu0 %v2544
      %v2584 = vpop.f32.mrf.mxu0
      %v2585 = vadd.f32 %v2565, %v2584
      %2586 = vdwg.mxu0
      %2587 = vmatpush.msra.mxu0 %v2491
      %2588 = vmatpush.msra.mxu0 %v2490
      %2589 = vmatpush.msra.mxu0 %v2489
      %2590 = vmatpush.msra.mxu0 %v2488
      %2591 = vmatpush.msra.mxu0 %v2487
      %2592 = vmatpush.msra.mxu0 %v2486
      %2593 = vmatpush.msra.mxu0 %v2485
      %2594 = vmatpush.msra.mxu0 %v2484
      %2595 = vmatpush.msra.mxu0 %v2483
      %2596 = vmatpush.msra.mxu0 %v2482
      %2597 = vmatpush.msra.mxu0 %v2481
      %2598 = vmatpush.msra.mxu0 %v2480
      %2599 = vmatpush.msra.mxu0 %v2479
      %2600 = vmatpush.msra.mxu0 %v2478
      %2601 = vmatpush.msra.mxu0 %v2477
      %2602 = vmatpush.msra.mxu0 %v2476
      %2603 = vmatmul.f32.gmra.mxu0 %v2543
      %v2604 = vpop.f32.mrf.mxu0
      %v2605 = vadd.f32 0.0, %v2604
      %2606 = vdwg.mxu0
      %2607 = vmatpush.msra.mxu0 %v2507
      %2608 = vmatpush.msra.mxu0 %v2506
      %2609 = vmatpush.msra.mxu0 %v2505
      %2610 = vmatpush.msra.mxu0 %v2504
      %2611 = vmatpush.msra.mxu0 %v2503
      %2612 = vmatpush.msra.mxu0 %v2502
      %2613 = vmatpush.msra.mxu0 %v2501
      %2614 = vmatpush.msra.mxu0 %v2500
      %2615 = vmatpush.msra.mxu0 %v2499
      %2616 = vmatpush.msra.mxu0 %v2498
      %2617 = vmatpush.msra.mxu0 %v2497
      %2618 = vmatpush.msra.mxu0 %v2496
      %2619 = vmatpush.msra.mxu0 %v2495
      %2620 = vmatpush.msra.mxu0 %v2494
      %2621 = vmatpush.msra.mxu0 %v2493
      %2622 = vmatpush.msra.mxu0 %v2492
      %2623 = vmatmul.f32.gmra.mxu0 %v2544
      %v2624 = vpop.f32.mrf.mxu0
      %v2625 = vadd.f32 %v2605, %v2624
      %2626 = vdwg.mxu0
      %v2627 = vmul.f32 %v2585, %v438
      %v2628 = vmul.f32 %v2625, %v439
      %v2629 = vadd.f32 %v2346, %v2627
      %v2630 = vadd.f32 %v2347, %v2628
      %2631 = vrot.lane.b32.xlu0 %v1023, 15
      %v2632 = vpop.permute.xlu0 %2631
      %2633 = vrot.lane.b32.xlu0 %v1025, 15
      %v2634 = vpop.permute.xlu0 %2633
      %2635 = vrot.lane.b32.xlu0 %v1027, 15
      %v2636 = vpop.permute.xlu0 %2635
      %2637 = vrot.lane.b32.xlu0 %v1029, 15
      %v2638 = vpop.permute.xlu0 %2637
      %2639 = vrot.lane.b32.xlu0 %v1031, 15
      %v2640 = vpop.permute.xlu0 %2639
      %2641 = vrot.lane.b32.xlu0 %v1033, 15
      %v2642 = vpop.permute.xlu0 %2641
      %2643 = vrot.lane.b32.xlu0 %v1035, 15
      %v2644 = vpop.permute.xlu0 %2643
      %2645 = vrot.lane.b32.xlu0 %v1037, 15
      %v2646 = vpop.permute.xlu0 %2645
      %2647 = vrot.lane.b32.xlu0 %v1039, 15
      %v2648 = vpop.permute.xlu0 %2647
      %2649 = vrot.lane.b32.xlu0 %v1041, 15
      %v2650 = vpop.permute.xlu0 %2649
      %2651 = vrot.lane.b32.xlu0 %v1043, 15
      %v2652 = vpop.permute.xlu0 %2651
      %2653 = vrot.lane.b32.xlu0 %v1045, 15
      %v2654 = vpop.permute.xlu0 %2653
      %2655 = vrot.lane.b32.xlu0 %v1047, 15
      %v2656 = vpop.permute.xlu0 %2655
      %2657 = vrot.lane.b32.xlu0 %v1049, 15
      %v2658 = vpop.permute.xlu0 %2657
      %2659 = vrot.lane.b32.xlu0 %v1051, 15
      %v2660 = vpop.permute.xlu0 %2659
      %2661 = vrot.lane.b32.xlu0 %v1053, 15
      %v2662 = vpop.permute.xlu0 %2661
      %2663 = vrot.lane.b32.xlu0 %v1055, 15
      %v2664 = vpop.permute.xlu0 %2663
      %2665 = vrot.lane.b32.xlu0 %v1057, 15
      %v2666 = vpop.permute.xlu0 %2665
      %2667 = vrot.lane.b32.xlu0 %v1059, 15
      %v2668 = vpop.permute.xlu0 %2667
      %2669 = vrot.lane.b32.xlu0 %v1061, 15
      %v2670 = vpop.permute.xlu0 %2669
      %2671 = vrot.lane.b32.xlu0 %v1063, 15
      %v2672 = vpop.permute.xlu0 %2671
      %2673 = vrot.lane.b32.xlu0 %v1065, 15
      %v2674 = vpop.permute.xlu0 %2673
      %2675 = vrot.lane.b32.xlu0 %v1067, 15
      %v2676 = vpop.permute.xlu0 %2675
      %2677 = vrot.lane.b32.xlu0 %v1069, 15
      %v2678 = vpop.permute.xlu0 %2677
      %2679 = vrot.lane.b32.xlu0 %v1071, 15
      %v2680 = vpop.permute.xlu0 %2679
      %2681 = vrot.lane.b32.xlu0 %v1073, 15
      %v2682 = vpop.permute.xlu0 %2681
      %2683 = vrot.lane.b32.xlu0 %v1075, 15
      %v2684 = vpop.permute.xlu0 %2683
      %2685 = vrot.lane.b32.xlu0 %v1077, 15
      %v2686 = vpop.permute.xlu0 %2685
      %2687 = vrot.lane.b32.xlu0 %v1079, 15
      %v2688 = vpop.permute.xlu0 %2687
      %2689 = vrot.lane.b32.xlu0 %v1081, 15
      %v2690 = vpop.permute.xlu0 %2689
      %2691 = vrot.lane.b32.xlu0 %v1083, 15
      %v2692 = vpop.permute.xlu0 %2691
      %2693 = vrot.lane.b32.xlu0 %v1085, 15
      %v2694 = vpop.permute.xlu0 %2693
      %2695 = vrot.lane.b32.xlu0 %v1024, 15
      %v2696 = vpop.permute.xlu0 %2695
      %2697 = vrot.lane.b32.xlu0 %v1026, 15
      %v2698 = vpop.permute.xlu0 %2697
      %2699 = vrot.lane.b32.xlu0 %v1028, 15
      %v2700 = vpop.permute.xlu0 %2699
      %2701 = vrot.lane.b32.xlu0 %v1030, 15
      %v2702 = vpop.permute.xlu0 %2701
      %2703 = vrot.lane.b32.xlu0 %v1032, 15
      %v2704 = vpop.permute.xlu0 %2703
      %2705 = vrot.lane.b32.xlu0 %v1034, 15
      %v2706 = vpop.permute.xlu0 %2705
      %2707 = vrot.lane.b32.xlu0 %v1036, 15
      %v2708 = vpop.permute.xlu0 %2707
      %2709 = vrot.lane.b32.xlu0 %v1038, 15
      %v2710 = vpop.permute.xlu0 %2709
      %2711 = vrot.lane.b32.xlu0 %v1040, 15
      %v2712 = vpop.permute.xlu0 %2711
      %2713 = vrot.lane.b32.xlu0 %v1042, 15
      %v2714 = vpop.permute.xlu0 %2713
      %2715 = vrot.lane.b32.xlu0 %v1044, 15
      %v2716 = vpop.permute.xlu0 %2715
      %2717 = vrot.lane.b32.xlu0 %v1046, 15
      %v2718 = vpop.permute.xlu0 %2717
      %2719 = vrot.lane.b32.xlu0 %v1048, 15
      %v2720 = vpop.permute.xlu0 %2719
      %2721 = vrot.lane.b32.xlu0 %v1050, 15
      %v2722 = vpop.permute.xlu0 %2721
      %2723 = vrot.lane.b32.xlu0 %v1052, 15
      %v2724 = vpop.permute.xlu0 %2723
      %2725 = vrot.lane.b32.xlu0 %v1054, 15
      %v2726 = vpop.permute.xlu0 %2725
      %2727 = vrot.lane.b32.xlu0 %v1056, 15
      %v2728 = vpop.permute.xlu0 %2727
      %2729 = vrot.lane.b32.xlu0 %v1058, 15
      %v2730 = vpop.permute.xlu0 %2729
      %2731 = vrot.lane.b32.xlu0 %v1060, 15
      %v2732 = vpop.permute.xlu0 %2731
      %2733 = vrot.lane.b32.xlu0 %v1062, 15
      %v2734 = vpop.permute.xlu0 %2733
      %2735 = vrot.lane.b32.xlu0 %v1064, 15
      %v2736 = vpop.permute.xlu0 %2735
      %2737 = vrot.lane.b32.xlu0 %v1066, 15
      %v2738 = vpop.permute.xlu0 %2737
      %2739 = vrot.lane.b32.xlu0 %v1068, 15
      %v2740 = vpop.permute.xlu0 %2739
      %2741 = vrot.lane.b32.xlu0 %v1070, 15
      %v2742 = vpop.permute.xlu0 %2741
      %2743 = vrot.lane.b32.xlu0 %v1072, 15
      %v2744 = vpop.permute.xlu0 %2743
      %2745 = vrot.lane.b32.xlu0 %v1074, 15
      %v2746 = vpop.permute.xlu0 %2745
      %2747 = vrot.lane.b32.xlu0 %v1076, 15
      %v2748 = vpop.permute.xlu0 %2747
      %2749 = vrot.lane.b32.xlu0 %v1078, 15
      %v2750 = vpop.permute.xlu0 %2749
      %2751 = vrot.lane.b32.xlu0 %v1080, 15
      %v2752 = vpop.permute.xlu0 %2751
      %2753 = vrot.lane.b32.xlu0 %v1082, 15
      %v2754 = vpop.permute.xlu0 %2753
      %2755 = vrot.lane.b32.xlu0 %v1084, 15
      %v2756 = vpop.permute.xlu0 %2755
      %2757 = vrot.lane.b32.xlu0 %v1086, 15
      %v2758 = vpop.permute.xlu0 %2757
      %v2759 = vsel %vm446, %v2632, %v2696
      %v2760 = vsel %vm446, %v2634, %v2698
      %v2761 = vsel %vm446, %v2636, %v2700
      %v2762 = vsel %vm446, %v2638, %v2702
      %v2763 = vsel %vm446, %v2640, %v2704
      %v2764 = vsel %vm446, %v2642, %v2706
      %v2765 = vsel %vm446, %v2644, %v2708
      %v2766 = vsel %vm446, %v2646, %v2710
      %v2767 = vsel %vm446, %v2648, %v2712
      %v2768 = vsel %vm446, %v2650, %v2714
      %v2769 = vsel %vm446, %v2652, %v2716
      %v2770 = vsel %vm446, %v2654, %v2718
      %v2771 = vsel %vm446, %v2656, %v2720
      %v2772 = vsel %vm446, %v2658, %v2722
      %v2773 = vsel %vm446, %v2660, %v2724
      %v2774 = vsel %vm446, %v2662, %v2726
      %v2775 = vsel %vm446, %v2664, %v2728
      %v2776 = vsel %vm446, %v2666, %v2730
      %v2777 = vsel %vm446, %v2668, %v2732
      %v2778 = vsel %vm446, %v2670, %v2734
      %v2779 = vsel %vm446, %v2672, %v2736
      %v2780 = vsel %vm446, %v2674, %v2738
      %v2781 = vsel %vm446, %v2676, %v2740
      %v2782 = vsel %vm446, %v2678, %v2742
      %v2783 = vsel %vm446, %v2680, %v2744
      %v2784 = vsel %vm446, %v2682, %v2746
      %v2785 = vsel %vm446, %v2684, %v2748
      %v2786 = vsel %vm446, %v2686, %v2750
      %v2787 = vsel %vm446, %v2688, %v2752
      %v2788 = vsel %vm446, %v2690, %v2754
      %v2789 = vsel %vm446, %v2692, %v2756
      %v2790 = vsel %vm446, %v2694, %v2758
      %v2791 = vsel %vm446, %v2696, %v2632
      %v2792 = vsel %vm446, %v2698, %v2634
      %v2793 = vsel %vm446, %v2700, %v2636
      %v2794 = vsel %vm446, %v2702, %v2638
      %v2795 = vsel %vm446, %v2704, %v2640
      %v2796 = vsel %vm446, %v2706, %v2642
      %v2797 = vsel %vm446, %v2708, %v2644
      %v2798 = vsel %vm446, %v2710, %v2646
      %v2799 = vsel %vm446, %v2712, %v2648
      %v2800 = vsel %vm446, %v2714, %v2650
      %v2801 = vsel %vm446, %v2716, %v2652
      %v2802 = vsel %vm446, %v2718, %v2654
      %v2803 = vsel %vm446, %v2720, %v2656
      %v2804 = vsel %vm446, %v2722, %v2658
      %v2805 = vsel %vm446, %v2724, %v2660
      %v2806 = vsel %vm446, %v2726, %v2662
      %v2807 = vsel %vm446, %v2728, %v2664
      %v2808 = vsel %vm446, %v2730, %v2666
      %v2809 = vsel %vm446, %v2732, %v2668
      %v2810 = vsel %vm446, %v2734, %v2670
      %v2811 = vsel %vm446, %v2736, %v2672
      %v2812 = vsel %vm446, %v2738, %v2674
      %v2813 = vsel %vm446, %v2740, %v2676
      %v2814 = vsel %vm446, %v2742, %v2678
      %v2815 = vsel %vm446, %v2744, %v2680
      %v2816 = vsel %vm446, %v2746, %v2682
      %v2817 = vsel %vm446, %v2748, %v2684
      %v2818 = vsel %vm446, %v2750, %v2686
      %v2819 = vsel %vm446, %v2752, %v2688
      %v2820 = vsel %vm446, %v2754, %v2690
      %v2821 = vsel %vm446, %v2756, %v2692
      %v2822 = vsel %vm446, %v2758, %v2694
      %v2823 = vld [vmem:[%s7 + $0x10] sm:$0xff]
      %2825 = vst [vmem:[#allocation1] ss:$2 sm:$0xff] %v2823
      %v2826 = vld.sshfl [vmem:[#allocation1] sm:$0xff pattern:$0x75316420]
      %v2827 = vld.sshfl [vmem:[#allocation1 + $0x8] sm:$0xff pattern:$0x75316420]
      %2830 = vmatpush.msra.mxu0 %v2806
      %2831 = vmatpush.msra.mxu0 %v2805
      %2832 = vmatpush.msra.mxu0 %v2804
      %2833 = vmatpush.msra.mxu0 %v2803
      %2834 = vmatpush.msra.mxu0 %v2802
      %2835 = vmatpush.msra.mxu0 %v2801
      %2836 = vmatpush.msra.mxu0 %v2800
      %2837 = vmatpush.msra.mxu0 %v2799
      %2838 = vmatpush.msra.mxu0 %v2798
      %2839 = vmatpush.msra.mxu0 %v2797
      %2840 = vmatpush.msra.mxu0 %v2796
      %2841 = vmatpush.msra.mxu0 %v2795
      %2842 = vmatpush.msra.mxu0 %v2794
      %2843 = vmatpush.msra.mxu0 %v2793
      %2844 = vmatpush.msra.mxu0 %v2792
      %2845 = vmatpush.msra.mxu0 %v2791
      %2846 = vmatmul.f32.gmra.mxu0 %v2826
      %v2847 = vpop.f32.mrf.mxu0
      %v2848 = vadd.f32 0.0, %v2847
      %2849 = vdwg.mxu0
      %2850 = vmatpush.msra.mxu0 %v2822
      %2851 = vmatpush.msra.mxu0 %v2821
      %2852 = vmatpush.msra.mxu0 %v2820
      %2853 = vmatpush.msra.mxu0 %v2819
      %2854 = vmatpush.msra.mxu0 %v2818
      %2855 = vmatpush.msra.mxu0 %v2817
      %2856 = vmatpush.msra.mxu0 %v2816
      %2857 = vmatpush.msra.mxu0 %v2815
      %2858 = vmatpush.msra.mxu0 %v2814
      %2859 = vmatpush.msra.mxu0 %v2813
      %2860 = vmatpush.msra.mxu0 %v2812
      %2861 = vmatpush.msra.mxu0 %v2811
      %2862 = vmatpush.msra.mxu0 %v2810
      %2863 = vmatpush.msra.mxu0 %v2809
      %2864 = vmatpush.msra.mxu0 %v2808
      %2865 = vmatpush.msra.mxu0 %v2807
      %2866 = vmatmul.f32.gmra.mxu0 %v2827
      %v2867 = vpop.f32.mrf.mxu0
      %v2868 = vadd.f32 %v2848, %v2867
      %2869 = vdwg.mxu0
      %2870 = vmatpush.msra.mxu0 %v2774
      %2871 = vmatpush.msra.mxu0 %v2773
      %2872 = vmatpush.msra.mxu0 %v2772
      %2873 = vmatpush.msra.mxu0 %v2771
      %2874 = vmatpush.msra.mxu0 %v2770
      %2875 = vmatpush.msra.mxu0 %v2769
      %2876 = vmatpush.msra.mxu0 %v2768
      %2877 = vmatpush.msra.mxu0 %v2767
      %2878 = vmatpush.msra.mxu0 %v2766
      %2879 = vmatpush.msra.mxu0 %v2765
      %2880 = vmatpush.msra.mxu0 %v2764
      %2881 = vmatpush.msra.mxu0 %v2763
      %2882 = vmatpush.msra.mxu0 %v2762
      %2883 = vmatpush.msra.mxu0 %v2761
      %2884 = vmatpush.msra.mxu0 %v2760
      %2885 = vmatpush.msra.mxu0 %v2759
      %2886 = vmatmul.f32.gmra.mxu0 %v2826
      %v2887 = vpop.f32.mrf.mxu0
      %v2888 = vadd.f32 0.0, %v2887
      %2889 = vdwg.mxu0
      %2890 = vmatpush.msra.mxu0 %v2790
      %2891 = vmatpush.msra.mxu0 %v2789
      %2892 = vmatpush.msra.mxu0 %v2788
      %2893 = vmatpush.msra.mxu0 %v2787
      %2894 = vmatpush.msra.mxu0 %v2786
      %2895 = vmatpush.msra.mxu0 %v2785
      %2896 = vmatpush.msra.mxu0 %v2784
      %2897 = vmatpush.msra.mxu0 %v2783
      %2898 = vmatpush.msra.mxu0 %v2782
      %2899 = vmatpush.msra.mxu0 %v2781
      %2900 = vmatpush.msra.mxu0 %v2780
      %2901 = vmatpush.msra.mxu0 %v2779
      %2902 = vmatpush.msra.mxu0 %v2778
      %2903 = vmatpush.msra.mxu0 %v2777
      %2904 = vmatpush.msra.mxu0 %v2776
      %2905 = vmatpush.msra.mxu0 %v2775
      %2906 = vmatmul.f32.gmra.mxu0 %v2827
      %v2907 = vpop.f32.mrf.mxu0
      %v2908 = vadd.f32 %v2888, %v2907
      %2909 = vdwg.mxu0
      %v2910 = vmul.f32 %v2868, %v449
      %v2911 = vmul.f32 %v2908, %v450
      %v2912 = vadd.f32 %v2629, %v2910
      %v2913 = vadd.f32 %v2630, %v2911
      %2914 = vrot.lane.b32.xlu0 %v1023, 1
      %v2915 = vpop.permute.xlu0 %2914
      %2916 = vrot.lane.b32.xlu0 %v1025, 1
      %v2917 = vpop.permute.xlu0 %2916
      %2918 = vrot.lane.b32.xlu0 %v1027, 1
      %v2919 = vpop.permute.xlu0 %2918
      %2920 = vrot.lane.b32.xlu0 %v1029, 1
      %v2921 = vpop.permute.xlu0 %2920
      %2922 = vrot.lane.b32.xlu0 %v1031, 1
      %v2923 = vpop.permute.xlu0 %2922
      %2924 = vrot.lane.b32.xlu0 %v1033, 1
      %v2925 = vpop.permute.xlu0 %2924
      %2926 = vrot.lane.b32.xlu0 %v1035, 1
      %v2927 = vpop.permute.xlu0 %2926
      %2928 = vrot.lane.b32.xlu0 %v1037, 1
      %v2929 = vpop.permute.xlu0 %2928
      %2930 = vrot.lane.b32.xlu0 %v1039, 1
      %v2931 = vpop.permute.xlu0 %2930
      %2932 = vrot.lane.b32.xlu0 %v1041, 1
      %v2933 = vpop.permute.xlu0 %2932
      %2934 = vrot.lane.b32.xlu0 %v1043, 1
      %v2935 = vpop.permute.xlu0 %2934
      %2936 = vrot.lane.b32.xlu0 %v1045, 1
      %v2937 = vpop.permute.xlu0 %2936
      %2938 = vrot.lane.b32.xlu0 %v1047, 1
      %v2939 = vpop.permute.xlu0 %2938
      %2940 = vrot.lane.b32.xlu0 %v1049, 1
      %v2941 = vpop.permute.xlu0 %2940
      %2942 = vrot.lane.b32.xlu0 %v1051, 1
      %v2943 = vpop.permute.xlu0 %2942
      %2944 = vrot.lane.b32.xlu0 %v1053, 1
      %v2945 = vpop.permute.xlu0 %2944
      %2946 = vrot.lane.b32.xlu0 %v1055, 1
      %v2947 = vpop.permute.xlu0 %2946
      %2948 = vrot.lane.b32.xlu0 %v1057, 1
      %v2949 = vpop.permute.xlu0 %2948
      %2950 = vrot.lane.b32.xlu0 %v1059, 1
      %v2951 = vpop.permute.xlu0 %2950
      %2952 = vrot.lane.b32.xlu0 %v1061, 1
      %v2953 = vpop.permute.xlu0 %2952
      %2954 = vrot.lane.b32.xlu0 %v1063, 1
      %v2955 = vpop.permute.xlu0 %2954
      %2956 = vrot.lane.b32.xlu0 %v1065, 1
      %v2957 = vpop.permute.xlu0 %2956
      %2958 = vrot.lane.b32.xlu0 %v1067, 1
      %v2959 = vpop.permute.xlu0 %2958
      %2960 = vrot.lane.b32.xlu0 %v1069, 1
      %v2961 = vpop.permute.xlu0 %2960
      %2962 = vrot.lane.b32.xlu0 %v1071, 1
      %v2963 = vpop.permute.xlu0 %2962
      %2964 = vrot.lane.b32.xlu0 %v1073, 1
      %v2965 = vpop.permute.xlu0 %2964
      %2966 = vrot.lane.b32.xlu0 %v1075, 1
      %v2967 = vpop.permute.xlu0 %2966
      %2968 = vrot.lane.b32.xlu0 %v1077, 1
      %v2969 = vpop.permute.xlu0 %2968
      %2970 = vrot.lane.b32.xlu0 %v1079, 1
      %v2971 = vpop.permute.xlu0 %2970
      %2972 = vrot.lane.b32.xlu0 %v1081, 1
      %v2973 = vpop.permute.xlu0 %2972
      %2974 = vrot.lane.b32.xlu0 %v1083, 1
      %v2975 = vpop.permute.xlu0 %2974
      %2976 = vrot.lane.b32.xlu0 %v1085, 1
      %v2977 = vpop.permute.xlu0 %2976
      %2978 = vrot.lane.b32.xlu0 %v1024, 1
      %v2979 = vpop.permute.xlu0 %2978
      %2980 = vrot.lane.b32.xlu0 %v1026, 1
      %v2981 = vpop.permute.xlu0 %2980
      %2982 = vrot.lane.b32.xlu0 %v1028, 1
      %v2983 = vpop.permute.xlu0 %2982
      %2984 = vrot.lane.b32.xlu0 %v1030, 1
      %v2985 = vpop.permute.xlu0 %2984
      %2986 = vrot.lane.b32.xlu0 %v1032, 1
      %v2987 = vpop.permute.xlu0 %2986
      %2988 = vrot.lane.b32.xlu0 %v1034, 1
      %v2989 = vpop.permute.xlu0 %2988
      %2990 = vrot.lane.b32.xlu0 %v1036, 1
      %v2991 = vpop.permute.xlu0 %2990
      %2992 = vrot.lane.b32.xlu0 %v1038, 1
      %v2993 = vpop.permute.xlu0 %2992
      %2994 = vrot.lane.b32.xlu0 %v1040, 1
      %v2995 = vpop.permute.xlu0 %2994
      %2996 = vrot.lane.b32.xlu0 %v1042, 1
      %v2997 = vpop.permute.xlu0 %2996
      %2998 = vrot.lane.b32.xlu0 %v1044, 1
      %v2999 = vpop.permute.xlu0 %2998
      %3000 = vrot.lane.b32.xlu0 %v1046, 1
      %v3001 = vpop.permute.xlu0 %3000
      %3002 = vrot.lane.b32.xlu0 %v1048, 1
      %v3003 = vpop.permute.xlu0 %3002
      %3004 = vrot.lane.b32.xlu0 %v1050, 1
      %v3005 = vpop.permute.xlu0 %3004
      %3006 = vrot.lane.b32.xlu0 %v1052, 1
      %v3007 = vpop.permute.xlu0 %3006
      %3008 = vrot.lane.b32.xlu0 %v1054, 1
      %v3009 = vpop.permute.xlu0 %3008
      %3010 = vrot.lane.b32.xlu0 %v1056, 1
      %v3011 = vpop.permute.xlu0 %3010
      %3012 = vrot.lane.b32.xlu0 %v1058, 1
      %v3013 = vpop.permute.xlu0 %3012
      %3014 = vrot.lane.b32.xlu0 %v1060, 1
      %v3015 = vpop.permute.xlu0 %3014
      %3016 = vrot.lane.b32.xlu0 %v1062, 1
      %v3017 = vpop.permute.xlu0 %3016
      %3018 = vrot.lane.b32.xlu0 %v1064, 1
      %v3019 = vpop.permute.xlu0 %3018
      %3020 = vrot.lane.b32.xlu0 %v1066, 1
      %v3021 = vpop.permute.xlu0 %3020
      %3022 = vrot.lane.b32.xlu0 %v1068, 1
      %v3023 = vpop.permute.xlu0 %3022
      %3024 = vrot.lane.b32.xlu0 %v1070, 1
      %v3025 = vpop.permute.xlu0 %3024
      %3026 = vrot.lane.b32.xlu0 %v1072, 1
      %v3027 = vpop.permute.xlu0 %3026
      %3028 = vrot.lane.b32.xlu0 %v1074, 1
      %v3029 = vpop.permute.xlu0 %3028
      %3030 = vrot.lane.b32.xlu0 %v1076, 1
      %v3031 = vpop.permute.xlu0 %3030
      %3032 = vrot.lane.b32.xlu0 %v1078, 1
      %v3033 = vpop.permute.xlu0 %3032
      %3034 = vrot.lane.b32.xlu0 %v1080, 1
      %v3035 = vpop.permute.xlu0 %3034
      %3036 = vrot.lane.b32.xlu0 %v1082, 1
      %v3037 = vpop.permute.xlu0 %3036
      %3038 = vrot.lane.b32.xlu0 %v1084, 1
      %v3039 = vpop.permute.xlu0 %3038
      %3040 = vrot.lane.b32.xlu0 %v1086, 1
      %v3041 = vpop.permute.xlu0 %3040
      %v3042 = vsel %vm457, %v2915, %v2979
      %v3043 = vsel %vm457, %v2917, %v2981
      %v3044 = vsel %vm457, %v2919, %v2983
      %v3045 = vsel %vm457, %v2921, %v2985
      %v3046 = vsel %vm457, %v2923, %v2987
      %v3047 = vsel %vm457, %v2925, %v2989
      %v3048 = vsel %vm457, %v2927, %v2991
      %v3049 = vsel %vm457, %v2929, %v2993
      %v3050 = vsel %vm457, %v2931, %v2995
      %v3051 = vsel %vm457, %v2933, %v2997
      %v3052 = vsel %vm457, %v2935, %v2999
      %v3053 = vsel %vm457, %v2937, %v3001
      %v3054 = vsel %vm457, %v2939, %v3003
      %v3055 = vsel %vm457, %v2941, %v3005
      %v3056 = vsel %vm457, %v2943, %v3007
      %v3057 = vsel %vm457, %v2945, %v3009
      %v3058 = vsel %vm457, %v2947, %v3011
      %v3059 = vsel %vm457, %v2949, %v3013
      %v3060 = vsel %vm457, %v2951, %v3015
      %v3061 = vsel %vm457, %v2953, %v3017
      %v3062 = vsel %vm457, %v2955, %v3019
      %v3063 = vsel %vm457, %v2957, %v3021
      %v3064 = vsel %vm457, %v2959, %v3023
      %v3065 = vsel %vm457, %v2961, %v3025
      %v3066 = vsel %vm457, %v2963, %v3027
      %v3067 = vsel %vm457, %v2965, %v3029
      %v3068 = vsel %vm457, %v2967, %v3031
      %v3069 = vsel %vm457, %v2969, %v3033
      %v3070 = vsel %vm457, %v2971, %v3035
      %v3071 = vsel %vm457, %v2973, %v3037
      %v3072 = vsel %vm457, %v2975, %v3039
      %v3073 = vsel %vm457, %v2977, %v3041
      %v3074 = vsel %vm457, %v2979, %v2915
      %v3075 = vsel %vm457, %v2981, %v2917
      %v3076 = vsel %vm457, %v2983, %v2919
      %v3077 = vsel %vm457, %v2985, %v2921
      %v3078 = vsel %vm457, %v2987, %v2923
      %v3079 = vsel %vm457, %v2989, %v2925
      %v3080 = vsel %vm457, %v2991, %v2927
      %v3081 = vsel %vm457, %v2993, %v2929
      %v3082 = vsel %vm457, %v2995, %v2931
      %v3083 = vsel %vm457, %v2997, %v2933
      %v3084 = vsel %vm457, %v2999, %v2935
      %v3085 = vsel %vm457, %v3001, %v2937
      %v3086 = vsel %vm457, %v3003, %v2939
      %v3087 = vsel %vm457, %v3005, %v2941
      %v3088 = vsel %vm457, %v3007, %v2943
      %v3089 = vsel %vm457, %v3009, %v2945
      %v3090 = vsel %vm457, %v3011, %v2947
      %v3091 = vsel %vm457, %v3013, %v2949
      %v3092 = vsel %vm457, %v3015, %v2951
      %v3093 = vsel %vm457, %v3017, %v2953
      %v3094 = vsel %vm457, %v3019, %v2955
      %v3095 = vsel %vm457, %v3021, %v2957
      %v3096 = vsel %vm457, %v3023, %v2959
      %v3097 = vsel %vm457, %v3025, %v2961
      %v3098 = vsel %vm457, %v3027, %v2963
      %v3099 = vsel %vm457, %v3029, %v2965
      %v3100 = vsel %vm457, %v3031, %v2967
      %v3101 = vsel %vm457, %v3033, %v2969
      %v3102 = vsel %vm457, %v3035, %v2971
      %v3103 = vsel %vm457, %v3037, %v2973
      %v3104 = vsel %vm457, %v3039, %v2975
      %v3105 = vsel %vm457, %v3041, %v2977
      %v3106 = vld [vmem:[%s7 + $0x18] sm:$0xff]
      %3108 = vst [vmem:[#allocation1] ss:$2 sm:$0xff] %v3106
      %v3109 = vld.sshfl [vmem:[#allocation1] sm:$0xff pattern:$0x75316420]
      %v3110 = vld.sshfl [vmem:[#allocation1 + $0x8] sm:$0xff pattern:$0x75316420]
      %3113 = vmatpush.msra.mxu0 %v3089
      %3114 = vmatpush.msra.mxu0 %v3088
      %3115 = vmatpush.msra.mxu0 %v3087
      %3116 = vmatpush.msra.mxu0 %v3086
      %3117 = vmatpush.msra.mxu0 %v3085
      %3118 = vmatpush.msra.mxu0 %v3084
      %3119 = vmatpush.msra.mxu0 %v3083
      %3120 = vmatpush.msra.mxu0 %v3082
      %3121 = vmatpush.msra.mxu0 %v3081
      %3122 = vmatpush.msra.mxu0 %v3080
      %3123 = vmatpush.msra.mxu0 %v3079
      %3124 = vmatpush.msra.mxu0 %v3078
      %3125 = vmatpush.msra.mxu0 %v3077
      %3126 = vmatpush.msra.mxu0 %v3076
      %3127 = vmatpush.msra.mxu0 %v3075
      %3128 = vmatpush.msra.mxu0 %v3074
      %3129 = vmatmul.f32.gmra.mxu0 %v3109
      %v3130 = vpop.f32.mrf.mxu0
      %v3131 = vadd.f32 0.0, %v3130
      %3132 = vdwg.mxu0
      %3133 = vmatpush.msra.mxu0 %v3105
      %3134 = vmatpush.msra.mxu0 %v3104
      %3135 = vmatpush.msra.mxu0 %v3103
      %3136 = vmatpush.msra.mxu0 %v3102
      %3137 = vmatpush.msra.mxu0 %v3101
      %3138 = vmatpush.msra.mxu0 %v3100
      %3139 = vmatpush.msra.mxu0 %v3099
      %3140 = vmatpush.msra.mxu0 %v3098
      %3141 = vmatpush.msra.mxu0 %v3097
      %3142 = vmatpush.msra.mxu0 %v3096
      %3143 = vmatpush.msra.mxu0 %v3095
      %3144 = vmatpush.msra.mxu0 %v3094
      %3145 = vmatpush.msra.mxu0 %v3093
      %3146 = vmatpush.msra.mxu0 %v3092
      %3147 = vmatpush.msra.mxu0 %v3091
      %3148 = vmatpush.msra.mxu0 %v3090
      %3149 = vmatmul.f32.gmra.mxu0 %v3110
      %v3150 = vpop.f32.mrf.mxu0
      %v3151 = vadd.f32 %v3131, %v3150
      %3152 = vdwg.mxu0
      %3153 = vmatpush.msra.mxu0 %v3057
      %3154 = vmatpush.msra.mxu0 %v3056
      %3155 = vmatpush.msra.mxu0 %v3055
      %3156 = vmatpush.msra.mxu0 %v3054
      %3157 = vmatpush.msra.mxu0 %v3053
      %3158 = vmatpush.msra.mxu0 %v3052
      %3159 = vmatpush.msra.mxu0 %v3051
      %3160 = vmatpush.msra.mxu0 %v3050
      %3161 = vmatpush.msra.mxu0 %v3049
      %3162 = vmatpush.msra.mxu0 %v3048
      %3163 = vmatpush.msra.mxu0 %v3047
      %3164 = vmatpush.msra.mxu0 %v3046
      %3165 = vmatpush.msra.mxu0 %v3045
      %3166 = vmatpush.msra.mxu0 %v3044
      %3167 = vmatpush.msra.mxu0 %v3043
      %3168 = vmatpush.msra.mxu0 %v3042
      %3169 = vmatmul.f32.gmra.mxu0 %v3109
      %v3170 = vpop.f32.mrf.mxu0
      %v3171 = vadd.f32 0.0, %v3170
      %3172 = vdwg.mxu0
      %3173 = vmatpush.msra.mxu0 %v3073
      %3174 = vmatpush.msra.mxu0 %v3072
      %3175 = vmatpush.msra.mxu0 %v3071
      %3176 = vmatpush.msra.mxu0 %v3070
      %3177 = vmatpush.msra.mxu0 %v3069
      %3178 = vmatpush.msra.mxu0 %v3068
      %3179 = vmatpush.msra.mxu0 %v3067
      %3180 = vmatpush.msra.mxu0 %v3066
      %3181 = vmatpush.msra.mxu0 %v3065
      %3182 = vmatpush.msra.mxu0 %v3064
      %3183 = vmatpush.msra.mxu0 %v3063
      %3184 = vmatpush.msra.mxu0 %v3062
      %3185 = vmatpush.msra.mxu0 %v3061
      %3186 = vmatpush.msra.mxu0 %v3060
      %3187 = vmatpush.msra.mxu0 %v3059
      %3188 = vmatpush.msra.mxu0 %v3058
      %3189 = vmatmul.f32.gmra.mxu0 %v3110
      %v3190 = vpop.f32.mrf.mxu0
      %v3191 = vadd.f32 %v3171, %v3190
      %3192 = vdwg.mxu0
      %v3193 = vmul.f32 %v3151, %v460
      %v3194 = vmul.f32 %v3191, %v461
      %v3195 = vadd.f32 %v2912, %v3193
      %v3196 = vadd.f32 %v2913, %v3194
      %v3197 = vld [vmem:[%s7 + $0x20] sm:$0xff]
      %3199 = vst [vmem:[#allocation1] ss:$2 sm:$0xff] %v3197
      %v3200 = vld.sshfl [vmem:[#allocation1] sm:$0xff pattern:$0x75316420]
      %v3201 = vld.sshfl [vmem:[#allocation1 + $0x8] sm:$0xff pattern:$0x75316420]
      %3204 = vmatpush.msra.mxu0 %v1053
      %3205 = vmatpush.msra.mxu0 %v1051
      %3206 = vmatpush.msra.mxu0 %v1049
      %3207 = vmatpush.msra.mxu0 %v1047
      %3208 = vmatpush.msra.mxu0 %v1045
      %3209 = vmatpush.msra.mxu0 %v1043
      %3210 = vmatpush.msra.mxu0 %v1041
      %3211 = vmatpush.msra.mxu0 %v1039
      %3212 = vmatpush.msra.mxu0 %v1037
      %3213 = vmatpush.msra.mxu0 %v1035
      %3214 = vmatpush.msra.mxu0 %v1033
      %3215 = vmatpush.msra.mxu0 %v1031
      %3216 = vmatpush.msra.mxu0 %v1029
      %3217 = vmatpush.msra.mxu0 %v1027
      %3218 = vmatpush.msra.mxu0 %v1025
      %3219 = vmatpush.msra.mxu0 %v1023
      %3220 = vmatmul.f32.gmra.mxu0 %v3200
      %v3221 = vpop.f32.mrf.mxu0
      %v3222 = vadd.f32 0.0, %v3221
      %3223 = vdwg.mxu0
      %3224 = vmatpush.msra.mxu0 %v1085
      %3225 = vmatpush.msra.mxu0 %v1083
      %3226 = vmatpush.msra.mxu0 %v1081
      %3227 = vmatpush.msra.mxu0 %v1079
      %3228 = vmatpush.msra.mxu0 %v1077
      %3229 = vmatpush.msra.mxu0 %v1075
      %3230 = vmatpush.msra.mxu0 %v1073
      %3231 = vmatpush.msra.mxu0 %v1071
      %3232 = vmatpush.msra.mxu0 %v1069
      %3233 = vmatpush.msra.mxu0 %v1067
      %3234 = vmatpush.msra.mxu0 %v1065
      %3235 = vmatpush.msra.mxu0 %v1063
      %3236 = vmatpush.msra.mxu0 %v1061
      %3237 = vmatpush.msra.mxu0 %v1059
      %3238 = vmatpush.msra.mxu0 %v1057
      %3239 = vmatpush.msra.mxu0 %v1055
      %3240 = vmatmul.f32.gmra.mxu0 %v3201
      %v3241 = vpop.f32.mrf.mxu0
      %v3242 = vadd.f32 %v3222, %v3241
      %3243 = vdwg.mxu0
      %3244 = vmatpush.msra.mxu0 %v1054
      %3245 = vmatpush.msra.mxu0 %v1052
      %3246 = vmatpush.msra.mxu0 %v1050
      %3247 = vmatpush.msra.mxu0 %v1048
      %3248 = vmatpush.msra.mxu0 %v1046
      %3249 = vmatpush.msra.mxu0 %v1044
      %3250 = vmatpush.msra.mxu0 %v1042
      %3251 = vmatpush.msra.mxu0 %v1040
      %3252 = vmatpush.msra.mxu0 %v1038
      %3253 = vmatpush.msra.mxu0 %v1036
      %3254 = vmatpush.msra.mxu0 %v1034
      %3255 = vmatpush.msra.mxu0 %v1032
      %3256 = vmatpush.msra.mxu0 %v1030
      %3257 = vmatpush.msra.mxu0 %v1028
      %3258 = vmatpush.msra.mxu0 %v1026
      %3259 = vmatpush.msra.mxu0 %v1024
      %3260 = vmatmul.f32.gmra.mxu0 %v3200
      %v3261 = vpop.f32.mrf.mxu0
      %v3262 = vadd.f32 0.0, %v3261
      %3263 = vdwg.mxu0
      %3264 = vmatpush.msra.mxu0 %v1086
      %3265 = vmatpush.msra.mxu0 %v1084
      %3266 = vmatpush.msra.mxu0 %v1082
      %3267 = vmatpush.msra.mxu0 %v1080
      %3268 = vmatpush.msra.mxu0 %v1078
      %3269 = vmatpush.msra.mxu0 %v1076
      %3270 = vmatpush.msra.mxu0 %v1074
      %3271 = vmatpush.msra.mxu0 %v1072
      %3272 = vmatpush.msra.mxu0 %v1070
      %3273 = vmatpush.msra.mxu0 %v1068
      %3274 = vmatpush.msra.mxu0 %v1066
      %3275 = vmatpush.msra.mxu0 %v1064
      %3276 = vmatpush.msra.mxu0 %v1062
      %3277 = vmatpush.msra.mxu0 %v1060
      %3278 = vmatpush.msra.mxu0 %v1058
      %3279 = vmatpush.msra.mxu0 %v1056
      %3280 = vmatmul.f32.gmra.mxu0 %v3201
      %v3281 = vpop.f32.mrf.mxu0
      %v3282 = vadd.f32 %v3262, %v3281
      %3283 = vdwg.mxu0
      %v3284 = vadd.f32 %v3195, %v3242
      %v3285 = vadd.f32 %v3196, %v3282
      %3286 = vrot.lane.b32.xlu0 %v1023, 127
      %v3287 = vpop.permute.xlu0 %3286
      %3288 = vrot.lane.b32.xlu0 %v1025, 127
      %v3289 = vpop.permute.xlu0 %3288
      %3290 = vrot.lane.b32.xlu0 %v1027, 127
      %v3291 = vpop.permute.xlu0 %3290
      %3292 = vrot.lane.b32.xlu0 %v1029, 127
      %v3293 = vpop.permute.xlu0 %3292
      %3294 = vrot.lane.b32.xlu0 %v1031, 127
      %v3295 = vpop.permute.xlu0 %3294
      %3296 = vrot.lane.b32.xlu0 %v1033, 127
      %v3297 = vpop.permute.xlu0 %3296
      %3298 = vrot.lane.b32.xlu0 %v1035, 127
      %v3299 = vpop.permute.xlu0 %3298
      %3300 = vrot.lane.b32.xlu0 %v1037, 127
      %v3301 = vpop.permute.xlu0 %3300
      %3302 = vrot.lane.b32.xlu0 %v1039, 127
      %v3303 = vpop.permute.xlu0 %3302
      %3304 = vrot.lane.b32.xlu0 %v1041, 127
      %v3305 = vpop.permute.xlu0 %3304
      %3306 = vrot.lane.b32.xlu0 %v1043, 127
      %v3307 = vpop.permute.xlu0 %3306
      %3308 = vrot.lane.b32.xlu0 %v1045, 127
      %v3309 = vpop.permute.xlu0 %3308
      %3310 = vrot.lane.b32.xlu0 %v1047, 127
      %v3311 = vpop.permute.xlu0 %3310
      %3312 = vrot.lane.b32.xlu0 %v1049, 127
      %v3313 = vpop.permute.xlu0 %3312
      %3314 = vrot.lane.b32.xlu0 %v1051, 127
      %v3315 = vpop.permute.xlu0 %3314
      %3316 = vrot.lane.b32.xlu0 %v1053, 127
      %v3317 = vpop.permute.xlu0 %3316
      %3318 = vrot.lane.b32.xlu0 %v1055, 127
      %v3319 = vpop.permute.xlu0 %3318
      %3320 = vrot.lane.b32.xlu0 %v1057, 127
      %v3321 = vpop.permute.xlu0 %3320
      %3322 = vrot.lane.b32.xlu0 %v1059, 127
      %v3323 = vpop.permute.xlu0 %3322
      %3324 = vrot.lane.b32.xlu0 %v1061, 127
      %v3325 = vpop.permute.xlu0 %3324
      %3326 = vrot.lane.b32.xlu0 %v1063, 127
      %v3327 = vpop.permute.xlu0 %3326
      %3328 = vrot.lane.b32.xlu0 %v1065, 127
      %v3329 = vpop.permute.xlu0 %3328
      %3330 = vrot.lane.b32.xlu0 %v1067, 127
      %v3331 = vpop.permute.xlu0 %3330
      %3332 = vrot.lane.b32.xlu0 %v1069, 127
      %v3333 = vpop.permute.xlu0 %3332
      %3334 = vrot.lane.b32.xlu0 %v1071, 127
      %v3335 = vpop.permute.xlu0 %3334
      %3336 = vrot.lane.b32.xlu0 %v1073, 127
      %v3337 = vpop.permute.xlu0 %3336
      %3338 = vrot.lane.b32.xlu0 %v1075, 127
      %v3339 = vpop.permute.xlu0 %3338
      %3340 = vrot.lane.b32.xlu0 %v1077, 127
      %v3341 = vpop.permute.xlu0 %3340
      %3342 = vrot.lane.b32.xlu0 %v1079, 127
      %v3343 = vpop.permute.xlu0 %3342
      %3344 = vrot.lane.b32.xlu0 %v1081, 127
      %v3345 = vpop.permute.xlu0 %3344
      %3346 = vrot.lane.b32.xlu0 %v1083, 127
      %v3347 = vpop.permute.xlu0 %3346
      %3348 = vrot.lane.b32.xlu0 %v1085, 127
      %v3349 = vpop.permute.xlu0 %3348
      %3350 = vrot.lane.b32.xlu0 %v1024, 127
      %v3351 = vpop.permute.xlu0 %3350
      %3352 = vrot.lane.b32.xlu0 %v1026, 127
      %v3353 = vpop.permute.xlu0 %3352
      %3354 = vrot.lane.b32.xlu0 %v1028, 127
      %v3355 = vpop.permute.xlu0 %3354
      %3356 = vrot.lane.b32.xlu0 %v1030, 127
      %v3357 = vpop.permute.xlu0 %3356
      %3358 = vrot.lane.b32.xlu0 %v1032, 127
      %v3359 = vpop.permute.xlu0 %3358
      %3360 = vrot.lane.b32.xlu0 %v1034, 127
      %v3361 = vpop.permute.xlu0 %3360
      %3362 = vrot.lane.b32.xlu0 %v1036, 127
      %v3363 = vpop.permute.xlu0 %3362
      %3364 = vrot.lane.b32.xlu0 %v1038, 127
      %v3365 = vpop.permute.xlu0 %3364
      %3366 = vrot.lane.b32.xlu0 %v1040, 127
      %v3367 = vpop.permute.xlu0 %3366
      %3368 = vrot.lane.b32.xlu0 %v1042, 127
      %v3369 = vpop.permute.xlu0 %3368
      %3370 = vrot.lane.b32.xlu0 %v1044, 127
      %v3371 = vpop.permute.xlu0 %3370
      %3372 = vrot.lane.b32.xlu0 %v1046, 127
      %v3373 = vpop.permute.xlu0 %3372
      %3374 = vrot.lane.b32.xlu0 %v1048, 127
      %v3375 = vpop.permute.xlu0 %3374
      %3376 = vrot.lane.b32.xlu0 %v1050, 127
      %v3377 = vpop.permute.xlu0 %3376
      %3378 = vrot.lane.b32.xlu0 %v1052, 127
      %v3379 = vpop.permute.xlu0 %3378
      %3380 = vrot.lane.b32.xlu0 %v1054, 127
      %v3381 = vpop.permute.xlu0 %3380
      %3382 = vrot.lane.b32.xlu0 %v1056, 127
      %v3383 = vpop.permute.xlu0 %3382
      %3384 = vrot.lane.b32.xlu0 %v1058, 127
      %v3385 = vpop.permute.xlu0 %3384
      %3386 = vrot.lane.b32.xlu0 %v1060, 127
      %v3387 = vpop.permute.xlu0 %3386
      %3388 = vrot.lane.b32.xlu0 %v1062, 127
      %v3389 = vpop.permute.xlu0 %3388
      %3390 = vrot.lane.b32.xlu0 %v1064, 127
      %v3391 = vpop.permute.xlu0 %3390
      %3392 = vrot.lane.b32.xlu0 %v1066, 127
      %v3393 = vpop.permute.xlu0 %3392
      %3394 = vrot.lane.b32.xlu0 %v1068, 127
      %v3395 = vpop.permute.xlu0 %3394
      %3396 = vrot.lane.b32.xlu0 %v1070, 127
      %v3397 = vpop.permute.xlu0 %3396
      %3398 = vrot.lane.b32.xlu0 %v1072, 127
      %v3399 = vpop.permute.xlu0 %3398
      %3400 = vrot.lane.b32.xlu0 %v1074, 127
      %v3401 = vpop.permute.xlu0 %3400
      %3402 = vrot.lane.b32.xlu0 %v1076, 127
      %v3403 = vpop.permute.xlu0 %3402
      %3404 = vrot.lane.b32.xlu0 %v1078, 127
      %v3405 = vpop.permute.xlu0 %3404
      %3406 = vrot.lane.b32.xlu0 %v1080, 127
      %v3407 = vpop.permute.xlu0 %3406
      %3408 = vrot.lane.b32.xlu0 %v1082, 127
      %v3409 = vpop.permute.xlu0 %3408
      %3410 = vrot.lane.b32.xlu0 %v1084, 127
      %v3411 = vpop.permute.xlu0 %3410
      %3412 = vrot.lane.b32.xlu0 %v1086, 127
      %v3413 = vpop.permute.xlu0 %3412
      %v3414 = vsel %vm468, %v3287, %v3351
      %v3415 = vsel %vm468, %v3289, %v3353
      %v3416 = vsel %vm468, %v3291, %v3355
      %v3417 = vsel %vm468, %v3293, %v3357
      %v3418 = vsel %vm468, %v3295, %v3359
      %v3419 = vsel %vm468, %v3297, %v3361
      %v3420 = vsel %vm468, %v3299, %v3363
      %v3421 = vsel %vm468, %v3301, %v3365
      %v3422 = vsel %vm468, %v3303, %v3367
      %v3423 = vsel %vm468, %v3305, %v3369
      %v3424 = vsel %vm468, %v3307, %v3371
      %v3425 = vsel %vm468, %v3309, %v3373
      %v3426 = vsel %vm468, %v3311, %v3375
      %v3427 = vsel %vm468, %v3313, %v3377
      %v3428 = vsel %vm468, %v3315, %v3379
      %v3429 = vsel %vm468, %v3317, %v3381
      %v3430 = vsel %vm468, %v3319, %v3383
      %v3431 = vsel %vm468, %v3321, %v3385
      %v3432 = vsel %vm468, %v3323, %v3387
      %v3433 = vsel %vm468, %v3325, %v3389
      %v3434 = vsel %vm468, %v3327, %v3391
      %v3435 = vsel %vm468, %v3329, %v3393
      %v3436 = vsel %vm468, %v3331, %v3395
      %v3437 = vsel %vm468, %v3333, %v3397
      %v3438 = vsel %vm468, %v3335, %v3399
      %v3439 = vsel %vm468, %v3337, %v3401
      %v3440 = vsel %vm468, %v3339, %v3403
      %v3441 = vsel %vm468, %v3341, %v3405
      %v3442 = vsel %vm468, %v3343, %v3407
      %v3443 = vsel %vm468, %v3345, %v3409
      %v3444 = vsel %vm468, %v3347, %v3411
      %v3445 = vsel %vm468, %v3349, %v3413
      %v3446 = vsel %vm468, %v3351, %v3287
      %v3447 = vsel %vm468, %v3353, %v3289
      %v3448 = vsel %vm468, %v3355, %v3291
      %v3449 = vsel %vm468, %v3357, %v3293
      %v3450 = vsel %vm468, %v3359, %v3295
      %v3451 = vsel %vm468, %v3361, %v3297
      %v3452 = vsel %vm468, %v3363, %v3299
      %v3453 = vsel %vm468, %v3365, %v3301
      %v3454 = vsel %vm468, %v3367, %v3303
      %v3455 = vsel %vm468, %v3369, %v3305
      %v3456 = vsel %vm468, %v3371, %v3307
      %v3457 = vsel %vm468, %v3373, %v3309
      %v3458 = vsel %vm468, %v3375, %v3311
      %v3459 = vsel %vm468, %v3377, %v3313
      %v3460 = vsel %vm468, %v3379, %v3315
      %v3461 = vsel %vm468, %v3381, %v3317
      %v3462 = vsel %vm468, %v3383, %v3319
      %v3463 = vsel %vm468, %v3385, %v3321
      %v3464 = vsel %vm468, %v3387, %v3323
      %v3465 = vsel %vm468, %v3389, %v3325
      %v3466 = vsel %vm468, %v3391, %v3327
      %v3467 = vsel %vm468, %v3393, %v3329
      %v3468 = vsel %vm468, %v3395, %v3331
      %v3469 = vsel %vm468, %v3397, %v3333
      %v3470 = vsel %vm468, %v3399, %v3335
      %v3471 = vsel %vm468, %v3401, %v3337
      %v3472 = vsel %vm468, %v3403, %v3339
      %v3473 = vsel %vm468, %v3405, %v3341
      %v3474 = vsel %vm468, %v3407, %v3343
      %v3475 = vsel %vm468, %v3409, %v3345
      %v3476 = vsel %vm468, %v3411, %v3347
      %v3477 = vsel %vm468, %v3413, %v3349
      %v3478 = vld [vmem:[%s7 + $0x28] sm:$0xff]
      %3480 = vst [vmem:[#allocation1] ss:$2 sm:$0xff] %v3478
      %v3481 = vld.sshfl [vmem:[#allocation1] sm:$0xff pattern:$0x75316420]
      %v3482 = vld.sshfl [vmem:[#allocation1 + $0x8] sm:$0xff pattern:$0x75316420]
      %3485 = vmatpush.msra.mxu0 %v3429
      %3486 = vmatpush.msra.mxu0 %v3428
      %3487 = vmatpush.msra.mxu0 %v3427
      %3488 = vmatpush.msra.mxu0 %v3426
      %3489 = vmatpush.msra.mxu0 %v3425
      %3490 = vmatpush.msra.mxu0 %v3424
      %3491 = vmatpush.msra.mxu0 %v3423
      %3492 = vmatpush.msra.mxu0 %v3422
      %3493 = vmatpush.msra.mxu0 %v3421
      %3494 = vmatpush.msra.mxu0 %v3420
      %3495 = vmatpush.msra.mxu0 %v3419
      %3496 = vmatpush.msra.mxu0 %v3418
      %3497 = vmatpush.msra.mxu0 %v3417
      %3498 = vmatpush.msra.mxu0 %v3416
      %3499 = vmatpush.msra.mxu0 %v3415
      %3500 = vmatpush.msra.mxu0 %v3414
      %3501 = vmatmul.f32.gmra.mxu0 %v3481
      %v3502 = vpop.f32.mrf.mxu0
      %v3503 = vadd.f32 0.0, %v3502
      %3504 = vdwg.mxu0
      %3505 = vmatpush.msra.mxu0 %v3445
      %3506 = vmatpush.msra.mxu0 %v3444
      %3507 = vmatpush.msra.mxu0 %v3443
      %3508 = vmatpush.msra.mxu0 %v3442
      %3509 = vmatpush.msra.mxu0 %v3441
      %3510 = vmatpush.msra.mxu0 %v3440
      %3511 = vmatpush.msra.mxu0 %v3439
      %3512 = vmatpush.msra.mxu0 %v3438
      %3513 = vmatpush.msra.mxu0 %v3437
      %3514 = vmatpush.msra.mxu0 %v3436
      %3515 = vmatpush.msra.mxu0 %v3435
      %3516 = vmatpush.msra.mxu0 %v3434
      %3517 = vmatpush.msra.mxu0 %v3433
      %3518 = vmatpush.msra.mxu0 %v3432
      %3519 = vmatpush.msra.mxu0 %v3431
      %3520 = vmatpush.msra.mxu0 %v3430
      %3521 = vmatmul.f32.gmra.mxu0 %v3482
      %v3522 = vpop.f32.mrf.mxu0
      %v3523 = vadd.f32 %v3503, %v3522
      %3524 = vdwg.mxu0
      %3525 = vmatpush.msra.mxu0 %v3461
      %3526 = vmatpush.msra.mxu0 %v3460
      %3527 = vmatpush.msra.mxu0 %v3459
      %3528 = vmatpush.msra.mxu0 %v3458
      %3529 = vmatpush.msra.mxu0 %v3457
      %3530 = vmatpush.msra.mxu0 %v3456
      %3531 = vmatpush.msra.mxu0 %v3455
      %3532 = vmatpush.msra.mxu0 %v3454
      %3533 = vmatpush.msra.mxu0 %v3453
      %3534 = vmatpush.msra.mxu0 %v3452
      %3535 = vmatpush.msra.mxu0 %v3451
      %3536 = vmatpush.msra.mxu0 %v3450
      %3537 = vmatpush.msra.mxu0 %v3449
      %3538 = vmatpush.msra.mxu0 %v3448
      %3539 = vmatpush.msra.mxu0 %v3447
      %3540 = vmatpush.msra.mxu0 %v3446
      %3541 = vmatmul.f32.gmra.mxu0 %v3481
      %v3542 = vpop.f32.mrf.mxu0
      %v3543 = vadd.f32 0.0, %v3542
      %3544 = vdwg.mxu0
      %3545 = vmatpush.msra.mxu0 %v3477
      %3546 = vmatpush.msra.mxu0 %v3476
      %3547 = vmatpush.msra.mxu0 %v3475
      %3548 = vmatpush.msra.mxu0 %v3474
      %3549 = vmatpush.msra.mxu0 %v3473
      %3550 = vmatpush.msra.mxu0 %v3472
      %3551 = vmatpush.msra.mxu0 %v3471
      %3552 = vmatpush.msra.mxu0 %v3470
      %3553 = vmatpush.msra.mxu0 %v3469
      %3554 = vmatpush.msra.mxu0 %v3468
      %3555 = vmatpush.msra.mxu0 %v3467
      %3556 = vmatpush.msra.mxu0 %v3466
      %3557 = vmatpush.msra.mxu0 %v3465
      %3558 = vmatpush.msra.mxu0 %v3464
      %3559 = vmatpush.msra.mxu0 %v3463
      %3560 = vmatpush.msra.mxu0 %v3462
      %3561 = vmatmul.f32.gmra.mxu0 %v3482
      %v3562 = vpop.f32.mrf.mxu0
      %v3563 = vadd.f32 %v3543, %v3562
      %3564 = vdwg.mxu0
      %v3565 = vmul.f32 %v3523, %v471
      %v3566 = vmul.f32 %v3563, %v472
      %v3567 = vadd.f32 %v3284, %v3565
      %v3568 = vadd.f32 %v3285, %v3566
      %3569 = vrot.lane.b32.xlu0 %v1023, 113
      %v3570 = vpop.permute.xlu0 %3569
      %3571 = vrot.lane.b32.xlu0 %v1025, 113
      %v3572 = vpop.permute.xlu0 %3571
      %3573 = vrot.lane.b32.xlu0 %v1027, 113
      %v3574 = vpop.permute.xlu0 %3573
      %3575 = vrot.lane.b32.xlu0 %v1029, 113
      %v3576 = vpop.permute.xlu0 %3575
      %3577 = vrot.lane.b32.xlu0 %v1031, 113
      %v3578 = vpop.permute.xlu0 %3577
      %3579 = vrot.lane.b32.xlu0 %v1033, 113
      %v3580 = vpop.permute.xlu0 %3579
      %3581 = vrot.lane.b32.xlu0 %v1035, 113
      %v3582 = vpop.permute.xlu0 %3581
      %3583 = vrot.lane.b32.xlu0 %v1037, 113
      %v3584 = vpop.permute.xlu0 %3583
      %3585 = vrot.lane.b32.xlu0 %v1039, 113
      %v3586 = vpop.permute.xlu0 %3585
      %3587 = vrot.lane.b32.xlu0 %v1041, 113
      %v3588 = vpop.permute.xlu0 %3587
      %3589 = vrot.lane.b32.xlu0 %v1043, 113
      %v3590 = vpop.permute.xlu0 %3589
      %3591 = vrot.lane.b32.xlu0 %v1045, 113
      %v3592 = vpop.permute.xlu0 %3591
      %3593 = vrot.lane.b32.xlu0 %v1047, 113
      %v3594 = vpop.permute.xlu0 %3593
      %3595 = vrot.lane.b32.xlu0 %v1049, 113
      %v3596 = vpop.permute.xlu0 %3595
      %3597 = vrot.lane.b32.xlu0 %v1051, 113
      %v3598 = vpop.permute.xlu0 %3597
      %3599 = vrot.lane.b32.xlu0 %v1053, 113
      %v3600 = vpop.permute.xlu0 %3599
      %3601 = vrot.lane.b32.xlu0 %v1055, 113
      %v3602 = vpop.permute.xlu0 %3601
      %3603 = vrot.lane.b32.xlu0 %v1057, 113
      %v3604 = vpop.permute.xlu0 %3603
      %3605 = vrot.lane.b32.xlu0 %v1059, 113
      %v3606 = vpop.permute.xlu0 %3605
      %3607 = vrot.lane.b32.xlu0 %v1061, 113
      %v3608 = vpop.permute.xlu0 %3607
      %3609 = vrot.lane.b32.xlu0 %v1063, 113
      %v3610 = vpop.permute.xlu0 %3609
      %3611 = vrot.lane.b32.xlu0 %v1065, 113
      %v3612 = vpop.permute.xlu0 %3611
      %3613 = vrot.lane.b32.xlu0 %v1067, 113
      %v3614 = vpop.permute.xlu0 %3613
      %3615 = vrot.lane.b32.xlu0 %v1069, 113
      %v3616 = vpop.permute.xlu0 %3615
      %3617 = vrot.lane.b32.xlu0 %v1071, 113
      %v3618 = vpop.permute.xlu0 %3617
      %3619 = vrot.lane.b32.xlu0 %v1073, 113
      %v3620 = vpop.permute.xlu0 %3619
      %3621 = vrot.lane.b32.xlu0 %v1075, 113
      %v3622 = vpop.permute.xlu0 %3621
      %3623 = vrot.lane.b32.xlu0 %v1077, 113
      %v3624 = vpop.permute.xlu0 %3623
      %3625 = vrot.lane.b32.xlu0 %v1079, 113
      %v3626 = vpop.permute.xlu0 %3625
      %3627 = vrot.lane.b32.xlu0 %v1081, 113
      %v3628 = vpop.permute.xlu0 %3627
      %3629 = vrot.lane.b32.xlu0 %v1083, 113
      %v3630 = vpop.permute.xlu0 %3629
      %3631 = vrot.lane.b32.xlu0 %v1085, 113
      %v3632 = vpop.permute.xlu0 %3631
      %3633 = vrot.lane.b32.xlu0 %v1024, 113
      %v3634 = vpop.permute.xlu0 %3633
      %3635 = vrot.lane.b32.xlu0 %v1026, 113
      %v3636 = vpop.permute.xlu0 %3635
      %3637 = vrot.lane.b32.xlu0 %v1028, 113
      %v3638 = vpop.permute.xlu0 %3637
      %3639 = vrot.lane.b32.xlu0 %v1030, 113
      %v3640 = vpop.permute.xlu0 %3639
      %3641 = vrot.lane.b32.xlu0 %v1032, 113
      %v3642 = vpop.permute.xlu0 %3641
      %3643 = vrot.lane.b32.xlu0 %v1034, 113
      %v3644 = vpop.permute.xlu0 %3643
      %3645 = vrot.lane.b32.xlu0 %v1036, 113
      %v3646 = vpop.permute.xlu0 %3645
      %3647 = vrot.lane.b32.xlu0 %v1038, 113
      %v3648 = vpop.permute.xlu0 %3647
      %3649 = vrot.lane.b32.xlu0 %v1040, 113
      %v3650 = vpop.permute.xlu0 %3649
      %3651 = vrot.lane.b32.xlu0 %v1042, 113
      %v3652 = vpop.permute.xlu0 %3651
      %3653 = vrot.lane.b32.xlu0 %v1044, 113
      %v3654 = vpop.permute.xlu0 %3653
      %3655 = vrot.lane.b32.xlu0 %v1046, 113
      %v3656 = vpop.permute.xlu0 %3655
      %3657 = vrot.lane.b32.xlu0 %v1048, 113
      %v3658 = vpop.permute.xlu0 %3657
      %3659 = vrot.lane.b32.xlu0 %v1050, 113
      %v3660 = vpop.permute.xlu0 %3659
      %3661 = vrot.lane.b32.xlu0 %v1052, 113
      %v3662 = vpop.permute.xlu0 %3661
      %3663 = vrot.lane.b32.xlu0 %v1054, 113
      %v3664 = vpop.permute.xlu0 %3663
      %3665 = vrot.lane.b32.xlu0 %v1056, 113
      %v3666 = vpop.permute.xlu0 %3665
      %3667 = vrot.lane.b32.xlu0 %v1058, 113
      %v3668 = vpop.permute.xlu0 %3667
      %3669 = vrot.lane.b32.xlu0 %v1060, 113
      %v3670 = vpop.permute.xlu0 %3669
      %3671 = vrot.lane.b32.xlu0 %v1062, 113
      %v3672 = vpop.permute.xlu0 %3671
      %3673 = vrot.lane.b32.xlu0 %v1064, 113
      %v3674 = vpop.permute.xlu0 %3673
      %3675 = vrot.lane.b32.xlu0 %v1066, 113
      %v3676 = vpop.permute.xlu0 %3675
      %3677 = vrot.lane.b32.xlu0 %v1068, 113
      %v3678 = vpop.permute.xlu0 %3677
      %3679 = vrot.lane.b32.xlu0 %v1070, 113
      %v3680 = vpop.permute.xlu0 %3679
      %3681 = vrot.lane.b32.xlu0 %v1072, 113
      %v3682 = vpop.permute.xlu0 %3681
      %3683 = vrot.lane.b32.xlu0 %v1074, 113
      %v3684 = vpop.permute.xlu0 %3683
      %3685 = vrot.lane.b32.xlu0 %v1076, 113
      %v3686 = vpop.permute.xlu0 %3685
      %3687 = vrot.lane.b32.xlu0 %v1078, 113
      %v3688 = vpop.permute.xlu0 %3687
      %3689 = vrot.lane.b32.xlu0 %v1080, 113
      %v3690 = vpop.permute.xlu0 %3689
      %3691 = vrot.lane.b32.xlu0 %v1082, 113
      %v3692 = vpop.permute.xlu0 %3691
      %3693 = vrot.lane.b32.xlu0 %v1084, 113
      %v3694 = vpop.permute.xlu0 %3693
      %3695 = vrot.lane.b32.xlu0 %v1086, 113
      %v3696 = vpop.permute.xlu0 %3695
      %v3697 = vsel %vm479, %v3570, %v3634
      %v3698 = vsel %vm479, %v3572, %v3636
      %v3699 = vsel %vm479, %v3574, %v3638
      %v3700 = vsel %vm479, %v3576, %v3640
      %v3701 = vsel %vm479, %v3578, %v3642
      %v3702 = vsel %vm479, %v3580, %v3644
      %v3703 = vsel %vm479, %v3582, %v3646
      %v3704 = vsel %vm479, %v3584, %v3648
      %v3705 = vsel %vm479, %v3586, %v3650
      %v3706 = vsel %vm479, %v3588, %v3652
      %v3707 = vsel %vm479, %v3590, %v3654
      %v3708 = vsel %vm479, %v3592, %v3656
      %v3709 = vsel %vm479, %v3594, %v3658
      %v3710 = vsel %vm479, %v3596, %v3660
      %v3711 = vsel %vm479, %v3598, %v3662
      %v3712 = vsel %vm479, %v3600, %v3664
      %v3713 = vsel %vm479, %v3602, %v3666
      %v3714 = vsel %vm479, %v3604, %v3668
      %v3715 = vsel %vm479, %v3606, %v3670
      %v3716 = vsel %vm479, %v3608, %v3672
      %v3717 = vsel %vm479, %v3610, %v3674
      %v3718 = vsel %vm479, %v3612, %v3676
      %v3719 = vsel %vm479, %v3614, %v3678
      %v3720 = vsel %vm479, %v3616, %v3680
      %v3721 = vsel %vm479, %v3618, %v3682
      %v3722 = vsel %vm479, %v3620, %v3684
      %v3723 = vsel %vm479, %v3622, %v3686
      %v3724 = vsel %vm479, %v3624, %v3688
      %v3725 = vsel %vm479, %v3626, %v3690
      %v3726 = vsel %vm479, %v3628, %v3692
      %v3727 = vsel %vm479, %v3630, %v3694
      %v3728 = vsel %vm479, %v3632, %v3696
      %v3729 = vsel %vm479, %v3634, %v3570
      %v3730 = vsel %vm479, %v3636, %v3572
      %v3731 = vsel %vm479, %v3638, %v3574
      %v3732 = vsel %vm479, %v3640, %v3576
      %v3733 = vsel %vm479, %v3642, %v3578
      %v3734 = vsel %vm479, %v3644, %v3580
      %v3735 = vsel %vm479, %v3646, %v3582
      %v3736 = vsel %vm479, %v3648, %v3584
      %v3737 = vsel %vm479, %v3650, %v3586
      %v3738 = vsel %vm479, %v3652, %v3588
      %v3739 = vsel %vm479, %v3654, %v3590
      %v3740 = vsel %vm479, %v3656, %v3592
      %v3741 = vsel %vm479, %v3658, %v3594
      %v3742 = vsel %vm479, %v3660, %v3596
      %v3743 = vsel %vm479, %v3662, %v3598
      %v3744 = vsel %vm479, %v3664, %v3600
      %v3745 = vsel %vm479, %v3666, %v3602
      %v3746 = vsel %vm479, %v3668, %v3604
      %v3747 = vsel %vm479, %v3670, %v3606
      %v3748 = vsel %vm479, %v3672, %v3608
      %v3749 = vsel %vm479, %v3674, %v3610
      %v3750 = vsel %vm479, %v3676, %v3612
      %v3751 = vsel %vm479, %v3678, %v3614
      %v3752 = vsel %vm479, %v3680, %v3616
      %v3753 = vsel %vm479, %v3682, %v3618
      %v3754 = vsel %vm479, %v3684, %v3620
      %v3755 = vsel %vm479, %v3686, %v3622
      %v3756 = vsel %vm479, %v3688, %v3624
      %v3757 = vsel %vm479, %v3690, %v3626
      %v3758 = vsel %vm479, %v3692, %v3628
      %v3759 = vsel %vm479, %v3694, %v3630
      %v3760 = vsel %vm479, %v3696, %v3632
      %v3761 = vld [vmem:[%s7 + $0x30] sm:$0xff]
      %3763 = vst [vmem:[#allocation1] ss:$2 sm:$0xff] %v3761
      %v3764 = vld.sshfl [vmem:[#allocation1] sm:$0xff pattern:$0x75316420]
      %v3765 = vld.sshfl [vmem:[#allocation1 + $0x8] sm:$0xff pattern:$0x75316420]
      %3768 = vmatpush.msra.mxu0 %v3712
      %3769 = vmatpush.msra.mxu0 %v3711
      %3770 = vmatpush.msra.mxu0 %v3710
      %3771 = vmatpush.msra.mxu0 %v3709
      %3772 = vmatpush.msra.mxu0 %v3708
      %3773 = vmatpush.msra.mxu0 %v3707
      %3774 = vmatpush.msra.mxu0 %v3706
      %3775 = vmatpush.msra.mxu0 %v3705
      %3776 = vmatpush.msra.mxu0 %v3704
      %3777 = vmatpush.msra.mxu0 %v3703
      %3778 = vmatpush.msra.mxu0 %v3702
      %3779 = vmatpush.msra.mxu0 %v3701
      %3780 = vmatpush.msra.mxu0 %v3700
      %3781 = vmatpush.msra.mxu0 %v3699
      %3782 = vmatpush.msra.mxu0 %v3698
      %3783 = vmatpush.msra.mxu0 %v3697
      %3784 = vmatmul.f32.gmra.mxu0 %v3764
      %v3785 = vpop.f32.mrf.mxu0
      %v3786 = vadd.f32 0.0, %v3785
      %3787 = vdwg.mxu0
      %3788 = vmatpush.msra.mxu0 %v3728
      %3789 = vmatpush.msra.mxu0 %v3727
      %3790 = vmatpush.msra.mxu0 %v3726
      %3791 = vmatpush.msra.mxu0 %v3725
      %3792 = vmatpush.msra.mxu0 %v3724
      %3793 = vmatpush.msra.mxu0 %v3723
      %3794 = vmatpush.msra.mxu0 %v3722
      %3795 = vmatpush.msra.mxu0 %v3721
      %3796 = vmatpush.msra.mxu0 %v3720
      %3797 = vmatpush.msra.mxu0 %v3719
      %3798 = vmatpush.msra.mxu0 %v3718
      %3799 = vmatpush.msra.mxu0 %v3717
      %3800 = vmatpush.msra.mxu0 %v3716
      %3801 = vmatpush.msra.mxu0 %v3715
      %3802 = vmatpush.msra.mxu0 %v3714
      %3803 = vmatpush.msra.mxu0 %v3713
      %3804 = vmatmul.f32.gmra.mxu0 %v3765
      %v3805 = vpop.f32.mrf.mxu0
      %v3806 = vadd.f32 %v3786, %v3805
      %3807 = vdwg.mxu0
      %3808 = vmatpush.msra.mxu0 %v3744
      %3809 = vmatpush.msra.mxu0 %v3743
      %3810 = vmatpush.msra.mxu0 %v3742
      %3811 = vmatpush.msra.mxu0 %v3741
      %3812 = vmatpush.msra.mxu0 %v3740
      %3813 = vmatpush.msra.mxu0 %v3739
      %3814 = vmatpush.msra.mxu0 %v3738
      %3815 = vmatpush.msra.mxu0 %v3737
      %3816 = vmatpush.msra.mxu0 %v3736
      %3817 = vmatpush.msra.mxu0 %v3735
      %3818 = vmatpush.msra.mxu0 %v3734
      %3819 = vmatpush.msra.mxu0 %v3733
      %3820 = vmatpush.msra.mxu0 %v3732
      %3821 = vmatpush.msra.mxu0 %v3731
      %3822 = vmatpush.msra.mxu0 %v3730
      %3823 = vmatpush.msra.mxu0 %v3729
      %3824 = vmatmul.f32.gmra.mxu0 %v3764
      %v3825 = vpop.f32.mrf.mxu0
      %v3826 = vadd.f32 0.0, %v3825
      %3827 = vdwg.mxu0
      %3828 = vmatpush.msra.mxu0 %v3760
      %3829 = vmatpush.msra.mxu0 %v3759
      %3830 = vmatpush.msra.mxu0 %v3758
      %3831 = vmatpush.msra.mxu0 %v3757
      %3832 = vmatpush.msra.mxu0 %v3756
      %3833 = vmatpush.msra.mxu0 %v3755
      %3834 = vmatpush.msra.mxu0 %v3754
      %3835 = vmatpush.msra.mxu0 %v3753
      %3836 = vmatpush.msra.mxu0 %v3752
      %3837 = vmatpush.msra.mxu0 %v3751
      %3838 = vmatpush.msra.mxu0 %v3750
      %3839 = vmatpush.msra.mxu0 %v3749
      %3840 = vmatpush.msra.mxu0 %v3748
      %3841 = vmatpush.msra.mxu0 %v3747
      %3842 = vmatpush.msra.mxu0 %v3746
      %3843 = vmatpush.msra.mxu0 %v3745
      %3844 = vmatmul.f32.gmra.mxu0 %v3765
      %v3845 = vpop.f32.mrf.mxu0
      %v3846 = vadd.f32 %v3826, %v3845
      %3847 = vdwg.mxu0
      %v3848 = vmul.f32 %v3806, %v482
      %v3849 = vmul.f32 %v3846, %v483
      %v3850 = vadd.f32 %v3567, %v3848
      %v3851 = vadd.f32 %v3568, %v3849
      %3852 = vrot.lane.b32.xlu0 %v1023, 112
      %v3853 = vpop.permute.xlu0 %3852
      %3854 = vrot.lane.b32.xlu0 %v1025, 112
      %v3855 = vpop.permute.xlu0 %3854
      %3856 = vrot.lane.b32.xlu0 %v1027, 112
      %v3857 = vpop.permute.xlu0 %3856
      %3858 = vrot.lane.b32.xlu0 %v1029, 112
      %v3859 = vpop.permute.xlu0 %3858
      %3860 = vrot.lane.b32.xlu0 %v1031, 112
      %v3861 = vpop.permute.xlu0 %3860
      %3862 = vrot.lane.b32.xlu0 %v1033, 112
      %v3863 = vpop.permute.xlu0 %3862
      %3864 = vrot.lane.b32.xlu0 %v1035, 112
      %v3865 = vpop.permute.xlu0 %3864
      %3866 = vrot.lane.b32.xlu0 %v1037, 112
      %v3867 = vpop.permute.xlu0 %3866
      %3868 = vrot.lane.b32.xlu0 %v1039, 112
      %v3869 = vpop.permute.xlu0 %3868
      %3870 = vrot.lane.b32.xlu0 %v1041, 112
      %v3871 = vpop.permute.xlu0 %3870
      %3872 = vrot.lane.b32.xlu0 %v1043, 112
      %v3873 = vpop.permute.xlu0 %3872
      %3874 = vrot.lane.b32.xlu0 %v1045, 112
      %v3875 = vpop.permute.xlu0 %3874
      %3876 = vrot.lane.b32.xlu0 %v1047, 112
      %v3877 = vpop.permute.xlu0 %3876
      %3878 = vrot.lane.b32.xlu0 %v1049, 112
      %v3879 = vpop.permute.xlu0 %3878
      %3880 = vrot.lane.b32.xlu0 %v1051, 112
      %v3881 = vpop.permute.xlu0 %3880
      %3882 = vrot.lane.b32.xlu0 %v1053, 112
      %v3883 = vpop.permute.xlu0 %3882
      %3884 = vrot.lane.b32.xlu0 %v1055, 112
      %v3885 = vpop.permute.xlu0 %3884
      %3886 = vrot.lane.b32.xlu0 %v1057, 112
      %v3887 = vpop.permute.xlu0 %3886
      %3888 = vrot.lane.b32.xlu0 %v1059, 112
      %v3889 = vpop.permute.xlu0 %3888
      %3890 = vrot.lane.b32.xlu0 %v1061, 112
      %v3891 = vpop.permute.xlu0 %3890
      %3892 = vrot.lane.b32.xlu0 %v1063, 112
      %v3893 = vpop.permute.xlu0 %3892
      %3894 = vrot.lane.b32.xlu0 %v1065, 112
      %v3895 = vpop.permute.xlu0 %3894
      %3896 = vrot.lane.b32.xlu0 %v1067, 112
      %v3897 = vpop.permute.xlu0 %3896
      %3898 = vrot.lane.b32.xlu0 %v1069, 112
      %v3899 = vpop.permute.xlu0 %3898
      %3900 = vrot.lane.b32.xlu0 %v1071, 112
      %v3901 = vpop.permute.xlu0 %3900
      %3902 = vrot.lane.b32.xlu0 %v1073, 112
      %v3903 = vpop.permute.xlu0 %3902
      %3904 = vrot.lane.b32.xlu0 %v1075, 112
      %v3905 = vpop.permute.xlu0 %3904
      %3906 = vrot.lane.b32.xlu0 %v1077, 112
      %v3907 = vpop.permute.xlu0 %3906
      %3908 = vrot.lane.b32.xlu0 %v1079, 112
      %v3909 = vpop.permute.xlu0 %3908
      %3910 = vrot.lane.b32.xlu0 %v1081, 112
      %v3911 = vpop.permute.xlu0 %3910
      %3912 = vrot.lane.b32.xlu0 %v1083, 112
      %v3913 = vpop.permute.xlu0 %3912
      %3914 = vrot.lane.b32.xlu0 %v1085, 112
      %v3915 = vpop.permute.xlu0 %3914
      %3916 = vrot.lane.b32.xlu0 %v1024, 112
      %v3917 = vpop.permute.xlu0 %3916
      %3918 = vrot.lane.b32.xlu0 %v1026, 112
      %v3919 = vpop.permute.xlu0 %3918
      %3920 = vrot.lane.b32.xlu0 %v1028, 112
      %v3921 = vpop.permute.xlu0 %3920
      %3922 = vrot.lane.b32.xlu0 %v1030, 112
      %v3923 = vpop.permute.xlu0 %3922
      %3924 = vrot.lane.b32.xlu0 %v1032, 112
      %v3925 = vpop.permute.xlu0 %3924
      %3926 = vrot.lane.b32.xlu0 %v1034, 112
      %v3927 = vpop.permute.xlu0 %3926
      %3928 = vrot.lane.b32.xlu0 %v1036, 112
      %v3929 = vpop.permute.xlu0 %3928
      %3930 = vrot.lane.b32.xlu0 %v1038, 112
      %v3931 = vpop.permute.xlu0 %3930
      %3932 = vrot.lane.b32.xlu0 %v1040, 112
      %v3933 = vpop.permute.xlu0 %3932
      %3934 = vrot.lane.b32.xlu0 %v1042, 112
      %v3935 = vpop.permute.xlu0 %3934
      %3936 = vrot.lane.b32.xlu0 %v1044, 112
      %v3937 = vpop.permute.xlu0 %3936
      %3938 = vrot.lane.b32.xlu0 %v1046, 112
      %v3939 = vpop.permute.xlu0 %3938
      %3940 = vrot.lane.b32.xlu0 %v1048, 112
      %v3941 = vpop.permute.xlu0 %3940
      %3942 = vrot.lane.b32.xlu0 %v1050, 112
      %v3943 = vpop.permute.xlu0 %3942
      %3944 = vrot.lane.b32.xlu0 %v1052, 112
      %v3945 = vpop.permute.xlu0 %3944
      %3946 = vrot.lane.b32.xlu0 %v1054, 112
      %v3947 = vpop.permute.xlu0 %3946
      %3948 = vrot.lane.b32.xlu0 %v1056, 112
      %v3949 = vpop.permute.xlu0 %3948
      %3950 = vrot.lane.b32.xlu0 %v1058, 112
      %v3951 = vpop.permute.xlu0 %3950
      %3952 = vrot.lane.b32.xlu0 %v1060, 112
      %v3953 = vpop.permute.xlu0 %3952
      %3954 = vrot.lane.b32.xlu0 %v1062, 112
      %v3955 = vpop.permute.xlu0 %3954
      %3956 = vrot.lane.b32.xlu0 %v1064, 112
      %v3957 = vpop.permute.xlu0 %3956
      %3958 = vrot.lane.b32.xlu0 %v1066, 112
      %v3959 = vpop.permute.xlu0 %3958
      %3960 = vrot.lane.b32.xlu0 %v1068, 112
      %v3961 = vpop.permute.xlu0 %3960
      %3962 = vrot.lane.b32.xlu0 %v1070, 112
      %v3963 = vpop.permute.xlu0 %3962
      %3964 = vrot.lane.b32.xlu0 %v1072, 112
      %v3965 = vpop.permute.xlu0 %3964
      %3966 = vrot.lane.b32.xlu0 %v1074, 112
      %v3967 = vpop.permute.xlu0 %3966
      %3968 = vrot.lane.b32.xlu0 %v1076, 112
      %v3969 = vpop.permute.xlu0 %3968
      %3970 = vrot.lane.b32.xlu0 %v1078, 112
      %v3971 = vpop.permute.xlu0 %3970
      %3972 = vrot.lane.b32.xlu0 %v1080, 112
      %v3973 = vpop.permute.xlu0 %3972
      %3974 = vrot.lane.b32.xlu0 %v1082, 112
      %v3975 = vpop.permute.xlu0 %3974
      %3976 = vrot.lane.b32.xlu0 %v1084, 112
      %v3977 = vpop.permute.xlu0 %3976
      %3978 = vrot.lane.b32.xlu0 %v1086, 112
      %v3979 = vpop.permute.xlu0 %3978
      %v3980 = vsel %vm490, %v3853, %v3917
      %v3981 = vsel %vm490, %v3855, %v3919
      %v3982 = vsel %vm490, %v3857, %v3921
      %v3983 = vsel %vm490, %v3859, %v3923
      %v3984 = vsel %vm490, %v3861, %v3925
      %v3985 = vsel %vm490, %v3863, %v3927
      %v3986 = vsel %vm490, %v3865, %v3929
      %v3987 = vsel %vm490, %v3867, %v3931
      %v3988 = vsel %vm490, %v3869, %v3933
      %v3989 = vsel %vm490, %v3871, %v3935
      %v3990 = vsel %vm490, %v3873, %v3937
      %v3991 = vsel %vm490, %v3875, %v3939
      %v3992 = vsel %vm490, %v3877, %v3941
      %v3993 = vsel %vm490, %v3879, %v3943
      %v3994 = vsel %vm490, %v3881, %v3945
      %v3995 = vsel %vm490, %v3883, %v3947
      %v3996 = vsel %vm490, %v3885, %v3949
      %v3997 = vsel %vm490, %v3887, %v3951
      %v3998 = vsel %vm490, %v3889, %v3953
      %v3999 = vsel %vm490, %v3891, %v3955
      %v4000 = vsel %vm490, %v3893, %v3957
      %v4001 = vsel %vm490, %v3895, %v3959
      %v4002 = vsel %vm490, %v3897, %v3961
      %v4003 = vsel %vm490, %v3899, %v3963
      %v4004 = vsel %vm490, %v3901, %v3965
      %v4005 = vsel %vm490, %v3903, %v3967
      %v4006 = vsel %vm490, %v3905, %v3969
      %v4007 = vsel %vm490, %v3907, %v3971
      %v4008 = vsel %vm490, %v3909, %v3973
      %v4009 = vsel %vm490, %v3911, %v3975
      %v4010 = vsel %vm490, %v3913, %v3977
      %v4011 = vsel %vm490, %v3915, %v3979
      %v4012 = vsel %vm490, %v3917, %v3853
      %v4013 = vsel %vm490, %v3919, %v3855
      %v4014 = vsel %vm490, %v3921, %v3857
      %v4015 = vsel %vm490, %v3923, %v3859
      %v4016 = vsel %vm490, %v3925, %v3861
      %v4017 = vsel %vm490, %v3927, %v3863
      %v4018 = vsel %vm490, %v3929, %v3865
      %v4019 = vsel %vm490, %v3931, %v3867
      %v4020 = vsel %vm490, %v3933, %v3869
      %v4021 = vsel %vm490, %v3935, %v3871
      %v4022 = vsel %vm490, %v3937, %v3873
      %v4023 = vsel %vm490, %v3939, %v3875
      %v4024 = vsel %vm490, %v3941, %v3877
      %v4025 = vsel %vm490, %v3943, %v3879
      %v4026 = vsel %vm490, %v3945, %v3881
      %v4027 = vsel %vm490, %v3947, %v3883
      %v4028 = vsel %vm490, %v3949, %v3885
      %v4029 = vsel %vm490, %v3951, %v3887
      %v4030 = vsel %vm490, %v3953, %v3889
      %v4031 = vsel %vm490, %v3955, %v3891
      %v4032 = vsel %vm490, %v3957, %v3893
      %v4033 = vsel %vm490, %v3959, %v3895
      %v4034 = vsel %vm490, %v3961, %v3897
      %v4035 = vsel %vm490, %v3963, %v3899
      %v4036 = vsel %vm490, %v3965, %v3901
      %v4037 = vsel %vm490, %v3967, %v3903
      %v4038 = vsel %vm490, %v3969, %v3905
      %v4039 = vsel %vm490, %v3971, %v3907
      %v4040 = vsel %vm490, %v3973, %v3909
      %v4041 = vsel %vm490, %v3975, %v3911
      %v4042 = vsel %vm490, %v3977, %v3913
      %v4043 = vsel %vm490, %v3979, %v3915
      %v4044 = vld [vmem:[%s7 + $0x38] sm:$0xff]
      %4046 = vst [vmem:[#allocation1] ss:$2 sm:$0xff] %v4044
      %v4047 = vld.sshfl [vmem:[#allocation1] sm:$0xff pattern:$0x75316420]
      %v4048 = vld.sshfl [vmem:[#allocation1 + $0x8] sm:$0xff pattern:$0x75316420]
      %4051 = vmatpush.msra.mxu0 %v3995
      %4052 = vmatpush.msra.mxu0 %v3994
      %4053 = vmatpush.msra.mxu0 %v3993
      %4054 = vmatpush.msra.mxu0 %v3992
      %4055 = vmatpush.msra.mxu0 %v3991
      %4056 = vmatpush.msra.mxu0 %v3990
      %4057 = vmatpush.msra.mxu0 %v3989
      %4058 = vmatpush.msra.mxu0 %v3988
      %4059 = vmatpush.msra.mxu0 %v3987
      %4060 = vmatpush.msra.mxu0 %v3986
      %4061 = vmatpush.msra.mxu0 %v3985
      %4062 = vmatpush.msra.mxu0 %v3984
      %4063 = vmatpush.msra.mxu0 %v3983
      %4064 = vmatpush.msra.mxu0 %v3982
      %4065 = vmatpush.msra.mxu0 %v3981
      %4066 = vmatpush.msra.mxu0 %v3980
      %4067 = vmatmul.f32.gmra.mxu0 %v4047
      %v4068 = vpop.f32.mrf.mxu0
      %v4069 = vadd.f32 0.0, %v4068
      %4070 = vdwg.mxu0
      %4071 = vmatpush.msra.mxu0 %v4011
      %4072 = vmatpush.msra.mxu0 %v4010
      %4073 = vmatpush.msra.mxu0 %v4009
      %4074 = vmatpush.msra.mxu0 %v4008
      %4075 = vmatpush.msra.mxu0 %v4007
      %4076 = vmatpush.msra.mxu0 %v4006
      %4077 = vmatpush.msra.mxu0 %v4005
      %4078 = vmatpush.msra.mxu0 %v4004
      %4079 = vmatpush.msra.mxu0 %v4003
      %4080 = vmatpush.msra.mxu0 %v4002
      %4081 = vmatpush.msra.mxu0 %v4001
      %4082 = vmatpush.msra.mxu0 %v4000
      %4083 = vmatpush.msra.mxu0 %v3999
      %4084 = vmatpush.msra.mxu0 %v3998
      %4085 = vmatpush.msra.mxu0 %v3997
      %4086 = vmatpush.msra.mxu0 %v3996
      %4087 = vmatmul.f32.gmra.mxu0 %v4048
      %v4088 = vpop.f32.mrf.mxu0
      %v4089 = vadd.f32 %v4069, %v4088
      %4090 = vdwg.mxu0
      %4091 = vmatpush.msra.mxu0 %v4027
      %4092 = vmatpush.msra.mxu0 %v4026
      %4093 = vmatpush.msra.mxu0 %v4025
      %4094 = vmatpush.msra.mxu0 %v4024
      %4095 = vmatpush.msra.mxu0 %v4023
      %4096 = vmatpush.msra.mxu0 %v4022
      %4097 = vmatpush.msra.mxu0 %v4021
      %4098 = vmatpush.msra.mxu0 %v4020
      %4099 = vmatpush.msra.mxu0 %v4019
      %4100 = vmatpush.msra.mxu0 %v4018
      %4101 = vmatpush.msra.mxu0 %v4017
      %4102 = vmatpush.msra.mxu0 %v4016
      %4103 = vmatpush.msra.mxu0 %v4015
      %4104 = vmatpush.msra.mxu0 %v4014
      %4105 = vmatpush.msra.mxu0 %v4013
      %4106 = vmatpush.msra.mxu0 %v4012
      %4107 = vmatmul.f32.gmra.mxu0 %v4047
      %v4108 = vpop.f32.mrf.mxu0
      %v4109 = vadd.f32 0.0, %v4108
      %4110 = vdwg.mxu0
      %4111 = vmatpush.msra.mxu0 %v4043
      %4112 = vmatpush.msra.mxu0 %v4042
      %4113 = vmatpush.msra.mxu0 %v4041
      %4114 = vmatpush.msra.mxu0 %v4040
      %4115 = vmatpush.msra.mxu0 %v4039
      %4116 = vmatpush.msra.mxu0 %v4038
      %4117 = vmatpush.msra.mxu0 %v4037
      %4118 = vmatpush.msra.mxu0 %v4036
      %4119 = vmatpush.msra.mxu0 %v4035
      %4120 = vmatpush.msra.mxu0 %v4034
      %4121 = vmatpush.msra.mxu0 %v4033
      %4122 = vmatpush.msra.mxu0 %v4032
      %4123 = vmatpush.msra.mxu0 %v4031
      %4124 = vmatpush.msra.mxu0 %v4030
      %4125 = vmatpush.msra.mxu0 %v4029
      %4126 = vmatpush.msra.mxu0 %v4028
      %4127 = vmatmul.f32.gmra.mxu0 %v4048
      %v4128 = vpop.f32.mrf.mxu0
      %v4129 = vadd.f32 %v4109, %v4128
      %4130 = vdwg.mxu0
      %v4131 = vmul.f32 %v4089, %v493
      %v4132 = vmul.f32 %v4129, %v494
      %v4133 = vadd.f32 %v3850, %v4131
      %v4134 = vadd.f32 %v3851, %v4132
      %4135 = vrot.lane.b32.xlu0 %v1023, 111
      %v4136 = vpop.permute.xlu0 %4135
      %4137 = vrot.lane.b32.xlu0 %v1025, 111
      %v4138 = vpop.permute.xlu0 %4137
      %4139 = vrot.lane.b32.xlu0 %v1027, 111
      %v4140 = vpop.permute.xlu0 %4139
      %4141 = vrot.lane.b32.xlu0 %v1029, 111
      %v4142 = vpop.permute.xlu0 %4141
      %4143 = vrot.lane.b32.xlu0 %v1031, 111
      %v4144 = vpop.permute.xlu0 %4143
      %4145 = vrot.lane.b32.xlu0 %v1033, 111
      %v4146 = vpop.permute.xlu0 %4145
      %4147 = vrot.lane.b32.xlu0 %v1035, 111
      %v4148 = vpop.permute.xlu0 %4147
      %4149 = vrot.lane.b32.xlu0 %v1037, 111
      %v4150 = vpop.permute.xlu0 %4149
      %4151 = vrot.lane.b32.xlu0 %v1039, 111
      %v4152 = vpop.permute.xlu0 %4151
      %4153 = vrot.lane.b32.xlu0 %v1041, 111
      %v4154 = vpop.permute.xlu0 %4153
      %4155 = vrot.lane.b32.xlu0 %v1043, 111
      %v4156 = vpop.permute.xlu0 %4155
      %4157 = vrot.lane.b32.xlu0 %v1045, 111
      %v4158 = vpop.permute.xlu0 %4157
      %4159 = vrot.lane.b32.xlu0 %v1047, 111
      %v4160 = vpop.permute.xlu0 %4159
      %4161 = vrot.lane.b32.xlu0 %v1049, 111
      %v4162 = vpop.permute.xlu0 %4161
      %4163 = vrot.lane.b32.xlu0 %v1051, 111
      %v4164 = vpop.permute.xlu0 %4163
      %4165 = vrot.lane.b32.xlu0 %v1053, 111
      %v4166 = vpop.permute.xlu0 %4165
      %4167 = vrot.lane.b32.xlu0 %v1055, 111
      %v4168 = vpop.permute.xlu0 %4167
      %4169 = vrot.lane.b32.xlu0 %v1057, 111
      %v4170 = vpop.permute.xlu0 %4169
      %4171 = vrot.lane.b32.xlu0 %v1059, 111
      %v4172 = vpop.permute.xlu0 %4171
      %4173 = vrot.lane.b32.xlu0 %v1061, 111
      %v4174 = vpop.permute.xlu0 %4173
      %4175 = vrot.lane.b32.xlu0 %v1063, 111
      %v4176 = vpop.permute.xlu0 %4175
      %4177 = vrot.lane.b32.xlu0 %v1065, 111
      %v4178 = vpop.permute.xlu0 %4177
      %4179 = vrot.lane.b32.xlu0 %v1067, 111
      %v4180 = vpop.permute.xlu0 %4179
      %4181 = vrot.lane.b32.xlu0 %v1069, 111
      %v4182 = vpop.permute.xlu0 %4181
      %4183 = vrot.lane.b32.xlu0 %v1071, 111
      %v4184 = vpop.permute.xlu0 %4183
      %4185 = vrot.lane.b32.xlu0 %v1073, 111
      %v4186 = vpop.permute.xlu0 %4185
      %4187 = vrot.lane.b32.xlu0 %v1075, 111
      %v4188 = vpop.permute.xlu0 %4187
      %4189 = vrot.lane.b32.xlu0 %v1077, 111
      %v4190 = vpop.permute.xlu0 %4189
      %4191 = vrot.lane.b32.xlu0 %v1079, 111
      %v4192 = vpop.permute.xlu0 %4191
      %4193 = vrot.lane.b32.xlu0 %v1081, 111
      %v4194 = vpop.permute.xlu0 %4193
      %4195 = vrot.lane.b32.xlu0 %v1083, 111
      %v4196 = vpop.permute.xlu0 %4195
      %4197 = vrot.lane.b32.xlu0 %v1085, 111
      %v4198 = vpop.permute.xlu0 %4197
      %4199 = vrot.lane.b32.xlu0 %v1024, 111
      %v4200 = vpop.permute.xlu0 %4199
      %4201 = vrot.lane.b32.xlu0 %v1026, 111
      %v4202 = vpop.permute.xlu0 %4201
      %4203 = vrot.lane.b32.xlu0 %v1028, 111
      %v4204 = vpop.permute.xlu0 %4203
      %4205 = vrot.lane.b32.xlu0 %v1030, 111
      %v4206 = vpop.permute.xlu0 %4205
      %4207 = vrot.lane.b32.xlu0 %v1032, 111
      %v4208 = vpop.permute.xlu0 %4207
      %4209 = vrot.lane.b32.xlu0 %v1034, 111
      %v4210 = vpop.permute.xlu0 %4209
      %4211 = vrot.lane.b32.xlu0 %v1036, 111
      %v4212 = vpop.permute.xlu0 %4211
      %4213 = vrot.lane.b32.xlu0 %v1038, 111
      %v4214 = vpop.permute.xlu0 %4213
      %4215 = vrot.lane.b32.xlu0 %v1040, 111
      %v4216 = vpop.permute.xlu0 %4215
      %4217 = vrot.lane.b32.xlu0 %v1042, 111
      %v4218 = vpop.permute.xlu0 %4217
      %4219 = vrot.lane.b32.xlu0 %v1044, 111
      %v4220 = vpop.permute.xlu0 %4219
      %4221 = vrot.lane.b32.xlu0 %v1046, 111
      %v4222 = vpop.permute.xlu0 %4221
      %4223 = vrot.lane.b32.xlu0 %v1048, 111
      %v4224 = vpop.permute.xlu0 %4223
      %4225 = vrot.lane.b32.xlu0 %v1050, 111
      %v4226 = vpop.permute.xlu0 %4225
      %4227 = vrot.lane.b32.xlu0 %v1052, 111
      %v4228 = vpop.permute.xlu0 %4227
      %4229 = vrot.lane.b32.xlu0 %v1054, 111
      %v4230 = vpop.permute.xlu0 %4229
      %4231 = vrot.lane.b32.xlu0 %v1056, 111
      %v4232 = vpop.permute.xlu0 %4231
      %4233 = vrot.lane.b32.xlu0 %v1058, 111
      %v4234 = vpop.permute.xlu0 %4233
      %4235 = vrot.lane.b32.xlu0 %v1060, 111
      %v4236 = vpop.permute.xlu0 %4235
      %4237 = vrot.lane.b32.xlu0 %v1062, 111
      %v4238 = vpop.permute.xlu0 %4237
      %4239 = vrot.lane.b32.xlu0 %v1064, 111
      %v4240 = vpop.permute.xlu0 %4239
      %4241 = vrot.lane.b32.xlu0 %v1066, 111
      %v4242 = vpop.permute.xlu0 %4241
      %4243 = vrot.lane.b32.xlu0 %v1068, 111
      %v4244 = vpop.permute.xlu0 %4243
      %4245 = vrot.lane.b32.xlu0 %v1070, 111
      %v4246 = vpop.permute.xlu0 %4245
      %4247 = vrot.lane.b32.xlu0 %v1072, 111
      %v4248 = vpop.permute.xlu0 %4247
      %4249 = vrot.lane.b32.xlu0 %v1074, 111
      %v4250 = vpop.permute.xlu0 %4249
      %4251 = vrot.lane.b32.xlu0 %v1076, 111
      %v4252 = vpop.permute.xlu0 %4251
      %4253 = vrot.lane.b32.xlu0 %v1078, 111
      %v4254 = vpop.permute.xlu0 %4253
      %4255 = vrot.lane.b32.xlu0 %v1080, 111
      %v4256 = vpop.permute.xlu0 %4255
      %4257 = vrot.lane.b32.xlu0 %v1082, 111
      %v4258 = vpop.permute.xlu0 %4257
      %4259 = vrot.lane.b32.xlu0 %v1084, 111
      %v4260 = vpop.permute.xlu0 %4259
      %4261 = vrot.lane.b32.xlu0 %v1086, 111
      %v4262 = vpop.permute.xlu0 %4261
      %v4263 = vsel %vm501, %v4136, %v4200
      %v4264 = vsel %vm501, %v4138, %v4202
      %v4265 = vsel %vm501, %v4140, %v4204
      %v4266 = vsel %vm501, %v4142, %v4206
      %v4267 = vsel %vm501, %v4144, %v4208
      %v4268 = vsel %vm501, %v4146, %v4210
      %v4269 = vsel %vm501, %v4148, %v4212
      %v4270 = vsel %vm501, %v4150, %v4214
      %v4271 = vsel %vm501, %v4152, %v4216
      %v4272 = vsel %vm501, %v4154, %v4218
      %v4273 = vsel %vm501, %v4156, %v4220
      %v4274 = vsel %vm501, %v4158, %v4222
      %v4275 = vsel %vm501, %v4160, %v4224
      %v4276 = vsel %vm501, %v4162, %v4226
      %v4277 = vsel %vm501, %v4164, %v4228
      %v4278 = vsel %vm501, %v4166, %v4230
      %v4279 = vsel %vm501, %v4168, %v4232
      %v4280 = vsel %vm501, %v4170, %v4234
      %v4281 = vsel %vm501, %v4172, %v4236
      %v4282 = vsel %vm501, %v4174, %v4238
      %v4283 = vsel %vm501, %v4176, %v4240
      %v4284 = vsel %vm501, %v4178, %v4242
      %v4285 = vsel %vm501, %v4180, %v4244
      %v4286 = vsel %vm501, %v4182, %v4246
      %v4287 = vsel %vm501, %v4184, %v4248
      %v4288 = vsel %vm501, %v4186, %v4250
      %v4289 = vsel %vm501, %v4188, %v4252
      %v4290 = vsel %vm501, %v4190, %v4254
      %v4291 = vsel %vm501, %v4192, %v4256
      %v4292 = vsel %vm501, %v4194, %v4258
      %v4293 = vsel %vm501, %v4196, %v4260
      %v4294 = vsel %vm501, %v4198, %v4262
      %v4295 = vsel %vm501, %v4200, %v4136
      %v4296 = vsel %vm501, %v4202, %v4138
      %v4297 = vsel %vm501, %v4204, %v4140
      %v4298 = vsel %vm501, %v4206, %v4142
      %v4299 = vsel %vm501, %v4208, %v4144
      %v4300 = vsel %vm501, %v4210, %v4146
      %v4301 = vsel %vm501, %v4212, %v4148
      %v4302 = vsel %vm501, %v4214, %v4150
      %v4303 = vsel %vm501, %v4216, %v4152
      %v4304 = vsel %vm501, %v4218, %v4154
      %v4305 = vsel %vm501, %v4220, %v4156
      %v4306 = vsel %vm501, %v4222, %v4158
      %v4307 = vsel %vm501, %v4224, %v4160
      %v4308 = vsel %vm501, %v4226, %v4162
      %v4309 = vsel %vm501, %v4228, %v4164
      %v4310 = vsel %vm501, %v4230, %v4166
      %v4311 = vsel %vm501, %v4232, %v4168
      %v4312 = vsel %vm501, %v4234, %v4170
      %v4313 = vsel %vm501, %v4236, %v4172
      %v4314 = vsel %vm501, %v4238, %v4174
      %v4315 = vsel %vm501, %v4240, %v4176
      %v4316 = vsel %vm501, %v4242, %v4178
      %v4317 = vsel %vm501, %v4244, %v4180
      %v4318 = vsel %vm501, %v4246, %v4182
      %v4319 = vsel %vm501, %v4248, %v4184
      %v4320 = vsel %vm501, %v4250, %v4186
      %v4321 = vsel %vm501, %v4252, %v4188
      %v4322 = vsel %vm501, %v4254, %v4190
      %v4323 = vsel %vm501, %v4256, %v4192
      %v4324 = vsel %vm501, %v4258, %v4194
      %v4325 = vsel %vm501, %v4260, %v4196
      %v4326 = vsel %vm501, %v4262, %v4198
      %v4327 = vld [vmem:[%s7 + $0x40] sm:$0xff]
      %4329 = vst [vmem:[#allocation1] ss:$2 sm:$0xff] %v4327
      %v4330 = vld.sshfl [vmem:[#allocation1] sm:$0xff pattern:$0x75316420]
      %v4331 = vld.sshfl [vmem:[#allocation1 + $0x8] sm:$0xff pattern:$0x75316420]
      %4334 = vmatpush.msra.mxu0 %v4278
      %4335 = vmatpush.msra.mxu0 %v4277
      %4336 = vmatpush.msra.mxu0 %v4276
      %4337 = vmatpush.msra.mxu0 %v4275
      %4338 = vmatpush.msra.mxu0 %v4274
      %4339 = vmatpush.msra.mxu0 %v4273
      %4340 = vmatpush.msra.mxu0 %v4272
      %4341 = vmatpush.msra.mxu0 %v4271
      %4342 = vmatpush.msra.mxu0 %v4270
      %4343 = vmatpush.msra.mxu0 %v4269
      %4344 = vmatpush.msra.mxu0 %v4268
      %4345 = vmatpush.msra.mxu0 %v4267
      %4346 = vmatpush.msra.mxu0 %v4266
      %4347 = vmatpush.msra.mxu0 %v4265
      %4348 = vmatpush.msra.mxu0 %v4264
      %4349 = vmatpush.msra.mxu0 %v4263
      %4350 = vmatmul.f32.gmra.mxu0 %v4330
      %v4351 = vpop.f32.mrf.mxu0
      %v4352 = vadd.f32 0.0, %v4351
      %4353 = vdwg.mxu0
      %4354 = vmatpush.msra.mxu0 %v4294
      %4355 = vmatpush.msra.mxu0 %v4293
      %4356 = vmatpush.msra.mxu0 %v4292
      %4357 = vmatpush.msra.mxu0 %v4291
      %4358 = vmatpush.msra.mxu0 %v4290
      %4359 = vmatpush.msra.mxu0 %v4289
      %4360 = vmatpush.msra.mxu0 %v4288
      %4361 = vmatpush.msra.mxu0 %v4287
      %4362 = vmatpush.msra.mxu0 %v4286
      %4363 = vmatpush.msra.mxu0 %v4285
      %4364 = vmatpush.msra.mxu0 %v4284
      %4365 = vmatpush.msra.mxu0 %v4283
      %4366 = vmatpush.msra.mxu0 %v4282
      %4367 = vmatpush.msra.mxu0 %v4281
      %4368 = vmatpush.msra.mxu0 %v4280
      %4369 = vmatpush.msra.mxu0 %v4279
      %4370 = vmatmul.f32.gmra.mxu0 %v4331
      %v4371 = vpop.f32.mrf.mxu0
      %v4372 = vadd.f32 %v4352, %v4371
      %4373 = vdwg.mxu0
      %4374 = vmatpush.msra.mxu0 %v4310
      %4375 = vmatpush.msra.mxu0 %v4309
      %4376 = vmatpush.msra.mxu0 %v4308
      %4377 = vmatpush.msra.mxu0 %v4307
      %4378 = vmatpush.msra.mxu0 %v4306
      %4379 = vmatpush.msra.mxu0 %v4305
      %4380 = vmatpush.msra.mxu0 %v4304
      %4381 = vmatpush.msra.mxu0 %v4303
      %4382 = vmatpush.msra.mxu0 %v4302
      %4383 = vmatpush.msra.mxu0 %v4301
      %4384 = vmatpush.msra.mxu0 %v4300
      %4385 = vmatpush.msra.mxu0 %v4299
      %4386 = vmatpush.msra.mxu0 %v4298
      %4387 = vmatpush.msra.mxu0 %v4297
      %4388 = vmatpush.msra.mxu0 %v4296
      %4389 = vmatpush.msra.mxu0 %v4295
      %4390 = vmatmul.f32.gmra.mxu0 %v4330
      %v4391 = vpop.f32.mrf.mxu0
      %v4392 = vadd.f32 0.0, %v4391
      %4393 = vdwg.mxu0
      %4394 = vmatpush.msra.mxu0 %v4326
      %4395 = vmatpush.msra.mxu0 %v4325
      %4396 = vmatpush.msra.mxu0 %v4324
      %4397 = vmatpush.msra.mxu0 %v4323
      %4398 = vmatpush.msra.mxu0 %v4322
      %4399 = vmatpush.msra.mxu0 %v4321
      %4400 = vmatpush.msra.mxu0 %v4320
      %4401 = vmatpush.msra.mxu0 %v4319
      %4402 = vmatpush.msra.mxu0 %v4318
      %4403 = vmatpush.msra.mxu0 %v4317
      %4404 = vmatpush.msra.mxu0 %v4316
      %4405 = vmatpush.msra.mxu0 %v4315
      %4406 = vmatpush.msra.mxu0 %v4314
      %4407 = vmatpush.msra.mxu0 %v4313
      %4408 = vmatpush.msra.mxu0 %v4312
      %4409 = vmatpush.msra.mxu0 %v4311
      %4410 = vmatmul.f32.gmra.mxu0 %v4331
      %v4411 = vpop.f32.mrf.mxu0
      %v4412 = vadd.f32 %v4392, %v4411
      %4413 = vdwg.mxu0
      %v4414 = vmul.f32 %v4372, %v504
      %v4415 = vmul.f32 %v4412, %v505
      %v4416 = vadd.f32 %v4133, %v4414
      %v4417 = vadd.f32 %v4134, %v4415
      %v4418 = vtanh.pop %v4416
      %v4419 = vtanh.pop %v4417
      %v4422 = vrot.slane %v4419, 4
      %vm4423 = vcmask 1043456
      %v4424 = vsel %vm4423, %v4418, %v4422
      %4426 = vst [vmem:[%s379] sm:$0xff] %v4424
      %p4427 = scmp.lt.s32.totalorder %s21, 1
      %s4428 = scalar_select %p4427, %s21, 1
      %s4429 = smul.addr %s4428, 2
      %s4430 = smul.addr %s4429, 4
      %s4431 = scalar_lea.vmem %s10, %s4430
      // Predicated region
      $region61: #{generator_forward.1} parent=59 // pred_check
        %p4432 = pneg %p259
      $region62: #{generator_forward.1} parent=59 // pred_check_branch
        %4434 = sbr.rel (%p4432) target = $region64
      $region63: #{generator_forward.1} parent=59 // pred_region
        _
      $region64: #{generator_forward.1} parent=59 // pred_fallthru
        _
    $region60: #{generator_forward.1} parent=5 // pred_fallthru
      _
    %p4435 = scmp.le.s32.totalorder 2, %s16
    // Predicated region
    $region65: #{generator_forward.1} parent=5 // pred_check
      %p4436 = pneg %p4435
    $region66: #{generator_forward.1} parent=5 // pred_check_branch
      %4438 = sbr.rel (%p4436) target = $region68
    $region67: #{generator_forward.1} parent=5 // pred_region
      %s4439 = ssub.s32 %s16, 2
      // Predicated region
      $region69: #{generator_forward.1} parent=67 // pred_check
        %p4440 = pneg %p265
      $region70: #{generator_forward.1} parent=67 // pred_check_branch
        %4442 = sbr.rel (%p4440) target = $region72
      $region71: #{generator_forward.1} parent=67 // pred_region
        %p4443 = scmp.lt.s32.totalorder %s22, 1
        %s4444 = scalar_select %p4443, %s22, 1
        %s4445 = smul.addr %s4444, 2
        %s4446 = smul.addr %s4445, 4
        %s4447 = scalar_lea.vmem %s10, %s4446
      $region72: #{generator_forward.1} parent=67 // pred_fallthru
        _
    $region68: #{generator_forward.1} parent=5 // pred_fallthru
      _
  $region6: #{generator_forward.1} parent=0 // loop_footer
    %s20 = sadd.s32 1, %s16
  $region7: #{generator_forward.1} parent=0 // loop_footer_branch
    %15 = sbr.rel target = $region3
  $region8: #{generator_forward.1} parent=0 // loop_exit
    _

</llo_original>
